<compile_context>
chip_gen: v7x
topology: tpu7x:2x2x1
jax: 0.10.0
libtpu: 0.0.40
codegen_flags: <defaults>
</compile_context>

<pallas_src>
import functools
import math

import jax
import jax.numpy as jnp
from jax.experimental import pallas as pl
from jax.experimental.pallas import tpu as pltpu


# ----------------------------------------------------------------------------
# Fused MidBlock kernel: one grid step per batch element.
# ----------------------------------------------------------------------------
def _midblock_kernel(x_ref, temb_ref, gmat_ref, gn_g_ref, gn_b_ref,
                     conv_w_ref, conv_b_ref, qkv_w_ref, qkv_b_ref,
                     wo_ref, bo_ref, o_ref, hp_ref, *, W, pad, eps):
    P, C = x_ref.shape
    f32 = jnp.float32
    bf16 = jnp.bfloat16
    inv_P = 1.0 / P

    # Zero the halo rows of the padded row buffer once per grid step.  (Do NOT
    # hoist under pl.when(program_id==0): with "parallel" semantics each core
    # owns its own scratch.)  pad is a multiple of 8 -> aligned stores.
    hp_ref[0:pad, :] = jnp.zeros((pad, C), f32)
    hp_ref[pad + P:pad + P + pad, :] = jnp.zeros((pad, C), f32)

    # x-boundary validity masks, hoisted once (lane-broadcast, reused by all 4
    # convs).  y out-of-bounds is handled by the zero halos; these only kill
    # the x-wrap of the flattened (H*W) layout.
    col = jax.lax.broadcasted_iota(jnp.int32, (P, C), 0) % W
    not_left = col != 0            # valid source for ox = -1 taps
    not_right = col != (W - 1)     # valid source for ox = +1 taps

    gmat = gmat_ref[...]           # (C, C): 1/group_size for same-group chans

    # ---- GroupNorm (+ optional SiLU): lane-dense, no per-group Python loop.
    def group_norm(h, idx, use_silu):
        gamma = gn_g_ref[idx:idx + 1, :]
        beta = gn_b_ref[idx:idx + 1, :]
        mean_c = jnp.dot(jnp.sum(h, axis=0, keepdims=True) * inv_P, gmat,
                         preferred_element_type=f32)                 # (1, C)
        d = h - mean_c
        var_c = jnp.dot(jnp.sum(d * d, axis=0, keepdims=True) * inv_P, gmat,
                        preferred_element_type=f32)                  # (1, C)
        y = d * jax.lax.rsqrt(var_c + eps) * gamma + beta
        if use_silu:
            y = y * jax.nn.sigmoid(y)
        return y

    # ---- 3x3 "same" conv as ONE (P, 9C) x (9C, C) MXU matmul: the 9 shifted
    #      taps are read from the zero-padded row buffer, x-wrap masked, and
    #      lane-concatenated into a single im2col patch (no HBM im2col, no
    #      9 tiny-K matmuls).
    def conv3x3(h, widx):
        hp_ref[pad:pad + P, :] = h
        taps = []
        for t in range(9):
            oy, ox = t // 3 - 1, t % 3 - 1
            s = oy * W + ox
            tap = hp_ref[pad + s:pad + s + P, :]                     # (P, C)
            if ox == -1:
                tap = jnp.where(not_left, tap, 0.0)
            elif ox == 1:
                tap = jnp.where(not_right, tap, 0.0)
            taps.append(tap)
        patch = jnp.concatenate(taps, axis=-1).astype(bf16)          # (P, 9C)
        out = jnp.dot(patch, conv_w_ref[widx], preferred_element_type=f32)
        return out + conv_b_ref[widx:widx + 1, :]

    # ---- single-head spatial self-attention with residual.  The 1/sqrt(C)
    #      scale is folded into Wq/bq host-side; Q/K/V are one fused matmul.
    # TODO(synk): flash-style q-row tiling (online softmax) once P grows enough
    # that the (P, P) score matrix pressures v7x's 64 MiB VMEM.
    def attention(x):
        h = group_norm(x, 2, use_silu=False).astype(bf16)
        qkv = (jnp.dot(h, qkv_w_ref[...], preferred_element_type=f32)
               + qkv_b_ref[...])                                     # (P, 3C)
        q = qkv[:, 0 * C:1 * C]
        k = qkv[:, 1 * C:2 * C]
        v = qkv[:, 2 * C:3 * C]
        s = jax.lax.dot_general(
            q.astype(bf16), k.astype(bf16),
            dimension_numbers=(((1,), (1,)), ((), ())),
            preferred_element_type=f32)                              # (P, P)
        s = s - jnp.max(s, axis=-1, keepdims=True)
        p = jnp.exp(s)
        p = p * pl.reciprocal(jnp.sum(p, axis=-1, keepdims=True), approx=True)
        a = jnp.dot(p.astype(bf16), v.astype(bf16), preferred_element_type=f32)
        out = jnp.dot(a.astype(bf16), wo_ref[...],
                      preferred_element_type=f32) + bo_ref[...]
        return x + out

    x0 = x_ref[...].astype(f32)

    # ResBlock 1
    h = group_norm(x0, 0, use_silu=True)
    h = conv3x3(h, 0) + temb_ref[0:1, :]
    h = group_norm(h, 1, use_silu=True)
    h = conv3x3(h, 1)
    x1 = x0 + h

    # Attention
    x2 = attention(x1)

    # ResBlock 2
    h = group_norm(x2, 3, use_silu=True)
    h = conv3x3(h, 2) + temb_ref[1:2, :]
    h = group_norm(h, 4, use_silu=True)
    h = conv3x3(h, 3)
    x3 = x2 + h

    o_ref[...] = x3.astype(o_ref.dtype)


# ----------------------------------------------------------------------------
# One-time host-side weight packing (hoisted OUT of the per-step jitted path).
# ----------------------------------------------------------------------------
def _make_group_matrix(C, num_groups):
    """(C, C): 1/group_size for channels in the same GroupNorm group, else 0."""
    cg = C // num_groups
    gid = jnp.arange(C) // cg
    same = (gid[:, None] == gid[None, :]).astype(jnp.float32)
    return same / float(cg)


def _prep_conv_weight(w_oihw):
    """torch Conv2d weight (Cout, Cin, 3, 3) -> (9*Cin, Cout), tap-major."""
    co, ci, kh, kw = w_oihw.shape
    return jnp.transpose(w_oihw, (2, 3, 1, 0)).reshape(kh * kw * ci, co)


def pack_midblock_params(params, num_groups):
    """Pack MidBlock weights into kernel-friendly layouts ONCE at init."""
    r1, at, r2 = params["res1"], params["attn"], params["res2"]
    C = r1["conv1_b"].shape[0]
    scale = 1.0 / math.sqrt(C)
    return {
        "gmat": _make_group_matrix(C, num_groups),                        # (C, C)
        "gn_g": jnp.stack([r1["gn1_gamma"], r1["gn2_gamma"], at["gn_gamma"],
                           r2["gn1_gamma"], r2["gn2_gamma"]]),            # (5, C)
        "gn_b": jnp.stack([r1["gn1_beta"], r1["gn2_beta"], at["gn_beta"],
                           r2["gn1_beta"], r2["gn2_beta"]]),              # (5, C)
        "conv_w": jnp.stack([_prep_conv_weight(r1["conv1_w"]),
                             _prep_conv_weight(r1["conv2_w"]),
                             _prep_conv_weight(r2["conv1_w"]),
                             _prep_conv_weight(r2["conv2_w"])]
                            ).astype(jnp.bfloat16),                       # (4, 9C, C)
        "conv_b": jnp.stack([r1["conv1_b"], r1["conv2_b"],
                             r2["conv1_b"], r2["conv2_b"]]),              # (4, C)
        # Q/K/V fused into one weight; softmax 1/sqrt(C) folded into Wq / bq.
        "qkv_w": jnp.concatenate([at["wq"] * scale, at["wk"], at["wv"]],
                                 axis=1).astype(jnp.bfloat16),            # (C, 3C)
        "qkv_b": jnp.concatenate([at["bq"] * scale, at["bk"], at["bv"]]
                                 ).reshape(1, 3 * C),                     # (1, 3C)
        "wo": at["wo"].astype(jnp.bfloat16),                              # (C, C)
        "bo": at["bo"].reshape(1, C),                                     # (1, C)
        "temb_w": jnp.concatenate([r1["temb_w"], r2["temb_w"]], axis=1),  # (Td, 2C)
        "temb_b": jnp.concatenate([r1["temb_b"], r2["temb_b"]]),          # (2C,)
    }


# ----------------------------------------------------------------------------
# Module-level forward
# ----------------------------------------------------------------------------
@functools.partial(jax.jit, static_argnames=("eps",))
def mid_block_forward(x_nchw, t_emb, packed, eps=1e-5):
    B, C, H, W = x_nchw.shape
    P = H * W

    # layout: NCHW -> (B, H*W, C): channels on lanes, spatial on sublanes.
    # TODO(synk): for C < 128 in production, repack I/O lane-dense (e.g.
    # (B, P/4, 4C)) to avoid masked partial stores; no-op for C >= 128.
    x = jnp.transpose(x_nchw, (0, 2, 3, 1)).reshape(B, P, C)

    # Time-embedding projections for both ResBlocks: tiny matmul, let XLA fuse
    # it (no dedicated pallas_call launch / extra HBM bounce).
    te = t_emb.astype(jnp.float32)
    te = te * jax.nn.sigmoid(te)                                         # SiLU
    temb_proj = (te @ packed["temb_w"] + packed["temb_b"]).reshape(B, 2, C)

    pad = ((W + 1 + 7) // 8) * 8        # halo rows, rounded up for alignment
    kern = functools.partial(_midblock_kernel, W=W, pad=pad, eps=eps)

    # TODO(synk): at production channel counts (C >= 256) single-buffer the
    # constant-index weight inputs (pipeline_mode=pl.Buffered(1)) or stream
    # conv_w from HBM with a 2-deep manual DMA to stay inside v7x's 64 MiB VMEM.
    out = pl.pallas_call(
        kern,
        out_shape=jax.ShapeDtypeStruct((B, P, C), jnp.float32),
        grid=(B,),
        in_specs=[
            pl.BlockSpec((None, P, C), lambda b: (b, 0, 0)),    # x (per batch)
            pl.BlockSpec((None, 2, C), lambda b: (b, 0, 0)),    # temb projections
            pl.BlockSpec((C, C), lambda b: (0, 0)),             # group-avg matrix
            pl.BlockSpec((5, C), lambda b: (0, 0)),             # GN gammas
            pl.BlockSpec((5, C), lambda b: (0, 0)),             # GN betas
            pl.BlockSpec((4, 9 * C, C), lambda b: (0, 0, 0)),   # conv weights (bf16)
            pl.BlockSpec((4, C), lambda b: (0, 0)),             # conv biases
            pl.BlockSpec((C, 3 * C), lambda b: (0, 0)),         # fused Wqkv (bf16)
            pl.BlockSpec((1, 3 * C), lambda b: (0, 0)),         # fused qkv bias
            pl.BlockSpec((C, C), lambda b: (0, 0)),             # Wo (bf16)
            pl.BlockSpec((1, C), lambda b: (0, 0)),             # bo
        ],
        out_specs=pl.BlockSpec((None, P, C), lambda b: (b, 0, 0)),
        scratch_shapes=[pltpu.VMEM((P + 2 * pad, C), jnp.float32)],
        compiler_params=pltpu.CompilerParams(
            dimension_semantics=("parallel",),                  # megacore
            vmem_limit_bytes=64 * 1024 * 1024),
    )(x, temb_proj, packed["gmat"], packed["gn_g"], packed["gn_b"],
      packed["conv_w"], packed["conv_b"], packed["qkv_w"], packed["qkv_b"],
      packed["wo"], packed["bo"])

    return jnp.transpose(out.reshape(B, H, W, C), (0, 3, 1, 2))


# ----------------------------------------------------------------------------
# Deterministic parameter init (shapes follow the PyTorch module definitions)
# ----------------------------------------------------------------------------
def init_resblock_params(key, C, Td):
    ks = jax.random.split(key, 3)
    s = 0.05
    return {
        "gn1_gamma": jnp.ones((C,), jnp.float32),
        "gn1_beta": jnp.zeros((C,), jnp.float32),
        "conv1_w": s * jax.random.normal(ks[0], (C, C, 3, 3), jnp.float32),  # torch (Co,Ci,3,3)
        "conv1_b": jnp.zeros((C,), jnp.float32),
        # torch nn.Linear(Td, C).weight is (C, Td); stored transposed for t @ W.
        "temb_w": s * jax.random.normal(ks[1], (Td, C), jnp.float32),
        "temb_b": jnp.zeros((C,), jnp.float32),
        "gn2_gamma": jnp.ones((C,), jnp.float32),
        "gn2_beta": jnp.zeros((C,), jnp.float32),
        "conv2_w": s * jax.random.normal(ks[2], (C, C, 3, 3), jnp.float32),
        "conv2_b": jnp.zeros((C,), jnp.float32),
    }


def init_attn_params(key, C):
    ks = jax.random.split(key, 4)
    s = 0.05
    return {
        "gn_gamma": jnp.ones((C,), jnp.float32),
        "gn_beta": jnp.zeros((C,), jnp.float32),
        "wq": s * jax.random.normal(ks[0], (C, C), jnp.float32),
        "bq": jnp.zeros((C,), jnp.float32),
        "wk": s * jax.random.normal(ks[1], (C, C), jnp.float32),
        "bk": jnp.zeros((C,), jnp.float32),
        "wv": s * jax.random.normal(ks[2], (C, C), jnp.float32),
        "bv": jnp.zeros((C,), jnp.float32),
        "wo": s * jax.random.normal(ks[3], (C, C), jnp.float32),
        "bo": jnp.zeros((C,), jnp.float32),
    }


if __name__ == "__main__":
    B, C, H, W = 2, 32, 8, 8          # dim = 32
    TIME_EMBED_DIM = 64
    NUM_GROUPS = 8                    # GroupNorm groups (C divisible by 8)

    key = jax.random.PRNGKey(0)
    kx, kt, k1, k2, k3 = jax.random.split(key, 5)

    params = {
        "res1": init_resblock_params(k1, C, TIME_EMBED_DIM),
        "attn": init_attn_params(k2, C),
        "res2": init_resblock_params(k3, C, TIME_EMBED_DIM),
    }
    packed = pack_midblock_params(params, NUM_GROUPS)   # one-time packing

    x = jax.random.normal(kx, (B, C, H, W), jnp.float32)       # NCHW like torch
    t_emb = jax.random.normal(kt, (B, TIME_EMBED_DIM), jnp.float32)

    out = mid_block_forward(x, t_emb, packed)
    out = jax.block_until_ready(out)

    assert out.shape == (B, C, H, W)
    assert out.dtype == jnp.float32
    assert bool(jnp.all(jnp.isfinite(out)))
    print("KERNEL_OK")
</pallas_src>

<mosaic_0001>
module attributes {stable_mosaic.version = 11 : i64} {
  func.func @_midblock_kernel(%arg0: i32, %arg1: memref<1x64x32xf32, #tpu.memory_space<vmem>>, %arg2: memref<1x2x32xf32, #tpu.memory_space<vmem>>, %arg3: memref<32x32xf32, #tpu.memory_space<vmem>>, %arg4: memref<5x32xf32, #tpu.memory_space<vmem>>, %arg5: memref<5x32xf32, #tpu.memory_space<vmem>>, %arg6: memref<4x288x32xbf16, #tpu.memory_space<vmem>>, %arg7: memref<4x32xf32, #tpu.memory_space<vmem>>, %arg8: memref<32x96xbf16, #tpu.memory_space<vmem>>, %arg9: memref<1x96xf32, #tpu.memory_space<vmem>>, %arg10: memref<32x32xbf16, #tpu.memory_space<vmem>>, %arg11: memref<1x32xf32, #tpu.memory_space<vmem>>, %arg12: memref<1x64x32xf32, #tpu.memory_space<vmem>>, %arg13: memref<96x32xf32, #tpu.memory_space<vmem>>) attributes {dimension_semantics = [#tpu.dimension_semantics<parallel>], iteration_bounds = array<i64: 2>, scalar_prefetch = 0 : i64, scratch_operands = 1 : i64, tpu.core_type = #tpu.core_type<tc>, window_params = [{transform_indices = @transform_0, window_bounds = array<i64: 1, 64, 32>}, {transform_indices = @transform_1, window_bounds = array<i64: 1, 2, 32>}, {pipeline_mode = #tpu.pipeline_mode<synchronous>, transform_indices = @transform_2, window_bounds = array<i64: 32, 32>}, {pipeline_mode = #tpu.pipeline_mode<synchronous>, transform_indices = @transform_3, window_bounds = array<i64: 5, 32>}, {pipeline_mode = #tpu.pipeline_mode<synchronous>, transform_indices = @transform_4, window_bounds = array<i64: 5, 32>}, {pipeline_mode = #tpu.pipeline_mode<synchronous>, transform_indices = @transform_5, window_bounds = array<i64: 4, 288, 32>}, {pipeline_mode = #tpu.pipeline_mode<synchronous>, transform_indices = @transform_6, window_bounds = array<i64: 4, 32>}, {pipeline_mode = #tpu.pipeline_mode<synchronous>, transform_indices = @transform_7, window_bounds = array<i64: 32, 96>}, {pipeline_mode = #tpu.pipeline_mode<synchronous>, transform_indices = @transform_8, window_bounds = array<i64: 1, 96>}, {pipeline_mode = #tpu.pipeline_mode<synchronous>, transform_indices = @transform_9, window_bounds = array<i64: 32, 32>}, {pipeline_mode = #tpu.pipeline_mode<synchronous>, transform_indices = @transform_10, window_bounds = array<i64: 1, 32>}, {transform_indices = @transform_11, window_bounds = array<i64: 1, 64, 32>}]} {
    %cst = arith.constant 0.000000e+00 : f32
    %0 = vector.broadcast %cst : f32 to vector<16x32xf32>
    %c0 = arith.constant 0 : index
    %c0_0 = arith.constant 0 : index
    %1 = vector.load %arg13[%c0, %c0_0] : memref<96x32xf32, #tpu.memory_space<vmem>>, vector<16x32xf32>
    tpu.vector_store %arg13[%c0, %c0_0], %0 {strides = array<i32>} : memref<96x32xf32, #tpu.memory_space<vmem>>, vector<16x32xf32>,
    %cst_1 = arith.constant 0.000000e+00 : f32
    %2 = vector.broadcast %cst_1 : f32 to vector<16x32xf32>
    %c80 = arith.constant 80 : index
    %c0_2 = arith.constant 0 : index
    %3 = vector.load %arg13[%c80, %c0_2] : memref<96x32xf32, #tpu.memory_space<vmem>>, vector<16x32xf32>
    tpu.vector_store %arg13[%c80, %c0_2], %2 {strides = array<i32>} : memref<96x32xf32, #tpu.memory_space<vmem>>, vector<16x32xf32>,
    %4 = tpu.iota {dimensions = array<i32: 0>} : vector<64x32xi32>
    %c8_i32 = arith.constant 8 : i32
    %c0_i32 = arith.constant 0 : i32
    %5 = arith.cmpi eq, %c8_i32, %c0_i32 : i32
    %c1_i32 = arith.constant 1 : i32
    %6 = arith.select %5, %c1_i32, %c8_i32 : i32
    %7 = vector.broadcast %6 : i32 to vector<64x32xi32>
    %8 = arith.remsi %4, %7 : vector<64x32xi32>
    %c0_i32_3 = arith.constant 0 : i32
    %9 = vector.broadcast %c0_i32_3 : i32 to vector<64x32xi32>
    %10 = arith.cmpi ne, %8, %9 : vector<64x32xi32>
    %c0_i32_4 = arith.constant 0 : i32
    %11 = vector.broadcast %c0_i32_4 : i32 to vector<64x32xi32>
    %12 = arith.cmpi slt, %8, %11 : vector<64x32xi32>
    %c0_i32_5 = arith.constant 0 : i32
    %13 = arith.cmpi slt, %6, %c0_i32_5 : i32
    %14 = vector.broadcast %13 : i1 to vector<64x32xi1>
    %15 = vector.broadcast %14 : vector<64x32xi1> to vector<64x32xi1>
    %16 = arith.xori %12, %15 : vector<64x32xi1>
    %17 = arith.andi %16, %10 : vector<64x32xi1>
    %18 = vector.broadcast %6 : i32 to vector<64x32xi32>
    %19 = arith.addi %8, %18 : vector<64x32xi32>
    %20 = arith.select %17, %19, %8 : vector<64x32xi1>, vector<64x32xi32>
    %c0_i32_6 = arith.constant 0 : i32
    %21 = vector.broadcast %c0_i32_6 : i32 to vector<64x32xi32>
    %22 = arith.cmpi ne, %20, %21 : vector<64x32xi32>
    %c7_i32 = arith.constant 7 : i32
    %23 = vector.broadcast %c7_i32 : i32 to vector<64x32xi32>
    %24 = arith.cmpi ne, %20, %23 : vector<64x32xi32>
    %c0_7 = arith.constant 0 : index
    %c0_8 = arith.constant 0 : index
    %25 = vector.load %arg3[%c0_7, %c0_8] : memref<32x32xf32, #tpu.memory_space<vmem>>, vector<32x32xf32>
    %c0_9 = arith.constant 0 : index
    %c0_10 = arith.constant 0 : index
    %c0_11 = arith.constant 0 : index
    %26 = vector.load %arg1[%c0_9, %c0_10, %c0_11] : memref<1x64x32xf32, #tpu.memory_space<vmem>>, vector<1x64x32xf32>
    %27 = vector.shape_cast %26 : vector<1x64x32xf32> to vector<64x32xf32>
    %c0_12 = arith.constant 0 : index
    %c0_13 = arith.constant 0 : index
    %28 = vector.load %arg4[%c0_12, %c0_13] : memref<5x32xf32, #tpu.memory_space<vmem>>, vector<1x32xf32>
    %c0_14 = arith.constant 0 : index
    %c0_15 = arith.constant 0 : index
    %29 = vector.load %arg5[%c0_14, %c0_15] : memref<5x32xf32, #tpu.memory_space<vmem>>, vector<1x32xf32>
    %cst_16 = arith.constant dense<0.000000e+00> : vector<32xf32>
    %30 = vector.multi_reduction <add>, %27, %cst_16 [0] : vector<64x32xf32> to vector<32xf32>
    %31 = vector.shape_cast %30 : vector<32xf32> to vector<1x32xf32>
    %cst_17 = arith.constant 1.562500e-02 : f32
    %32 = vector.broadcast %cst_17 : f32 to vector<1x32xf32>
    %33 = arith.mulf %31, %32 : vector<1x32xf32>
    %cst_18 = arith.constant dense<0.000000e+00> : vector<1x32xf32>
    %34 = tpu.matmul %33, %25, %cst_18 {dimension_numbers = #tpu.dot_dimension_numbers<[1], [0], [0], [1], [0, 0, 1, 1], [], []>} : vector<1x32xf32>, vector<32x32xf32>, vector<1x32xf32> -> vector<1x32xf32>
    %35 = vector.broadcast %34 : vector<1x32xf32> to vector<64x32xf32>
    %36 = arith.subf %27, %35 : vector<64x32xf32>
    %37 = arith.mulf %36, %36 : vector<64x32xf32>
    %cst_19 = arith.constant dense<0.000000e+00> : vector<32xf32>
    %38 = vector.multi_reduction <add>, %37, %cst_19 [0] : vector<64x32xf32> to vector<32xf32>
    %39 = vector.shape_cast %38 : vector<32xf32> to vector<1x32xf32>
    %cst_20 = arith.constant 1.562500e-02 : f32
    %40 = vector.broadcast %cst_20 : f32 to vector<1x32xf32>
    %41 = arith.mulf %39, %40 : vector<1x32xf32>
    %cst_21 = arith.constant dense<0.000000e+00> : vector<1x32xf32>
    %42 = tpu.matmul %41, %25, %cst_21 {dimension_numbers = #tpu.dot_dimension_numbers<[1], [0], [0], [1], [0, 0, 1, 1], [], []>} : vector<1x32xf32>, vector<32x32xf32>, vector<1x32xf32> -> vector<1x32xf32>
    %cst_22 = arith.constant 9.99999974E-6 : f32
    %43 = vector.broadcast %cst_22 : f32 to vector<1x32xf32>
    %44 = arith.addf %42, %43 : vector<1x32xf32>
    %45 = math.rsqrt %44 : vector<1x32xf32>
    %46 = vector.broadcast %45 : vector<1x32xf32> to vector<64x32xf32>
    %47 = arith.mulf %36, %46 : vector<64x32xf32>
    %48 = vector.broadcast %28 : vector<1x32xf32> to vector<64x32xf32>
    %49 = arith.mulf %47, %48 : vector<64x32xf32>
    %50 = vector.broadcast %29 : vector<1x32xf32> to vector<64x32xf32>
    %51 = arith.addf %49, %50 : vector<64x32xf32>
    %52 = arith.negf %51 : vector<64x32xf32>
    %53 = math.exp %52 : vector<64x32xf32>
    %cst_23 = arith.constant 1.000000e+00 : f32
    %54 = vector.broadcast %cst_23 : f32 to vector<64x32xf32>
    %55 = arith.addf %54, %53 : vector<64x32xf32>
    %56 = arith.divf %54, %55 : vector<64x32xf32>
    %57 = arith.mulf %51, %56 : vector<64x32xf32>
    %c16 = arith.constant 16 : index
    %c0_24 = arith.constant 0 : index
    %58 = vector.load %arg13[%c16, %c0_24] : memref<96x32xf32, #tpu.memory_space<vmem>>, vector<64x32xf32>
    tpu.vector_store %arg13[%c16, %c0_24], %57 {strides = array<i32>} : memref<96x32xf32, #tpu.memory_space<vmem>>, vector<64x32xf32>,
    %c7 = arith.constant 7 : index
    %c0_25 = arith.constant 0 : index
    %59 = vector.load %arg13[%c7, %c0_25] : memref<96x32xf32, #tpu.memory_space<vmem>>, vector<64x32xf32>
    %cst_26 = arith.constant 0.000000e+00 : f32
    %60 = vector.broadcast %cst_26 : f32 to vector<64x32xf32>
    %61 = arith.select %22, %59, %60 : vector<64x32xi1>, vector<64x32xf32>
    %c8 = arith.constant 8 : index
    %c0_27 = arith.constant 0 : index
    %62 = vector.load %arg13[%c8, %c0_27] : memref<96x32xf32, #tpu.memory_space<vmem>>, vector<64x32xf32>
    %c9 = arith.constant 9 : index
    %c0_28 = arith.constant 0 : index
    %63 = vector.load %arg13[%c9, %c0_28] : memref<96x32xf32, #tpu.memory_space<vmem>>, vector<64x32xf32>
    %cst_29 = arith.constant 0.000000e+00 : f32
    %64 = vector.broadcast %cst_29 : f32 to vector<64x32xf32>
    %65 = arith.select %24, %63, %64 : vector<64x32xi1>, vector<64x32xf32>
    %c15 = arith.constant 15 : index
    %c0_30 = arith.constant 0 : index
    %66 = vector.load %arg13[%c15, %c0_30] : memref<96x32xf32, #tpu.memory_space<vmem>>, vector<64x32xf32>
    %cst_31 = arith.constant 0.000000e+00 : f32
    %67 = vector.broadcast %cst_31 : f32 to vector<64x32xf32>
    %68 = arith.select %22, %66, %67 : vector<64x32xi1>, vector<64x32xf32>
    %c16_32 = arith.constant 16 : index
    %c0_33 = arith.constant 0 : index
    %69 = vector.load %arg13[%c16_32, %c0_33] : memref<96x32xf32, #tpu.memory_space<vmem>>, vector<64x32xf32>
    %c17 = arith.constant 17 : index
    %c0_34 = arith.constant 0 : index
    %70 = vector.load %arg13[%c17, %c0_34] : memref<96x32xf32, #tpu.memory_space<vmem>>, vector<64x32xf32>
    %cst_35 = arith.constant 0.000000e+00 : f32
    %71 = vector.broadcast %cst_35 : f32 to vector<64x32xf32>
    %72 = arith.select %24, %70, %71 : vector<64x32xi1>, vector<64x32xf32>
    %c23 = arith.constant 23 : index
    %c0_36 = arith.constant 0 : index
    %73 = vector.load %arg13[%c23, %c0_36] : memref<96x32xf32, #tpu.memory_space<vmem>>, vector<64x32xf32>
    %cst_37 = arith.constant 0.000000e+00 : f32
    %74 = vector.broadcast %cst_37 : f32 to vector<64x32xf32>
    %75 = arith.select %22, %73, %74 : vector<64x32xi1>, vector<64x32xf32>
    %c24 = arith.constant 24 : index
    %c0_38 = arith.constant 0 : index
    %76 = vector.load %arg13[%c24, %c0_38] : memref<96x32xf32, #tpu.memory_space<vmem>>, vector<64x32xf32>
    %c25 = arith.constant 25 : index
    %c0_39 = arith.constant 0 : index
    %77 = vector.load %arg13[%c25, %c0_39] : memref<96x32xf32, #tpu.memory_space<vmem>>, vector<64x32xf32>
    %cst_40 = arith.constant 0.000000e+00 : f32
    %78 = vector.broadcast %cst_40 : f32 to vector<64x32xf32>
    %79 = arith.select %24, %77, %78 : vector<64x32xi1>, vector<64x32xf32>
    %80 = tpu.concatenate %61, %62, %65, %68, %69, %72, %75, %76, %79 in 1 : vector<64x32xf32>, vector<64x32xf32>, vector<64x32xf32>, vector<64x32xf32>, vector<64x32xf32>, vector<64x32xf32>, vector<64x32xf32>, vector<64x32xf32>, vector<64x32xf32> -> vector<64x288xf32>
    %81 = arith.truncf %80 : vector<64x288xf32> to vector<64x288xbf16>
    %c0_41 = arith.constant 0 : index
    %c0_42 = arith.constant 0 : index
    %c0_43 = arith.constant 0 : index
    %82 = vector.load %arg6[%c0_41, %c0_42, %c0_43] : memref<4x288x32xbf16, #tpu.memory_space<vmem>>, vector<1x288x32xbf16>
    %83 = vector.shape_cast %82 : vector<1x288x32xbf16> to vector<288x32xbf16>
    %cst_44 = arith.constant dense<0.000000e+00> : vector<64x32xf32>
    %84 = tpu.matmul %81, %83, %cst_44 {dimension_numbers = #tpu.dot_dimension_numbers<[1], [0], [0], [1], [0, 0, 1, 1], [], []>} : vector<64x288xbf16>, vector<288x32xbf16>, vector<64x32xf32> -> vector<64x32xf32>
    %c0_45 = arith.constant 0 : index
    %c0_46 = arith.constant 0 : index
    %85 = vector.load %arg7[%c0_45, %c0_46] : memref<4x32xf32, #tpu.memory_space<vmem>>, vector<1x32xf32>
    %86 = vector.broadcast %85 : vector<1x32xf32> to vector<64x32xf32>
    %87 = arith.addf %84, %86 : vector<64x32xf32>
    %c0_47 = arith.constant 0 : index
    %c0_48 = arith.constant 0 : index
    %c0_49 = arith.constant 0 : index
    %88 = vector.load %arg2[%c0_47, %c0_48, %c0_49] : memref<1x2x32xf32, #tpu.memory_space<vmem>>, vector<1x1x32xf32>
    %89 = vector.shape_cast %88 : vector<1x1x32xf32> to vector<1x32xf32>
    %90 = vector.broadcast %89 : vector<1x32xf32> to vector<64x32xf32>
    %91 = arith.addf %87, %90 : vector<64x32xf32>
    %c1 = arith.constant 1 : index
    %c0_50 = arith.constant 0 : index
    %92 = vector.load %arg4[%c1, %c0_50] : memref<5x32xf32, #tpu.memory_space<vmem>>, vector<1x32xf32>
    %c1_51 = arith.constant 1 : index
    %c0_52 = arith.constant 0 : index
    %93 = vector.load %arg5[%c1_51, %c0_52] : memref<5x32xf32, #tpu.memory_space<vmem>>, vector<1x32xf32>
    %cst_53 = arith.constant dense<0.000000e+00> : vector<32xf32>
    %94 = vector.multi_reduction <add>, %91, %cst_53 [0] : vector<64x32xf32> to vector<32xf32>
    %95 = vector.shape_cast %94 : vector<32xf32> to vector<1x32xf32>
    %cst_54 = arith.constant 1.562500e-02 : f32
    %96 = vector.broadcast %cst_54 : f32 to vector<1x32xf32>
    %97 = arith.mulf %95, %96 : vector<1x32xf32>
    %cst_55 = arith.constant dense<0.000000e+00> : vector<1x32xf32>
    %98 = tpu.matmul %97, %25, %cst_55 {dimension_numbers = #tpu.dot_dimension_numbers<[1], [0], [0], [1], [0, 0, 1, 1], [], []>} : vector<1x32xf32>, vector<32x32xf32>, vector<1x32xf32> -> vector<1x32xf32>
    %99 = vector.broadcast %98 : vector<1x32xf32> to vector<64x32xf32>
    %100 = arith.subf %91, %99 : vector<64x32xf32>
    %101 = arith.mulf %100, %100 : vector<64x32xf32>
    %cst_56 = arith.constant dense<0.000000e+00> : vector<32xf32>
    %102 = vector.multi_reduction <add>, %101, %cst_56 [0] : vector<64x32xf32> to vector<32xf32>
    %103 = vector.shape_cast %102 : vector<32xf32> to vector<1x32xf32>
    %cst_57 = arith.constant 1.562500e-02 : f32
    %104 = vector.broadcast %cst_57 : f32 to vector<1x32xf32>
    %105 = arith.mulf %103, %104 : vector<1x32xf32>
    %cst_58 = arith.constant dense<0.000000e+00> : vector<1x32xf32>
    %106 = tpu.matmul %105, %25, %cst_58 {dimension_numbers = #tpu.dot_dimension_numbers<[1], [0], [0], [1], [0, 0, 1, 1], [], []>} : vector<1x32xf32>, vector<32x32xf32>, vector<1x32xf32> -> vector<1x32xf32>
    %cst_59 = arith.constant 9.99999974E-6 : f32
    %107 = vector.broadcast %cst_59 : f32 to vector<1x32xf32>
    %108 = arith.addf %106, %107 : vector<1x32xf32>
    %109 = math.rsqrt %108 : vector<1x32xf32>
    %110 = vector.broadcast %109 : vector<1x32xf32> to vector<64x32xf32>
    %111 = arith.mulf %100, %110 : vector<64x32xf32>
    %112 = vector.broadcast %92 : vector<1x32xf32> to vector<64x32xf32>
    %113 = arith.mulf %111, %112 : vector<64x32xf32>
    %114 = vector.broadcast %93 : vector<1x32xf32> to vector<64x32xf32>
    %115 = arith.addf %113, %114 : vector<64x32xf32>
    %116 = arith.negf %115 : vector<64x32xf32>
    %117 = math.exp %116 : vector<64x32xf32>
    %cst_60 = arith.constant 1.000000e+00 : f32
    %118 = vector.broadcast %cst_60 : f32 to vector<64x32xf32>
    %119 = arith.addf %118, %117 : vector<64x32xf32>
    %120 = arith.divf %118, %119 : vector<64x32xf32>
    %121 = arith.mulf %115, %120 : vector<64x32xf32>
    %c16_61 = arith.constant 16 : index
    %c0_62 = arith.constant 0 : index
    %122 = vector.load %arg13[%c16_61, %c0_62] : memref<96x32xf32, #tpu.memory_space<vmem>>, vector<64x32xf32>
    tpu.vector_store %arg13[%c16_61, %c0_62], %121 {strides = array<i32>} : memref<96x32xf32, #tpu.memory_space<vmem>>, vector<64x32xf32>,
    %c7_63 = arith.constant 7 : index
    %c0_64 = arith.constant 0 : index
    %123 = vector.load %arg13[%c7_63, %c0_64] : memref<96x32xf32, #tpu.memory_space<vmem>>, vector<64x32xf32>
    %cst_65 = arith.constant 0.000000e+00 : f32
    %124 = vector.broadcast %cst_65 : f32 to vector<64x32xf32>
    %125 = arith.select %22, %123, %124 : vector<64x32xi1>, vector<64x32xf32>
    %c8_66 = arith.constant 8 : index
    %c0_67 = arith.constant 0 : index
    %126 = vector.load %arg13[%c8_66, %c0_67] : memref<96x32xf32, #tpu.memory_space<vmem>>, vector<64x32xf32>
    %c9_68 = arith.constant 9 : index
    %c0_69 = arith.constant 0 : index
    %127 = vector.load %arg13[%c9_68, %c0_69] : memref<96x32xf32, #tpu.memory_space<vmem>>, vector<64x32xf32>
    %cst_70 = arith.constant 0.000000e+00 : f32
    %128 = vector.broadcast %cst_70 : f32 to vector<64x32xf32>
    %129 = arith.select %24, %127, %128 : vector<64x32xi1>, vector<64x32xf32>
    %c15_71 = arith.constant 15 : index
    %c0_72 = arith.constant 0 : index
    %130 = vector.load %arg13[%c15_71, %c0_72] : memref<96x32xf32, #tpu.memory_space<vmem>>, vector<64x32xf32>
    %cst_73 = arith.constant 0.000000e+00 : f32
    %131 = vector.broadcast %cst_73 : f32 to vector<64x32xf32>
    %132 = arith.select %22, %130, %131 : vector<64x32xi1>, vector<64x32xf32>
    %c16_74 = arith.constant 16 : index
    %c0_75 = arith.constant 0 : index
    %133 = vector.load %arg13[%c16_74, %c0_75] : memref<96x32xf32, #tpu.memory_space<vmem>>, vector<64x32xf32>
    %c17_76 = arith.constant 17 : index
    %c0_77 = arith.constant 0 : index
    %134 = vector.load %arg13[%c17_76, %c0_77] : memref<96x32xf32, #tpu.memory_space<vmem>>, vector<64x32xf32>
    %cst_78 = arith.constant 0.000000e+00 : f32
    %135 = vector.broadcast %cst_78 : f32 to vector<64x32xf32>
    %136 = arith.select %24, %134, %135 : vector<64x32xi1>, vector<64x32xf32>
    %c23_79 = arith.constant 23 : index
    %c0_80 = arith.constant 0 : index
    %137 = vector.load %arg13[%c23_79, %c0_80] : memref<96x32xf32, #tpu.memory_space<vmem>>, vector<64x32xf32>
    %cst_81 = arith.constant 0.000000e+00 : f32
    %138 = vector.broadcast %cst_81 : f32 to vector<64x32xf32>
    %139 = arith.select %22, %137, %138 : vector<64x32xi1>, vector<64x32xf32>
    %c24_82 = arith.constant 24 : index
    %c0_83 = arith.constant 0 : index
    %140 = vector.load %arg13[%c24_82, %c0_83] : memref<96x32xf32, #tpu.memory_space<vmem>>, vector<64x32xf32>
    %c25_84 = arith.constant 25 : index
    %c0_85 = arith.constant 0 : index
    %141 = vector.load %arg13[%c25_84, %c0_85] : memref<96x32xf32, #tpu.memory_space<vmem>>, vector<64x32xf32>
    %cst_86 = arith.constant 0.000000e+00 : f32
    %142 = vector.broadcast %cst_86 : f32 to vector<64x32xf32>
    %143 = arith.select %24, %141, %142 : vector<64x32xi1>, vector<64x32xf32>
    %144 = tpu.concatenate %125, %126, %129, %132, %133, %136, %139, %140, %143 in 1 : vector<64x32xf32>, vector<64x32xf32>, vector<64x32xf32>, vector<64x32xf32>, vector<64x32xf32>, vector<64x32xf32>, vector<64x32xf32>, vector<64x32xf32>, vector<64x32xf32> -> vector<64x288xf32>
    %145 = arith.truncf %144 : vector<64x288xf32> to vector<64x288xbf16>
    %c1_87 = arith.constant 1 : index
    %c0_88 = arith.constant 0 : index
    %c0_89 = arith.constant 0 : index
    %146 = vector.load %arg6[%c1_87, %c0_88, %c0_89] : memref<4x288x32xbf16, #tpu.memory_space<vmem>>, vector<1x288x32xbf16>
    %147 = vector.shape_cast %146 : vector<1x288x32xbf16> to vector<288x32xbf16>
    %cst_90 = arith.constant dense<0.000000e+00> : vector<64x32xf32>
    %148 = tpu.matmul %145, %147, %cst_90 {dimension_numbers = #tpu.dot_dimension_numbers<[1], [0], [0], [1], [0, 0, 1, 1], [], []>} : vector<64x288xbf16>, vector<288x32xbf16>, vector<64x32xf32> -> vector<64x32xf32>
    %c1_91 = arith.constant 1 : index
    %c0_92 = arith.constant 0 : index
    %149 = vector.load %arg7[%c1_91, %c0_92] : memref<4x32xf32, #tpu.memory_space<vmem>>, vector<1x32xf32>
    %150 = vector.broadcast %149 : vector<1x32xf32> to vector<64x32xf32>
    %151 = arith.addf %148, %150 : vector<64x32xf32>
    %152 = arith.addf %27, %151 : vector<64x32xf32>
    %c2 = arith.constant 2 : index
    %c0_93 = arith.constant 0 : index
    %153 = vector.load %arg4[%c2, %c0_93] : memref<5x32xf32, #tpu.memory_space<vmem>>, vector<1x32xf32>
    %c2_94 = arith.constant 2 : index
    %c0_95 = arith.constant 0 : index
    %154 = vector.load %arg5[%c2_94, %c0_95] : memref<5x32xf32, #tpu.memory_space<vmem>>, vector<1x32xf32>
    %cst_96 = arith.constant dense<0.000000e+00> : vector<32xf32>
    %155 = vector.multi_reduction <add>, %152, %cst_96 [0] : vector<64x32xf32> to vector<32xf32>
    %156 = vector.shape_cast %155 : vector<32xf32> to vector<1x32xf32>
    %cst_97 = arith.constant 1.562500e-02 : f32
    %157 = vector.broadcast %cst_97 : f32 to vector<1x32xf32>
    %158 = arith.mulf %156, %157 : vector<1x32xf32>
    %cst_98 = arith.constant dense<0.000000e+00> : vector<1x32xf32>
    %159 = tpu.matmul %158, %25, %cst_98 {dimension_numbers = #tpu.dot_dimension_numbers<[1], [0], [0], [1], [0, 0, 1, 1], [], []>} : vector<1x32xf32>, vector<32x32xf32>, vector<1x32xf32> -> vector<1x32xf32>
    %160 = vector.broadcast %159 : vector<1x32xf32> to vector<64x32xf32>
    %161 = arith.subf %152, %160 : vector<64x32xf32>
    %162 = arith.mulf %161, %161 : vector<64x32xf32>
    %cst_99 = arith.constant dense<0.000000e+00> : vector<32xf32>
    %163 = vector.multi_reduction <add>, %162, %cst_99 [0] : vector<64x32xf32> to vector<32xf32>
    %164 = vector.shape_cast %163 : vector<32xf32> to vector<1x32xf32>
    %cst_100 = arith.constant 1.562500e-02 : f32
    %165 = vector.broadcast %cst_100 : f32 to vector<1x32xf32>
    %166 = arith.mulf %164, %165 : vector<1x32xf32>
    %cst_101 = arith.constant dense<0.000000e+00> : vector<1x32xf32>
    %167 = tpu.matmul %166, %25, %cst_101 {dimension_numbers = #tpu.dot_dimension_numbers<[1], [0], [0], [1], [0, 0, 1, 1], [], []>} : vector<1x32xf32>, vector<32x32xf32>, vector<1x32xf32> -> vector<1x32xf32>
    %cst_102 = arith.constant 9.99999974E-6 : f32
    %168 = vector.broadcast %cst_102 : f32 to vector<1x32xf32>
    %169 = arith.addf %167, %168 : vector<1x32xf32>
    %170 = math.rsqrt %169 : vector<1x32xf32>
    %171 = vector.broadcast %170 : vector<1x32xf32> to vector<64x32xf32>
    %172 = arith.mulf %161, %171 : vector<64x32xf32>
    %173 = vector.broadcast %153 : vector<1x32xf32> to vector<64x32xf32>
    %174 = arith.mulf %172, %173 : vector<64x32xf32>
    %175 = vector.broadcast %154 : vector<1x32xf32> to vector<64x32xf32>
    %176 = arith.addf %174, %175 : vector<64x32xf32>
    %177 = arith.truncf %176 : vector<64x32xf32> to vector<64x32xbf16>
    %c0_103 = arith.constant 0 : index
    %c0_104 = arith.constant 0 : index
    %178 = vector.load %arg8[%c0_103, %c0_104] : memref<32x96xbf16, #tpu.memory_space<vmem>>, vector<32x96xbf16>
    %cst_105 = arith.constant dense<0.000000e+00> : vector<64x96xf32>
    %179 = tpu.matmul %177, %178, %cst_105 {dimension_numbers = #tpu.dot_dimension_numbers<[1], [0], [0], [1], [0, 0, 1, 1], [], []>} : vector<64x32xbf16>, vector<32x96xbf16>, vector<64x96xf32> -> vector<64x96xf32>
    %c0_106 = arith.constant 0 : index
    %c0_107 = arith.constant 0 : index
    %180 = vector.load %arg9[%c0_106, %c0_107] : memref<1x96xf32, #tpu.memory_space<vmem>>, vector<1x96xf32>
    %181 = vector.broadcast %180 : vector<1x96xf32> to vector<64x96xf32>
    %182 = arith.addf %179, %181 : vector<64x96xf32>
    %183 = vector.extract_strided_slice %182 {offsets = [0, 0], sizes = [64, 32], strides = [1, 1]} : vector<64x96xf32> to vector<64x32xf32>
    %184 = vector.extract_strided_slice %182 {offsets = [0, 32], sizes = [64, 32], strides = [1, 1]} : vector<64x96xf32> to vector<64x32xf32>
    %185 = vector.extract_strided_slice %182 {offsets = [0, 64], sizes = [64, 32], strides = [1, 1]} : vector<64x96xf32> to vector<64x32xf32>
    %186 = arith.truncf %183 : vector<64x32xf32> to vector<64x32xbf16>
    %187 = arith.truncf %184 : vector<64x32xf32> to vector<64x32xbf16>
    %cst_108 = arith.constant dense<0.000000e+00> : vector<64x64xf32>
    %188 = tpu.matmul %186, %187, %cst_108 {dimension_numbers = #tpu.dot_dimension_numbers<[1], [1], [0], [0], [0, 0, 1, 0], [], []>} : vector<64x32xbf16>, vector<64x32xbf16>, vector<64x64xf32> -> vector<64x64xf32>
    %cst_109 = arith.constant dense<0xFF800000> : vector<64xf32>
    %189 = vector.multi_reduction <maximumf>, %188, %cst_109 [1] : vector<64x64xf32> to vector<64xf32>
    %190 = vector.shape_cast %189 : vector<64xf32> to vector<64x1xf32>
    %191 = vector.broadcast %190 : vector<64x1xf32> to vector<64x64xf32>
    %192 = arith.subf %188, %191 : vector<64x64xf32>
    %193 = math.exp %192 : vector<64x64xf32>
    %cst_110 = arith.constant dense<0.000000e+00> : vector<64xf32>
    %194 = vector.multi_reduction <add>, %193, %cst_110 [1] : vector<64x64xf32> to vector<64xf32>
    %195 = vector.shape_cast %194 : vector<64xf32> to vector<64x1xf32>
    %196 = tpu.reciprocal %195 {approx = true} : vector<64x1xf32> -> vector<64x1xf32>
    %197 = vector.broadcast %196 : vector<64x1xf32> to vector<64x64xf32>
    %198 = arith.mulf %193, %197 : vector<64x64xf32>
    %199 = arith.truncf %198 : vector<64x64xf32> to vector<64x64xbf16>
    %200 = arith.truncf %185 : vector<64x32xf32> to vector<64x32xbf16>
    %cst_111 = arith.constant dense<0.000000e+00> : vector<64x32xf32>
    %201 = tpu.matmul %199, %200, %cst_111 {dimension_numbers = #tpu.dot_dimension_numbers<[1], [0], [0], [1], [0, 0, 1, 1], [], []>} : vector<64x64xbf16>, vector<64x32xbf16>, vector<64x32xf32> -> vector<64x32xf32>
    %202 = arith.truncf %201 : vector<64x32xf32> to vector<64x32xbf16>
    %c0_112 = arith.constant 0 : index
    %c0_113 = arith.constant 0 : index
    %203 = vector.load %arg10[%c0_112, %c0_113] : memref<32x32xbf16, #tpu.memory_space<vmem>>, vector<32x32xbf16>
    %cst_114 = arith.constant dense<0.000000e+00> : vector<64x32xf32>
    %204 = tpu.matmul %202, %203, %cst_114 {dimension_numbers = #tpu.dot_dimension_numbers<[1], [0], [0], [1], [0, 0, 1, 1], [], []>} : vector<64x32xbf16>, vector<32x32xbf16>, vector<64x32xf32> -> vector<64x32xf32>
    %c0_115 = arith.constant 0 : index
    %c0_116 = arith.constant 0 : index
    %205 = vector.load %arg11[%c0_115, %c0_116] : memref<1x32xf32, #tpu.memory_space<vmem>>, vector<1x32xf32>
    %206 = vector.broadcast %205 : vector<1x32xf32> to vector<64x32xf32>
    %207 = arith.addf %204, %206 : vector<64x32xf32>
    %208 = arith.addf %152, %207 : vector<64x32xf32>
    %c3 = arith.constant 3 : index
    %c0_117 = arith.constant 0 : index
    %209 = vector.load %arg4[%c3, %c0_117] : memref<5x32xf32, #tpu.memory_space<vmem>>, vector<1x32xf32>
    %c3_118 = arith.constant 3 : index
    %c0_119 = arith.constant 0 : index
    %210 = vector.load %arg5[%c3_118, %c0_119] : memref<5x32xf32, #tpu.memory_space<vmem>>, vector<1x32xf32>
    %cst_120 = arith.constant dense<0.000000e+00> : vector<32xf32>
    %211 = vector.multi_reduction <add>, %208, %cst_120 [0] : vector<64x32xf32> to vector<32xf32>
    %212 = vector.shape_cast %211 : vector<32xf32> to vector<1x32xf32>
    %cst_121 = arith.constant 1.562500e-02 : f32
    %213 = vector.broadcast %cst_121 : f32 to vector<1x32xf32>
    %214 = arith.mulf %212, %213 : vector<1x32xf32>
    %cst_122 = arith.constant dense<0.000000e+00> : vector<1x32xf32>
    %215 = tpu.matmul %214, %25, %cst_122 {dimension_numbers = #tpu.dot_dimension_numbers<[1], [0], [0], [1], [0, 0, 1, 1], [], []>} : vector<1x32xf32>, vector<32x32xf32>, vector<1x32xf32> -> vector<1x32xf32>
    %216 = vector.broadcast %215 : vector<1x32xf32> to vector<64x32xf32>
    %217 = arith.subf %208, %216 : vector<64x32xf32>
    %218 = arith.mulf %217, %217 : vector<64x32xf32>
    %cst_123 = arith.constant dense<0.000000e+00> : vector<32xf32>
    %219 = vector.multi_reduction <add>, %218, %cst_123 [0] : vector<64x32xf32> to vector<32xf32>
    %220 = vector.shape_cast %219 : vector<32xf32> to vector<1x32xf32>
    %cst_124 = arith.constant 1.562500e-02 : f32
    %221 = vector.broadcast %cst_124 : f32 to vector<1x32xf32>
    %222 = arith.mulf %220, %221 : vector<1x32xf32>
    %cst_125 = arith.constant dense<0.000000e+00> : vector<1x32xf32>
    %223 = tpu.matmul %222, %25, %cst_125 {dimension_numbers = #tpu.dot_dimension_numbers<[1], [0], [0], [1], [0, 0, 1, 1], [], []>} : vector<1x32xf32>, vector<32x32xf32>, vector<1x32xf32> -> vector<1x32xf32>
    %cst_126 = arith.constant 9.99999974E-6 : f32
    %224 = vector.broadcast %cst_126 : f32 to vector<1x32xf32>
    %225 = arith.addf %223, %224 : vector<1x32xf32>
    %226 = math.rsqrt %225 : vector<1x32xf32>
    %227 = vector.broadcast %226 : vector<1x32xf32> to vector<64x32xf32>
    %228 = arith.mulf %217, %227 : vector<64x32xf32>
    %229 = vector.broadcast %209 : vector<1x32xf32> to vector<64x32xf32>
    %230 = arith.mulf %228, %229 : vector<64x32xf32>
    %231 = vector.broadcast %210 : vector<1x32xf32> to vector<64x32xf32>
    %232 = arith.addf %230, %231 : vector<64x32xf32>
    %233 = arith.negf %232 : vector<64x32xf32>
    %234 = math.exp %233 : vector<64x32xf32>
    %cst_127 = arith.constant 1.000000e+00 : f32
    %235 = vector.broadcast %cst_127 : f32 to vector<64x32xf32>
    %236 = arith.addf %235, %234 : vector<64x32xf32>
    %237 = arith.divf %235, %236 : vector<64x32xf32>
    %238 = arith.mulf %232, %237 : vector<64x32xf32>
    %c16_128 = arith.constant 16 : index
    %c0_129 = arith.constant 0 : index
    %239 = vector.load %arg13[%c16_128, %c0_129] : memref<96x32xf32, #tpu.memory_space<vmem>>, vector<64x32xf32>
    tpu.vector_store %arg13[%c16_128, %c0_129], %238 {strides = array<i32>} : memref<96x32xf32, #tpu.memory_space<vmem>>, vector<64x32xf32>,
    %c7_130 = arith.constant 7 : index
    %c0_131 = arith.constant 0 : index
    %240 = vector.load %arg13[%c7_130, %c0_131] : memref<96x32xf32, #tpu.memory_space<vmem>>, vector<64x32xf32>
    %cst_132 = arith.constant 0.000000e+00 : f32
    %241 = vector.broadcast %cst_132 : f32 to vector<64x32xf32>
    %242 = arith.select %22, %240, %241 : vector<64x32xi1>, vector<64x32xf32>
    %c8_133 = arith.constant 8 : index
    %c0_134 = arith.constant 0 : index
    %243 = vector.load %arg13[%c8_133, %c0_134] : memref<96x32xf32, #tpu.memory_space<vmem>>, vector<64x32xf32>
    %c9_135 = arith.constant 9 : index
    %c0_136 = arith.constant 0 : index
    %244 = vector.load %arg13[%c9_135, %c0_136] : memref<96x32xf32, #tpu.memory_space<vmem>>, vector<64x32xf32>
    %cst_137 = arith.constant 0.000000e+00 : f32
    %245 = vector.broadcast %cst_137 : f32 to vector<64x32xf32>
    %246 = arith.select %24, %244, %245 : vector<64x32xi1>, vector<64x32xf32>
    %c15_138 = arith.constant 15 : index
    %c0_139 = arith.constant 0 : index
    %247 = vector.load %arg13[%c15_138, %c0_139] : memref<96x32xf32, #tpu.memory_space<vmem>>, vector<64x32xf32>
    %cst_140 = arith.constant 0.000000e+00 : f32
    %248 = vector.broadcast %cst_140 : f32 to vector<64x32xf32>
    %249 = arith.select %22, %247, %248 : vector<64x32xi1>, vector<64x32xf32>
    %c16_141 = arith.constant 16 : index
    %c0_142 = arith.constant 0 : index
    %250 = vector.load %arg13[%c16_141, %c0_142] : memref<96x32xf32, #tpu.memory_space<vmem>>, vector<64x32xf32>
    %c17_143 = arith.constant 17 : index
    %c0_144 = arith.constant 0 : index
    %251 = vector.load %arg13[%c17_143, %c0_144] : memref<96x32xf32, #tpu.memory_space<vmem>>, vector<64x32xf32>
    %cst_145 = arith.constant 0.000000e+00 : f32
    %252 = vector.broadcast %cst_145 : f32 to vector<64x32xf32>
    %253 = arith.select %24, %251, %252 : vector<64x32xi1>, vector<64x32xf32>
    %c23_146 = arith.constant 23 : index
    %c0_147 = arith.constant 0 : index
    %254 = vector.load %arg13[%c23_146, %c0_147] : memref<96x32xf32, #tpu.memory_space<vmem>>, vector<64x32xf32>
    %cst_148 = arith.constant 0.000000e+00 : f32
    %255 = vector.broadcast %cst_148 : f32 to vector<64x32xf32>
    %256 = arith.select %22, %254, %255 : vector<64x32xi1>, vector<64x32xf32>
    %c24_149 = arith.constant 24 : index
    %c0_150 = arith.constant 0 : index
    %257 = vector.load %arg13[%c24_149, %c0_150] : memref<96x32xf32, #tpu.memory_space<vmem>>, vector<64x32xf32>
    %c25_151 = arith.constant 25 : index
    %c0_152 = arith.constant 0 : index
    %258 = vector.load %arg13[%c25_151, %c0_152] : memref<96x32xf32, #tpu.memory_space<vmem>>, vector<64x32xf32>
    %cst_153 = arith.constant 0.000000e+00 : f32
    %259 = vector.broadcast %cst_153 : f32 to vector<64x32xf32>
    %260 = arith.select %24, %258, %259 : vector<64x32xi1>, vector<64x32xf32>
    %261 = tpu.concatenate %242, %243, %246, %249, %250, %253, %256, %257, %260 in 1 : vector<64x32xf32>, vector<64x32xf32>, vector<64x32xf32>, vector<64x32xf32>, vector<64x32xf32>, vector<64x32xf32>, vector<64x32xf32>, vector<64x32xf32>, vector<64x32xf32> -> vector<64x288xf32>
    %262 = arith.truncf %261 : vector<64x288xf32> to vector<64x288xbf16>
    %c2_154 = arith.constant 2 : index
    %c0_155 = arith.constant 0 : index
    %c0_156 = arith.constant 0 : index
    %263 = vector.load %arg6[%c2_154, %c0_155, %c0_156] : memref<4x288x32xbf16, #tpu.memory_space<vmem>>, vector<1x288x32xbf16>
    %264 = vector.shape_cast %263 : vector<1x288x32xbf16> to vector<288x32xbf16>
    %cst_157 = arith.constant dense<0.000000e+00> : vector<64x32xf32>
    %265 = tpu.matmul %262, %264, %cst_157 {dimension_numbers = #tpu.dot_dimension_numbers<[1], [0], [0], [1], [0, 0, 1, 1], [], []>} : vector<64x288xbf16>, vector<288x32xbf16>, vector<64x32xf32> -> vector<64x32xf32>
    %c2_158 = arith.constant 2 : index
    %c0_159 = arith.constant 0 : index
    %266 = vector.load %arg7[%c2_158, %c0_159] : memref<4x32xf32, #tpu.memory_space<vmem>>, vector<1x32xf32>
    %267 = vector.broadcast %266 : vector<1x32xf32> to vector<64x32xf32>
    %268 = arith.addf %265, %267 : vector<64x32xf32>
    %c0_160 = arith.constant 0 : index
    %c1_161 = arith.constant 1 : index
    %c0_162 = arith.constant 0 : index
    %269 = vector.load %arg2[%c0_160, %c1_161, %c0_162] : memref<1x2x32xf32, #tpu.memory_space<vmem>>, vector<1x1x32xf32>
    %270 = vector.shape_cast %269 : vector<1x1x32xf32> to vector<1x32xf32>
    %271 = vector.broadcast %270 : vector<1x32xf32> to vector<64x32xf32>
    %272 = arith.addf %268, %271 : vector<64x32xf32>
    %c4 = arith.constant 4 : index
    %c0_163 = arith.constant 0 : index
    %273 = vector.load %arg4[%c4, %c0_163] : memref<5x32xf32, #tpu.memory_space<vmem>>, vector<1x32xf32>
    %c4_164 = arith.constant 4 : index
    %c0_165 = arith.constant 0 : index
    %274 = vector.load %arg5[%c4_164, %c0_165] : memref<5x32xf32, #tpu.memory_space<vmem>>, vector<1x32xf32>
    %cst_166 = arith.constant dense<0.000000e+00> : vector<32xf32>
    %275 = vector.multi_reduction <add>, %272, %cst_166 [0] : vector<64x32xf32> to vector<32xf32>
    %276 = vector.shape_cast %275 : vector<32xf32> to vector<1x32xf32>
    %cst_167 = arith.constant 1.562500e-02 : f32
    %277 = vector.broadcast %cst_167 : f32 to vector<1x32xf32>
    %278 = arith.mulf %276, %277 : vector<1x32xf32>
    %cst_168 = arith.constant dense<0.000000e+00> : vector<1x32xf32>
    %279 = tpu.matmul %278, %25, %cst_168 {dimension_numbers = #tpu.dot_dimension_numbers<[1], [0], [0], [1], [0, 0, 1, 1], [], []>} : vector<1x32xf32>, vector<32x32xf32>, vector<1x32xf32> -> vector<1x32xf32>
    %280 = vector.broadcast %279 : vector<1x32xf32> to vector<64x32xf32>
    %281 = arith.subf %272, %280 : vector<64x32xf32>
    %282 = arith.mulf %281, %281 : vector<64x32xf32>
    %cst_169 = arith.constant dense<0.000000e+00> : vector<32xf32>
    %283 = vector.multi_reduction <add>, %282, %cst_169 [0] : vector<64x32xf32> to vector<32xf32>
    %284 = vector.shape_cast %283 : vector<32xf32> to vector<1x32xf32>
    %cst_170 = arith.constant 1.562500e-02 : f32
    %285 = vector.broadcast %cst_170 : f32 to vector<1x32xf32>
    %286 = arith.mulf %284, %285 : vector<1x32xf32>
    %cst_171 = arith.constant dense<0.000000e+00> : vector<1x32xf32>
    %287 = tpu.matmul %286, %25, %cst_171 {dimension_numbers = #tpu.dot_dimension_numbers<[1], [0], [0], [1], [0, 0, 1, 1], [], []>} : vector<1x32xf32>, vector<32x32xf32>, vector<1x32xf32> -> vector<1x32xf32>
    %cst_172 = arith.constant 9.99999974E-6 : f32
    %288 = vector.broadcast %cst_172 : f32 to vector<1x32xf32>
    %289 = arith.addf %287, %288 : vector<1x32xf32>
    %290 = math.rsqrt %289 : vector<1x32xf32>
    %291 = vector.broadcast %290 : vector<1x32xf32> to vector<64x32xf32>
    %292 = arith.mulf %281, %291 : vector<64x32xf32>
    %293 = vector.broadcast %273 : vector<1x32xf32> to vector<64x32xf32>
    %294 = arith.mulf %292, %293 : vector<64x32xf32>
    %295 = vector.broadcast %274 : vector<1x32xf32> to vector<64x32xf32>
    %296 = arith.addf %294, %295 : vector<64x32xf32>
    %297 = arith.negf %296 : vector<64x32xf32>
    %298 = math.exp %297 : vector<64x32xf32>
    %cst_173 = arith.constant 1.000000e+00 : f32
    %299 = vector.broadcast %cst_173 : f32 to vector<64x32xf32>
    %300 = arith.addf %299, %298 : vector<64x32xf32>
    %301 = arith.divf %299, %300 : vector<64x32xf32>
    %302 = arith.mulf %296, %301 : vector<64x32xf32>
    %c16_174 = arith.constant 16 : index
    %c0_175 = arith.constant 0 : index
    %303 = vector.load %arg13[%c16_174, %c0_175] : memref<96x32xf32, #tpu.memory_space<vmem>>, vector<64x32xf32>
    tpu.vector_store %arg13[%c16_174, %c0_175], %302 {strides = array<i32>} : memref<96x32xf32, #tpu.memory_space<vmem>>, vector<64x32xf32>,
    %c7_176 = arith.constant 7 : index
    %c0_177 = arith.constant 0 : index
    %304 = vector.load %arg13[%c7_176, %c0_177] : memref<96x32xf32, #tpu.memory_space<vmem>>, vector<64x32xf32>
    %cst_178 = arith.constant 0.000000e+00 : f32
    %305 = vector.broadcast %cst_178 : f32 to vector<64x32xf32>
    %306 = arith.select %22, %304, %305 : vector<64x32xi1>, vector<64x32xf32>
    %c8_179 = arith.constant 8 : index
    %c0_180 = arith.constant 0 : index
    %307 = vector.load %arg13[%c8_179, %c0_180] : memref<96x32xf32, #tpu.memory_space<vmem>>, vector<64x32xf32>
    %c9_181 = arith.constant 9 : index
    %c0_182 = arith.constant 0 : index
    %308 = vector.load %arg13[%c9_181, %c0_182] : memref<96x32xf32, #tpu.memory_space<vmem>>, vector<64x32xf32>
    %cst_183 = arith.constant 0.000000e+00 : f32
    %309 = vector.broadcast %cst_183 : f32 to vector<64x32xf32>
    %310 = arith.select %24, %308, %309 : vector<64x32xi1>, vector<64x32xf32>
    %c15_184 = arith.constant 15 : index
    %c0_185 = arith.constant 0 : index
    %311 = vector.load %arg13[%c15_184, %c0_185] : memref<96x32xf32, #tpu.memory_space<vmem>>, vector<64x32xf32>
    %cst_186 = arith.constant 0.000000e+00 : f32
    %312 = vector.broadcast %cst_186 : f32 to vector<64x32xf32>
    %313 = arith.select %22, %311, %312 : vector<64x32xi1>, vector<64x32xf32>
    %c16_187 = arith.constant 16 : index
    %c0_188 = arith.constant 0 : index
    %314 = vector.load %arg13[%c16_187, %c0_188] : memref<96x32xf32, #tpu.memory_space<vmem>>, vector<64x32xf32>
    %c17_189 = arith.constant 17 : index
    %c0_190 = arith.constant 0 : index
    %315 = vector.load %arg13[%c17_189, %c0_190] : memref<96x32xf32, #tpu.memory_space<vmem>>, vector<64x32xf32>
    %cst_191 = arith.constant 0.000000e+00 : f32
    %316 = vector.broadcast %cst_191 : f32 to vector<64x32xf32>
    %317 = arith.select %24, %315, %316 : vector<64x32xi1>, vector<64x32xf32>
    %c23_192 = arith.constant 23 : index
    %c0_193 = arith.constant 0 : index
    %318 = vector.load %arg13[%c23_192, %c0_193] : memref<96x32xf32, #tpu.memory_space<vmem>>, vector<64x32xf32>
    %cst_194 = arith.constant 0.000000e+00 : f32
    %319 = vector.broadcast %cst_194 : f32 to vector<64x32xf32>
    %320 = arith.select %22, %318, %319 : vector<64x32xi1>, vector<64x32xf32>
    %c24_195 = arith.constant 24 : index
    %c0_196 = arith.constant 0 : index
    %321 = vector.load %arg13[%c24_195, %c0_196] : memref<96x32xf32, #tpu.memory_space<vmem>>, vector<64x32xf32>
    %c25_197 = arith.constant 25 : index
    %c0_198 = arith.constant 0 : index
    %322 = vector.load %arg13[%c25_197, %c0_198] : memref<96x32xf32, #tpu.memory_space<vmem>>, vector<64x32xf32>
    %cst_199 = arith.constant 0.000000e+00 : f32
    %323 = vector.broadcast %cst_199 : f32 to vector<64x32xf32>
    %324 = arith.select %24, %322, %323 : vector<64x32xi1>, vector<64x32xf32>
    %325 = tpu.concatenate %306, %307, %310, %313, %314, %317, %320, %321, %324 in 1 : vector<64x32xf32>, vector<64x32xf32>, vector<64x32xf32>, vector<64x32xf32>, vector<64x32xf32>, vector<64x32xf32>, vector<64x32xf32>, vector<64x32xf32>, vector<64x32xf32> -> vector<64x288xf32>
    %326 = arith.truncf %325 : vector<64x288xf32> to vector<64x288xbf16>
    %c3_200 = arith.constant 3 : index
    %c0_201 = arith.constant 0 : index
    %c0_202 = arith.constant 0 : index
    %327 = vector.load %arg6[%c3_200, %c0_201, %c0_202] : memref<4x288x32xbf16, #tpu.memory_space<vmem>>, vector<1x288x32xbf16>
    %328 = vector.shape_cast %327 : vector<1x288x32xbf16> to vector<288x32xbf16>
    %cst_203 = arith.constant dense<0.000000e+00> : vector<64x32xf32>
    %329 = tpu.matmul %326, %328, %cst_203 {dimension_numbers = #tpu.dot_dimension_numbers<[1], [0], [0], [1], [0, 0, 1, 1], [], []>} : vector<64x288xbf16>, vector<288x32xbf16>, vector<64x32xf32> -> vector<64x32xf32>
    %c3_204 = arith.constant 3 : index
    %c0_205 = arith.constant 0 : index
    %330 = vector.load %arg7[%c3_204, %c0_205] : memref<4x32xf32, #tpu.memory_space<vmem>>, vector<1x32xf32>
    %331 = vector.broadcast %330 : vector<1x32xf32> to vector<64x32xf32>
    %332 = arith.addf %329, %331 : vector<64x32xf32>
    %333 = arith.addf %208, %332 : vector<64x32xf32>
    %c0_206 = arith.constant 0 : index
    %c0_207 = arith.constant 0 : index
    %c0_208 = arith.constant 0 : index
    %334 = vector.load %arg12[%c0_206, %c0_207, %c0_208] : memref<1x64x32xf32, #tpu.memory_space<vmem>>, vector<1x64x32xf32>
    %335 = vector.shape_cast %334 : vector<1x64x32xf32> to vector<64x32xf32>
    %336 = vector.shape_cast %333 : vector<64x32xf32> to vector<1x64x32xf32>
    tpu.vector_store %arg12[%c0_206, %c0_207, %c0_208], %336 {strides = array<i32>} : memref<1x64x32xf32, #tpu.memory_space<vmem>>, vector<1x64x32xf32>,
    return
  }
  func.func @transform_0(%arg0: i32) -> (i32, i32, i32) {
    %c0_i32 = arith.constant 0 : i32
    %c0_i32_0 = arith.constant 0 : i32
    %c0_i32_1 = arith.constant 0 : i32
    return %arg0, %c0_i32, %c0_i32_0 : i32, i32, i32
  }
  func.func @transform_1(%arg0: i32) -> (i32, i32, i32) {
    %c0_i32 = arith.constant 0 : i32
    %c0_i32_0 = arith.constant 0 : i32
    %c0_i32_1 = arith.constant 0 : i32
    return %arg0, %c0_i32, %c0_i32_0 : i32, i32, i32
  }
  func.func @transform_2(%arg0: i32) -> (i32, i32) {
    %c0_i32 = arith.constant 0 : i32
    %c0_i32_0 = arith.constant 0 : i32
    %c0_i32_1 = arith.constant 0 : i32
    return %c0_i32, %c0_i32_0 : i32, i32
  }
  func.func @transform_3(%arg0: i32) -> (i32, i32) {
    %c0_i32 = arith.constant 0 : i32
    %c0_i32_0 = arith.constant 0 : i32
    %c0_i32_1 = arith.constant 0 : i32
    return %c0_i32, %c0_i32_0 : i32, i32
  }
  func.func @transform_4(%arg0: i32) -> (i32, i32) {
    %c0_i32 = arith.constant 0 : i32
    %c0_i32_0 = arith.constant 0 : i32
    %c0_i32_1 = arith.constant 0 : i32
    return %c0_i32, %c0_i32_0 : i32, i32
  }
  func.func @transform_5(%arg0: i32) -> (i32, i32, i32) {
    %c0_i32 = arith.constant 0 : i32
    %c0_i32_0 = arith.constant 0 : i32
    %c0_i32_1 = arith.constant 0 : i32
    %c0_i32_2 = arith.constant 0 : i32
    return %c0_i32, %c0_i32_0, %c0_i32_1 : i32, i32, i32
  }
  func.func @transform_6(%arg0: i32) -> (i32, i32) {
    %c0_i32 = arith.constant 0 : i32
    %c0_i32_0 = arith.constant 0 : i32
    %c0_i32_1 = arith.constant 0 : i32
    return %c0_i32, %c0_i32_0 : i32, i32
  }
  func.func @transform_7(%arg0: i32) -> (i32, i32) {
    %c0_i32 = arith.constant 0 : i32
    %c0_i32_0 = arith.constant 0 : i32
    %c0_i32_1 = arith.constant 0 : i32
    return %c0_i32, %c0_i32_0 : i32, i32
  }
  func.func @transform_8(%arg0: i32) -> (i32, i32) {
    %c0_i32 = arith.constant 0 : i32
    %c0_i32_0 = arith.constant 0 : i32
    %c0_i32_1 = arith.constant 0 : i32
    return %c0_i32, %c0_i32_0 : i32, i32
  }
  func.func @transform_9(%arg0: i32) -> (i32, i32) {
    %c0_i32 = arith.constant 0 : i32
    %c0_i32_0 = arith.constant 0 : i32
    %c0_i32_1 = arith.constant 0 : i32
    return %c0_i32, %c0_i32_0 : i32, i32
  }
  func.func @transform_10(%arg0: i32) -> (i32, i32) {
    %c0_i32 = arith.constant 0 : i32
    %c0_i32_0 = arith.constant 0 : i32
    %c0_i32_1 = arith.constant 0 : i32
    return %c0_i32, %c0_i32_0 : i32, i32
  }
  func.func @transform_11(%arg0: i32) -> (i32, i32, i32) {
    %c0_i32 = arith.constant 0 : i32
    %c0_i32_0 = arith.constant 0 : i32
    %c0_i32_1 = arith.constant 0 : i32
    return %arg0, %c0_i32, %c0_i32_0 : i32, i32, i32
  }
}

</mosaic_0001>

<llo_original>
// kernel: mid_block_forward.1
$region0: #{mid_block_forward.1}
  #allocation0 [shape = 'u32[]', space=smem, size = 0x4, offset = 0x4, fixed_abs, tag = 'smem constant byte address 0x4 - core index']
  #allocation1 [shape = 'u32[144,128]{1,0:T(1,128)}', space=vmem, size = 0x12000, scoped, tag = 'internal scratch']
  #allocation2 [shape = 'f32[96,32]{1,0:T(8,128)}', space=vmem, size = 0xc000, scoped, tag = 'scratch operand']
  %s0 = inlined_call_operand.hbm [shape: f32[2,64,32], index: 0, kind: input, shape index: {}]
  %s1 = inlined_call_operand.hbm [shape: f32[2,2,32], index: 1, kind: input, shape index: {}]
  %s2 = inlined_call_operand.hbm [shape: f32[32,32], index: 2, kind: input, shape index: {}]
  %s3 = inlined_call_operand.hbm [shape: f32[5,32], index: 3, kind: input, shape index: {}]
  %s4 = inlined_call_operand.hbm [shape: f32[5,32], index: 4, kind: input, shape index: {}]
  %s5 = inlined_call_operand.hbm [shape: bf16[4,288,32], index: 5, kind: input, shape index: {}]
  %s6 = inlined_call_operand.hbm [shape: f32[4,32], index: 6, kind: input, shape index: {}]
  %s7 = inlined_call_operand.hbm [shape: bf16[32,96], index: 7, kind: input, shape index: {}]
  %s8 = inlined_call_operand.hbm [shape: f32[1,96], index: 8, kind: input, shape index: {}]
  %s9 = inlined_call_operand.hbm [shape: bf16[32,32], index: 9, kind: input, shape index: {}]
  %s10 = inlined_call_operand.hbm [shape: f32[1,32], index: 10, kind: input, shape index: {}]
  %s11 = inlined_call_operand.hbm [shape: f32[2,64,32], index: 11, kind: output, shape index: {}]
  %s12 = sld [smem:[#allocation0]]
  $region121: #{mid_block_forward.1} parent=0
    _
  %s14 = ssub.s32 1, %s12
  %s15 = scalar_select 0, %s14, %s12
  $region1: #{mid_block_forward.1} parent=0
    #allocation3 [shape = 'u8[65536]{0}', space=vmem, size = 0x10000, scoped, tag = 'input window, operand 0']
    #allocation4 [shape = 's32[2]{0}', space=sflag, size = 0x8, scoped, tag = 'scoped memory for mid_block_forward.1']
    #allocation5 [shape = 's32[2]{0}', space=sflag, size = 0x8, scoped, tag = 'scoped memory for mid_block_forward.1']
    #allocation6 [shape = 'u8[2048]{0}', space=vmem, size = 0x800, scoped, tag = 'input window, operand 1']
    #allocation7 [shape = 's32[2]{0}', space=sflag, size = 0x8, scoped, tag = 'scoped memory for mid_block_forward.1']
    #allocation8 [shape = 'u8[16384]{0}', space=vmem, size = 0x4000, scoped, tag = 'input window, operand 2, single buffered']
    #allocation9 [shape = 'u8[4096]{0}', space=vmem, size = 0x1000, scoped, tag = 'input window, operand 3, single buffered']
    #allocation10 [shape = 's32[1]{0}', space=sflag, size = 0x4, scoped, tag = 'scoped memory for mid_block_forward.1']
    #allocation11 [shape = 'u8[4096]{0}', space=vmem, size = 0x1000, scoped, tag = 'input window, operand 4, single buffered']
    #allocation12 [shape = 'u8[294912]{0}', space=vmem, size = 0x48000, scoped, tag = 'input window, operand 5, single buffered']
    #allocation13 [shape = 's32[1]{0}', space=sflag, size = 0x4, scoped, tag = 'scoped memory for mid_block_forward.1']
    #allocation14 [shape = 'u8[2048]{0}', space=vmem, size = 0x800, scoped, tag = 'input window, operand 6, single buffered']
    #allocation15 [shape = 'u8[8192]{0}', space=vmem, size = 0x2000, scoped, tag = 'input window, operand 7, single buffered']
    #allocation16 [shape = 's32[1]{0}', space=sflag, size = 0x4, scoped, tag = 'scoped memory for mid_block_forward.1']
    #allocation17 [shape = 'u8[512]{0}', space=vmem, size = 0x400, scoped, tag = 'input window, operand 8, single buffered']
    #allocation18 [shape = 'u8[8192]{0}', space=vmem, size = 0x2000, scoped, tag = 'input window, operand 9, single buffered']
    #allocation19 [shape = 's32[1]{0}', space=sflag, size = 0x4, scoped, tag = 'scoped memory for mid_block_forward.1']
    #allocation20 [shape = 'u8[512]{0}', space=vmem, size = 0x400, scoped, tag = 'input window, operand 10, single buffered']
    #allocation21 [shape = 'u8[65536]{0}', space=vmem, size = 0x10000, scoped, tag = 'output window, operand 0']
    %16 = vsyncpa [#allocation4], 0
    %s17 = scalar_lea.sflag [#allocation4], 1
    %18 = vsyncpa %s17, 0
    %19 = vsyncpa [#allocation7], 0
    %s20 = scalar_lea.sflag [#allocation7], 1
    %21 = vsyncpa %s20, 0
    %22 = vsyncpa [#allocation10], 0
    %23 = vsyncpa [#allocation13], 0
    %24 = vsyncpa [#allocation16], 0
    %25 = vsyncpa [#allocation19], 0
    %26 = vsyncpa [#allocation5], 0
    %s27 = scalar_lea.sflag [#allocation5], 1
    %28 = vsyncpa %s27, 0
    loop: start=0, step=1, limit=4
    $region2: #{mid_block_forward.1} parent=1 // loop_pre_header
      _
    $region3: #{mid_block_forward.1} parent=1 // loop_header
      %s30 = sphi 0, %s34
      %p31 = scmp.ge.s32.totalorder %s30, 4
      %s40 = sphi 0, %s42
      %s43 = sphi 0, %s40
      %s44 = sphi 0, %s43
      %s60 = sphi 0, %s44
      %s66 = sphi 0, %s68
      %s69 = sphi 0, %s66
      %s70 = sphi 0, %s69
      %s86 = sphi 0, %s70
      %s90 = sphi 0, %s90
      %s92 = sphi 0, %s90
      %s93 = sphi 0, %s92
      %s107 = sphi 0, %s93
      %s111 = sphi 0, %s111
      %s113 = sphi 0, %s111
      %s114 = sphi 0, %s113
      %s128 = sphi 0, %s114
      %s132 = sphi 0, %s132
      %s134 = sphi 0, %s132
      %s135 = sphi 0, %s134
      %s149 = sphi 0, %s135
      %s153 = sphi 0, %s153
      %s155 = sphi 0, %s153
      %s156 = sphi 0, %s155
      %s170 = sphi 0, %s156
      %s174 = sphi 0, %s174
      %s176 = sphi 0, %s174
      %s177 = sphi 0, %s176
      %s191 = sphi 0, %s177
      %s195 = sphi 0, %s195
      %s197 = sphi 0, %s195
      %s198 = sphi 0, %s197
      %s212 = sphi 0, %s198
      %s216 = sphi 0, %s216
      %s218 = sphi 0, %s216
      %s219 = sphi 0, %s218
      %s233 = sphi 0, %s219
      %s237 = sphi 0, %s237
      %s239 = sphi 0, %s237
      %s240 = sphi 0, %s239
      %s254 = sphi 0, %s240
      %s258 = sphi 0, %s258
      %s260 = sphi 0, %s258
      %s261 = sphi 0, %s260
      %s275 = sphi 0, %s261
      %s281 = sphi 0, %s283
      %s284 = sphi 0, %s281
      %s285 = sphi 0, %s284
      %s301 = sphi 0, %s285
    $region4: #{mid_block_forward.1} parent=1 // loop_header_branch
      %33 = sbr.rel (%p31) target = $region8
    $region5: #{mid_block_forward.1} parent=1 // loop_body
      %s35 = ssub.s32 %s30, 1
      %s36 = ssub.s32 %s30, 2
      %s37 = sadd.s32 %s30, 1
      %s38 = ssub.s32 %s30, %s37
      %p39 = scmp.eq.s32.totalorder %s38, 0
      %s41 = sadd.s32 %s40, 1
      %s42 = scalar_select %p39, %s40, %s41
      %p45 = pneg %p39
      %p46 = scmp.eq.s32.totalorder %s30, 1
      %p47 = por %p45, %p46
      %p48 = scmp.ne.s32.totalorder %s40, %s43
      %p49 = scmp.eq.s32.totalorder %s30, 0
      %p50 = por %p48, %p49
      %p51 = scmp.ne.s32.totalorder %s40, %s43
      %p52 = scmp.eq.s32.totalorder %s35, 1
      %p53 = por %p51, %p52
      %p54 = scmp.ne.s32.totalorder %s43, %s44
      %p55 = scmp.eq.s32.totalorder %s35, 0
      %p56 = por %p54, %p55
      %p57 = scmp.ne.s32.totalorder %s43, %s44
      %p58 = scmp.eq.s32.totalorder %s36, 1
      %p59 = por %p57, %p58
      %p61 = scmp.ne.s32.totalorder %s44, %s60
      %p62 = scmp.eq.s32.totalorder %s36, 0
      %p63 = por %p61, %p62
      %s64 = ssub.s32 %s30, %s37
      %p65 = scmp.eq.s32.totalorder %s64, 0
      %s67 = sadd.s32 %s66, 1
      %s68 = scalar_select %p65, %s66, %s67
      %p71 = pneg %p65
      %p72 = scmp.eq.s32.totalorder %s30, 1
      %p73 = por %p71, %p72
      %p74 = scmp.ne.s32.totalorder %s66, %s69
      %p75 = scmp.eq.s32.totalorder %s30, 0
      %p76 = por %p74, %p75
      %p77 = scmp.ne.s32.totalorder %s66, %s69
      %p78 = scmp.eq.s32.totalorder %s35, 1
      %p79 = por %p77, %p78
      %p80 = scmp.ne.s32.totalorder %s69, %s70
      %p81 = scmp.eq.s32.totalorder %s35, 0
      %p82 = por %p80, %p81
      %p83 = scmp.ne.s32.totalorder %s69, %s70
      %p84 = scmp.eq.s32.totalorder %s36, 1
      %p85 = por %p83, %p84
      %p87 = scmp.ne.s32.totalorder %s70, %s86
      %p88 = scmp.eq.s32.totalorder %s36, 0
      %p89 = por %p87, %p88
      %s91 = sadd.s32 %s90, 1
      %p94 = scmp.eq.s32.totalorder %s30, 1
      %p95 = scmp.ne.s32.totalorder %s90, %s92
      %p96 = scmp.eq.s32.totalorder %s30, 0
      %p97 = por %p95, %p96
      %p98 = scmp.ne.s32.totalorder %s90, %s92
      %p99 = scmp.eq.s32.totalorder %s35, 1
      %p100 = por %p98, %p99
      %p101 = scmp.ne.s32.totalorder %s92, %s93
      %p102 = scmp.eq.s32.totalorder %s35, 0
      %p103 = por %p101, %p102
      %p104 = scmp.ne.s32.totalorder %s92, %s93
      %p105 = scmp.eq.s32.totalorder %s36, 1
      %p106 = por %p104, %p105
      %p108 = scmp.ne.s32.totalorder %s93, %s107
      %p109 = scmp.eq.s32.totalorder %s36, 0
      %p110 = por %p108, %p109
      %s112 = sadd.s32 %s111, 1
      %p115 = scmp.eq.s32.totalorder %s30, 1
      %p116 = scmp.ne.s32.totalorder %s111, %s113
      %p117 = scmp.eq.s32.totalorder %s30, 0
      %p118 = por %p116, %p117
      %p119 = scmp.ne.s32.totalorder %s111, %s113
      %p120 = scmp.eq.s32.totalorder %s35, 1
      %p121 = por %p119, %p120
      %p122 = scmp.ne.s32.totalorder %s113, %s114
      %p123 = scmp.eq.s32.totalorder %s35, 0
      %p124 = por %p122, %p123
      %p125 = scmp.ne.s32.totalorder %s113, %s114
      %p126 = scmp.eq.s32.totalorder %s36, 1
      %p127 = por %p125, %p126
      %p129 = scmp.ne.s32.totalorder %s114, %s128
      %p130 = scmp.eq.s32.totalorder %s36, 0
      %p131 = por %p129, %p130
      %s133 = sadd.s32 %s132, 1
      %p136 = scmp.eq.s32.totalorder %s30, 1
      %p137 = scmp.ne.s32.totalorder %s132, %s134
      %p138 = scmp.eq.s32.totalorder %s30, 0
      %p139 = por %p137, %p138
      %p140 = scmp.ne.s32.totalorder %s132, %s134
      %p141 = scmp.eq.s32.totalorder %s35, 1
      %p142 = por %p140, %p141
      %p143 = scmp.ne.s32.totalorder %s134, %s135
      %p144 = scmp.eq.s32.totalorder %s35, 0
      %p145 = por %p143, %p144
      %p146 = scmp.ne.s32.totalorder %s134, %s135
      %p147 = scmp.eq.s32.totalorder %s36, 1
      %p148 = por %p146, %p147
      %p150 = scmp.ne.s32.totalorder %s135, %s149
      %p151 = scmp.eq.s32.totalorder %s36, 0
      %p152 = por %p150, %p151
      %s154 = sadd.s32 %s153, 1
      %p157 = scmp.eq.s32.totalorder %s30, 1
      %p158 = scmp.ne.s32.totalorder %s153, %s155
      %p159 = scmp.eq.s32.totalorder %s30, 0
      %p160 = por %p158, %p159
      %p161 = scmp.ne.s32.totalorder %s153, %s155
      %p162 = scmp.eq.s32.totalorder %s35, 1
      %p163 = por %p161, %p162
      %p164 = scmp.ne.s32.totalorder %s155, %s156
      %p165 = scmp.eq.s32.totalorder %s35, 0
      %p166 = por %p164, %p165
      %p167 = scmp.ne.s32.totalorder %s155, %s156
      %p168 = scmp.eq.s32.totalorder %s36, 1
      %p169 = por %p167, %p168
      %p171 = scmp.ne.s32.totalorder %s156, %s170
      %p172 = scmp.eq.s32.totalorder %s36, 0
      %p173 = por %p171, %p172
      %s175 = sadd.s32 %s174, 1
      %p178 = scmp.eq.s32.totalorder %s30, 1
      %p179 = scmp.ne.s32.totalorder %s174, %s176
      %p180 = scmp.eq.s32.totalorder %s30, 0
      %p181 = por %p179, %p180
      %p182 = scmp.ne.s32.totalorder %s174, %s176
      %p183 = scmp.eq.s32.totalorder %s35, 1
      %p184 = por %p182, %p183
      %p185 = scmp.ne.s32.totalorder %s176, %s177
      %p186 = scmp.eq.s32.totalorder %s35, 0
      %p187 = por %p185, %p186
      %p188 = scmp.ne.s32.totalorder %s176, %s177
      %p189 = scmp.eq.s32.totalorder %s36, 1
      %p190 = por %p188, %p189
      %p192 = scmp.ne.s32.totalorder %s177, %s191
      %p193 = scmp.eq.s32.totalorder %s36, 0
      %p194 = por %p192, %p193
      %s196 = sadd.s32 %s195, 1
      %p199 = scmp.eq.s32.totalorder %s30, 1
      %p200 = scmp.ne.s32.totalorder %s195, %s197
      %p201 = scmp.eq.s32.totalorder %s30, 0
      %p202 = por %p200, %p201
      %p203 = scmp.ne.s32.totalorder %s195, %s197
      %p204 = scmp.eq.s32.totalorder %s35, 1
      %p205 = por %p203, %p204
      %p206 = scmp.ne.s32.totalorder %s197, %s198
      %p207 = scmp.eq.s32.totalorder %s35, 0
      %p208 = por %p206, %p207
      %p209 = scmp.ne.s32.totalorder %s197, %s198
      %p210 = scmp.eq.s32.totalorder %s36, 1
      %p211 = por %p209, %p210
      %p213 = scmp.ne.s32.totalorder %s198, %s212
      %p214 = scmp.eq.s32.totalorder %s36, 0
      %p215 = por %p213, %p214
      %s217 = sadd.s32 %s216, 1
      %p220 = scmp.eq.s32.totalorder %s30, 1
      %p221 = scmp.ne.s32.totalorder %s216, %s218
      %p222 = scmp.eq.s32.totalorder %s30, 0
      %p223 = por %p221, %p222
      %p224 = scmp.ne.s32.totalorder %s216, %s218
      %p225 = scmp.eq.s32.totalorder %s35, 1
      %p226 = por %p224, %p225
      %p227 = scmp.ne.s32.totalorder %s218, %s219
      %p228 = scmp.eq.s32.totalorder %s35, 0
      %p229 = por %p227, %p228
      %p230 = scmp.ne.s32.totalorder %s218, %s219
      %p231 = scmp.eq.s32.totalorder %s36, 1
      %p232 = por %p230, %p231
      %p234 = scmp.ne.s32.totalorder %s219, %s233
      %p235 = scmp.eq.s32.totalorder %s36, 0
      %p236 = por %p234, %p235
      %s238 = sadd.s32 %s237, 1
      %p241 = scmp.eq.s32.totalorder %s30, 1
      %p242 = scmp.ne.s32.totalorder %s237, %s239
      %p243 = scmp.eq.s32.totalorder %s30, 0
      %p244 = por %p242, %p243
      %p245 = scmp.ne.s32.totalorder %s237, %s239
      %p246 = scmp.eq.s32.totalorder %s35, 1
      %p247 = por %p245, %p246
      %p248 = scmp.ne.s32.totalorder %s239, %s240
      %p249 = scmp.eq.s32.totalorder %s35, 0
      %p250 = por %p248, %p249
      %p251 = scmp.ne.s32.totalorder %s239, %s240
      %p252 = scmp.eq.s32.totalorder %s36, 1
      %p253 = por %p251, %p252
      %p255 = scmp.ne.s32.totalorder %s240, %s254
      %p256 = scmp.eq.s32.totalorder %s36, 0
      %p257 = por %p255, %p256
      %s259 = sadd.s32 %s258, 1
      %p262 = scmp.eq.s32.totalorder %s30, 1
      %p263 = scmp.ne.s32.totalorder %s258, %s260
      %p264 = scmp.eq.s32.totalorder %s30, 0
      %p265 = por %p263, %p264
      %p266 = scmp.ne.s32.totalorder %s258, %s260
      %p267 = scmp.eq.s32.totalorder %s35, 1
      %p268 = por %p266, %p267
      %p269 = scmp.ne.s32.totalorder %s260, %s261
      %p270 = scmp.eq.s32.totalorder %s35, 0
      %p271 = por %p269, %p270
      %p272 = scmp.ne.s32.totalorder %s260, %s261
      %p273 = scmp.eq.s32.totalorder %s36, 1
      %p274 = por %p272, %p273
      %p276 = scmp.ne.s32.totalorder %s261, %s275
      %p277 = scmp.eq.s32.totalorder %s36, 0
      %p278 = por %p276, %p277
      %s279 = ssub.s32 %s30, %s37
      %p280 = scmp.eq.s32.totalorder %s279, 0
      %s282 = sadd.s32 %s281, 1
      %s283 = scalar_select %p280, %s281, %s282
      %p286 = pneg %p280
      %p287 = scmp.eq.s32.totalorder %s30, 1
      %p288 = por %p286, %p287
      %p289 = scmp.ne.s32.totalorder %s281, %s284
      %p290 = scmp.eq.s32.totalorder %s30, 0
      %p291 = por %p289, %p290
      %p292 = scmp.ne.s32.totalorder %s281, %s284
      %p293 = scmp.eq.s32.totalorder %s35, 1
      %p294 = por %p292, %p293
      %p295 = scmp.ne.s32.totalorder %s284, %s285
      %p296 = scmp.eq.s32.totalorder %s35, 0
      %p297 = por %p295, %p296
      %p298 = scmp.ne.s32.totalorder %s284, %s285
      %p299 = scmp.eq.s32.totalorder %s36, 1
      %p300 = por %p298, %p299
      %p302 = scmp.ne.s32.totalorder %s285, %s301
      %p303 = scmp.eq.s32.totalorder %s36, 0
      %p304 = por %p302, %p303
      %p305 = scmp.le.s32.totalorder 1, %s30
      %p306 = scmp.lt.s32.totalorder %s30, 3
      %p307 = pnand %p305, %p306
      %p308 = pneg %p307
      // Predicated region
      $region9: #{mid_block_forward.1} parent=5 // pred_check
        _
      $region10: #{mid_block_forward.1} parent=5 // pred_check_branch
        %310 = sbr.rel (%p307) target = $region12
      $region11: #{mid_block_forward.1} parent=5 // pred_region
        %s311 = ssub.s32 %s30, 1
        // Predicated region
        $region13: #{mid_block_forward.1} parent=11 // pred_check
          %p312 = pneg %p103
        $region14: #{mid_block_forward.1} parent=11 // pred_check_branch
          %314 = sbr.rel (%p312) target = $region16
        $region15: #{mid_block_forward.1} parent=11 // pred_region
          %s316 = ssub.s32 512, 512
          %317 = vsyncadd [#allocation7], %s316
          %s318 = sshll.u32 [#allocation8], 4
          %s319 = int_to_ptr.vmem [resolvable:$true] %s318
          %324 = dma.hbm_to_vmem [thread:$0]  %s2, 512, %s319, [#allocation7], 128, 128, 8
        $region16: #{mid_block_forward.1} parent=11 // pred_fallthru
          _
        // Predicated region
        $region17: #{mid_block_forward.1} parent=11 // pred_check
          %p325 = pneg %p124
        $region18: #{mid_block_forward.1} parent=11 // pred_check_branch
          %327 = sbr.rel (%p325) target = $region20
        $region19: #{mid_block_forward.1} parent=11 // pred_region
          %s329 = ssub.s32 128, 128
          %330 = vsyncadd [#allocation10], %s329
          %s332 = sshll.u32 [#allocation9], 4
          %s333 = int_to_ptr.vmem [resolvable:$true] %s332
          %335 = dma.hbm_to_vmem [thread:$0]  %s3, 128, %s333, [#allocation10]
        $region20: #{mid_block_forward.1} parent=11 // pred_fallthru
          _
        // Predicated region
        $region21: #{mid_block_forward.1} parent=11 // pred_check
          %p336 = pneg %p145
        $region22: #{mid_block_forward.1} parent=11 // pred_check_branch
          %338 = sbr.rel (%p336) target = $region24
        $region23: #{mid_block_forward.1} parent=11 // pred_region
          %s340 = ssub.s32 128, 128
          %341 = vsyncadd [#allocation10], %s340
          %s343 = sshll.u32 [#allocation11], 4
          %s344 = int_to_ptr.vmem [resolvable:$true] %s343
          %346 = dma.hbm_to_vmem [thread:$0]  %s4, 128, %s344, [#allocation10]
        $region24: #{mid_block_forward.1} parent=11 // pred_fallthru
          _
        // Predicated region
        $region25: #{mid_block_forward.1} parent=11 // pred_check
          %p347 = pneg %p166
        $region26: #{mid_block_forward.1} parent=11 // pred_check_branch
          %349 = sbr.rel (%p347) target = $region28
        $region27: #{mid_block_forward.1} parent=11 // pred_region
          %s351 = ssub.s32 9216, 9216
          %352 = vsyncadd [#allocation13], %s351
          %s353 = sshll.u32 [#allocation12], 4
          %s354 = int_to_ptr.vmem [resolvable:$true] %s353
          %359 = dma.hbm_to_vmem [thread:$0]  %s5, 9216, %s354, [#allocation13], 64, 64, 4
        $region28: #{mid_block_forward.1} parent=11 // pred_fallthru
          _
        // Predicated region
        $region29: #{mid_block_forward.1} parent=11 // pred_check
          %p360 = pneg %p187
        $region30: #{mid_block_forward.1} parent=11 // pred_check_branch
          %362 = sbr.rel (%p360) target = $region32
        $region31: #{mid_block_forward.1} parent=11 // pred_region
          %s364 = ssub.s32 64, 64
          %365 = vsyncadd [#allocation13], %s364
          %s367 = sshll.u32 [#allocation14], 4
          %s368 = int_to_ptr.vmem [resolvable:$true] %s367
          %370 = dma.hbm_to_vmem [thread:$0]  %s6, 64, %s368, [#allocation13]
        $region32: #{mid_block_forward.1} parent=11 // pred_fallthru
          _
        // Predicated region
        $region33: #{mid_block_forward.1} parent=11 // pred_check
          %p371 = pneg %p208
        $region34: #{mid_block_forward.1} parent=11 // pred_check_branch
          %373 = sbr.rel (%p371) target = $region36
        $region35: #{mid_block_forward.1} parent=11 // pred_region
          %s375 = ssub.s32 256, 256
          %376 = vsyncadd [#allocation16], %s375
          %s377 = sshll.u32 [#allocation15], 4
          %s378 = int_to_ptr.vmem [resolvable:$true] %s377
          %383 = dma.hbm_to_vmem [thread:$0]  %s7, 256, %s378, [#allocation16], 64, 64, 4
        $region36: #{mid_block_forward.1} parent=11 // pred_fallthru
          _
        // Predicated region
        $region37: #{mid_block_forward.1} parent=11 // pred_check
          %p384 = pneg %p229
        $region38: #{mid_block_forward.1} parent=11 // pred_check_branch
          %386 = sbr.rel (%p384) target = $region40
        $region39: #{mid_block_forward.1} parent=11 // pred_region
          %s388 = ssub.s32 16, 16
          %389 = vsyncadd [#allocation16], %s388
          %s391 = sshll.u32 [#allocation17], 4
          %s392 = int_to_ptr.vmem [resolvable:$true] %s391
          %394 = dma.hbm_to_vmem [thread:$0]  %s8, 16, %s392, [#allocation16]
        $region40: #{mid_block_forward.1} parent=11 // pred_fallthru
          _
        // Predicated region
        $region41: #{mid_block_forward.1} parent=11 // pred_check
          %p395 = pneg %p250
        $region42: #{mid_block_forward.1} parent=11 // pred_check_branch
          %397 = sbr.rel (%p395) target = $region44
        $region43: #{mid_block_forward.1} parent=11 // pred_region
          %s399 = ssub.s32 256, 256
          %400 = vsyncadd [#allocation19], %s399
          %s401 = sshll.u32 [#allocation18], 4
          %s402 = int_to_ptr.vmem [resolvable:$true] %s401
          %407 = dma.hbm_to_vmem [thread:$0]  %s9, 256, %s402, [#allocation19], 64, 64, 4
        $region44: #{mid_block_forward.1} parent=11 // pred_fallthru
          _
        // Predicated region
        $region45: #{mid_block_forward.1} parent=11 // pred_check
          %p408 = pneg %p271
        $region46: #{mid_block_forward.1} parent=11 // pred_check_branch
          %410 = sbr.rel (%p408) target = $region48
        $region47: #{mid_block_forward.1} parent=11 // pred_region
          %s412 = ssub.s32 16, 16
          %413 = vsyncadd [#allocation19], %s412
          %s415 = sshll.u32 [#allocation20], 4
          %s416 = int_to_ptr.vmem [resolvable:$true] %s415
          %418 = dma.hbm_to_vmem [thread:$0]  %s10, 16, %s416, [#allocation19]
        $region48: #{mid_block_forward.1} parent=11 // pred_fallthru
          _
      $region12: #{mid_block_forward.1} parent=5 // pred_fallthru
        _
      %p419 = scmp.lt.s32.totalorder %s30, 2
      // Predicated region
      $region49: #{mid_block_forward.1} parent=5 // pred_check
        %p420 = pneg %p419
      $region50: #{mid_block_forward.1} parent=5 // pred_check_branch
        %422 = sbr.rel (%p420) target = $region52
      $region51: #{mid_block_forward.1} parent=5 // pred_region
        // Predicated region
        $region53: #{mid_block_forward.1} parent=51 // pred_check
          %p423 = pneg %p50
        $region54: #{mid_block_forward.1} parent=51 // pred_check_branch
          %425 = sbr.rel (%p423) target = $region56
        $region55: #{mid_block_forward.1} parent=51 // pred_region
          %s426 = sand.u32 %s40, 1
          %s427 = scalar_lea.sflag [#allocation4], %s426
          %s428 = sand.u32 %s40, 1
          %s429 = smul.addr %s428, 64
          %s430 = scalar_lea.vmem [#allocation3], %s429
          %s432 = ssub.s32 1024, 1024
          %433 = vsyncadd %s427, %s432
          %s434 = smul.addr %s30, 8
          %s435 = smul.addr %s434, 128
          %s436 = scalar_lea.hbm %s0, %s435
          %s437 = sshll.u32 %s430, 4
          %s438 = int_to_ptr.vmem [resolvable:$true] %s437
          %443 = dma.hbm_to_vmem [thread:$0]  %s436, 1024, %s438, %s427, 128, 128, 8
        $region56: #{mid_block_forward.1} parent=51 // pred_fallthru
          _
        // Predicated region
        $region57: #{mid_block_forward.1} parent=51 // pred_check
          %p444 = pneg %p76
        $region58: #{mid_block_forward.1} parent=51 // pred_check_branch
          %446 = sbr.rel (%p444) target = $region60
        $region59: #{mid_block_forward.1} parent=51 // pred_region
          %s447 = sand.u32 %s30, 1
          %s448 = scalar_lea.sflag [#allocation7], %s447
          %s449 = sand.u32 %s66, 1
          %s450 = smul.addr %s449, 2
          %s451 = scalar_lea.vmem [#allocation6], %s450
          %s453 = ssub.s32 32, 32
          %454 = vsyncadd %s448, %s453
          %s455 = smul.addr %s30, 32
          %s456 = scalar_lea.hbm %s1, %s455
          %s458 = sshll.u32 %s451, 4
          %s459 = int_to_ptr.vmem [resolvable:$true] %s458
          %461 = dma.hbm_to_vmem [thread:$0]  %s456, 32, %s459, %s448
        $region60: #{mid_block_forward.1} parent=51 // pred_fallthru
          _
      $region52: #{mid_block_forward.1} parent=5 // pred_fallthru
        _
      %p462 = scmp.le.s32.totalorder 1, %s30
      %p463 = scmp.lt.s32.totalorder %s30, 3
      %p464 = pnand %p462, %p463
      %p465 = pneg %p464
      // Predicated region
      $region61: #{mid_block_forward.1} parent=5 // pred_check
        _
      $region62: #{mid_block_forward.1} parent=5 // pred_check_branch
        %467 = sbr.rel (%p464) target = $region64
      $region63: #{mid_block_forward.1} parent=5 // pred_region
        %s468 = ssub.s32 %s30, 1
        %s469 = sand.u32 %s43, 1
        %s470 = scalar_lea.sflag [#allocation4], %s469
        %s471 = sand.u32 %s43, 1
        %s472 = smul.addr %s471, 64
        %s473 = scalar_lea.vmem [#allocation3], %s472
        // Predicated region
        $region65: #{mid_block_forward.1} parent=63 // pred_check
          %p474 = pneg %p56
        $region66: #{mid_block_forward.1} parent=63 // pred_check_branch
          %476 = sbr.rel (%p474) target = $region68
        $region67: #{mid_block_forward.1} parent=63 // pred_region
          %477 = dma.done %s470, 1024
        $region68: #{mid_block_forward.1} parent=63 // pred_fallthru
          _
        %s478 = sand.u32 %s35, 1
        %s479 = scalar_lea.sflag [#allocation7], %s478
        %s480 = sand.u32 %s69, 1
        %s481 = smul.addr %s480, 2
        %s482 = scalar_lea.vmem [#allocation6], %s481
        // Predicated region
        $region69: #{mid_block_forward.1} parent=63 // pred_check
          %p483 = pneg %p82
        $region70: #{mid_block_forward.1} parent=63 // pred_check_branch
          %485 = sbr.rel (%p483) target = $region72
        $region71: #{mid_block_forward.1} parent=63 // pred_region
          %486 = dma.done %s479, 32
        $region72: #{mid_block_forward.1} parent=63 // pred_fallthru
          _
        // Predicated region
        $region73: #{mid_block_forward.1} parent=63 // pred_check
          %p487 = pneg %p103
        $region74: #{mid_block_forward.1} parent=63 // pred_check_branch
          %489 = sbr.rel (%p487) target = $region76
        $region75: #{mid_block_forward.1} parent=63 // pred_region
          %490 = dma.done [#allocation7], 512
        $region76: #{mid_block_forward.1} parent=63 // pred_fallthru
          _
        // Predicated region
        $region77: #{mid_block_forward.1} parent=63 // pred_check
          %p491 = pneg %p124
        $region78: #{mid_block_forward.1} parent=63 // pred_check_branch
          %493 = sbr.rel (%p491) target = $region80
        $region79: #{mid_block_forward.1} parent=63 // pred_region
          %494 = dma.done [#allocation10], 128
        $region80: #{mid_block_forward.1} parent=63 // pred_fallthru
          _
        // Predicated region
        $region81: #{mid_block_forward.1} parent=63 // pred_check
          %p495 = pneg %p145
        $region82: #{mid_block_forward.1} parent=63 // pred_check_branch
          %497 = sbr.rel (%p495) target = $region84
        $region83: #{mid_block_forward.1} parent=63 // pred_region
          %498 = dma.done [#allocation10], 128
        $region84: #{mid_block_forward.1} parent=63 // pred_fallthru
          _
        // Predicated region
        $region85: #{mid_block_forward.1} parent=63 // pred_check
          %p499 = pneg %p166
        $region86: #{mid_block_forward.1} parent=63 // pred_check_branch
          %501 = sbr.rel (%p499) target = $region88
        $region87: #{mid_block_forward.1} parent=63 // pred_region
          %502 = dma.done [#allocation13], 9216
        $region88: #{mid_block_forward.1} parent=63 // pred_fallthru
          _
        // Predicated region
        $region89: #{mid_block_forward.1} parent=63 // pred_check
          %p503 = pneg %p187
        $region90: #{mid_block_forward.1} parent=63 // pred_check_branch
          %505 = sbr.rel (%p503) target = $region92
        $region91: #{mid_block_forward.1} parent=63 // pred_region
          %506 = dma.done [#allocation13], 64
        $region92: #{mid_block_forward.1} parent=63 // pred_fallthru
          _
        // Predicated region
        $region93: #{mid_block_forward.1} parent=63 // pred_check
          %p507 = pneg %p208
        $region94: #{mid_block_forward.1} parent=63 // pred_check_branch
          %509 = sbr.rel (%p507) target = $region96
        $region95: #{mid_block_forward.1} parent=63 // pred_region
          %510 = dma.done [#allocation16], 256
        $region96: #{mid_block_forward.1} parent=63 // pred_fallthru
          _
        // Predicated region
        $region97: #{mid_block_forward.1} parent=63 // pred_check
          %p511 = pneg %p229
        $region98: #{mid_block_forward.1} parent=63 // pred_check_branch
          %513 = sbr.rel (%p511) target = $region100
        $region99: #{mid_block_forward.1} parent=63 // pred_region
          %514 = dma.done [#allocation16], 16
        $region100: #{mid_block_forward.1} parent=63 // pred_fallthru
          _
        // Predicated region
        $region101: #{mid_block_forward.1} parent=63 // pred_check
          %p515 = pneg %p250
        $region102: #{mid_block_forward.1} parent=63 // pred_check_branch
          %517 = sbr.rel (%p515) target = $region104
        $region103: #{mid_block_forward.1} parent=63 // pred_region
          %518 = dma.done [#allocation19], 256
        $region104: #{mid_block_forward.1} parent=63 // pred_fallthru
          _
        // Predicated region
        $region105: #{mid_block_forward.1} parent=63 // pred_check
          %p519 = pneg %p271
        $region106: #{mid_block_forward.1} parent=63 // pred_check_branch
          %521 = sbr.rel (%p519) target = $region108
        $region107: #{mid_block_forward.1} parent=63 // pred_region
          %522 = dma.done [#allocation19], 16
        $region108: #{mid_block_forward.1} parent=63 // pred_fallthru
          _
        %s523 = sand.u32 %s43, 1
        %s524 = scalar_lea.sflag [#allocation4], %s523
        %s525 = sand.u32 %s43, 1
        %s526 = smul.addr %s525, 64
        %s527 = scalar_lea.vmem [#allocation3], %s526
        %p528 = pneg %p56
        %p529 = pneg %p53
        %s530 = sand.u32 %s35, 1
        %s531 = scalar_lea.sflag [#allocation7], %s530
        %s532 = sand.u32 %s69, 1
        %s533 = smul.addr %s532, 2
        %s534 = scalar_lea.vmem [#allocation6], %s533
        %p535 = pneg %p82
        %p536 = pneg %p79
        %p537 = pneg %p103
        %p538 = pneg %p100
        %p539 = pneg %p124
        %p540 = pneg %p121
        %p541 = pneg %p145
        %p542 = pneg %p142
        %p543 = pneg %p166
        %p544 = pneg %p163
        %p545 = pneg %p187
        %p546 = pneg %p184
        %p547 = pneg %p208
        %p548 = pneg %p205
        %p549 = pneg %p229
        %p550 = pneg %p226
        %p551 = pneg %p250
        %p552 = pneg %p247
        %p553 = pneg %p271
        %p554 = pneg %p268
        %p555 = pneg %p297
        %p556 = pneg %p294
        %s557 = sand.u32 %s284, 1
        %s558 = scalar_lea.sflag [#allocation5], %s557
        %s559 = sand.u32 %s284, 1
        %s560 = smul.addr %s559, 64
        %s561 = scalar_lea.vmem [#allocation21], %s560
        %vm563 = vcmask 261120
        %564 = vst.msk [vmem:[#allocation2] sm:$0xff] %vm563, 0.0
        %565 = vst.msk [vmem:[#allocation2 + $0x8] sm:$0xff] %vm563, 0.0
        %566 = vst.msk [vmem:[#allocation2 + $0x50] sm:$0xff] %vm563, 0.0
        %567 = vst.msk [vmem:[#allocation2 + $0x58] sm:$0xff] %vm563, 0.0
        %v568 = vlaneseq
        %v569 = vshrl.u32 %v568, 7
        %v570 = vadd.s32 %v569, 8
        %v571 = vadd.s32 %v569, 16
        %v572 = vadd.s32 %v569, 24
        %v573 = vadd.s32 %v569, 32
        %v574 = vadd.s32 %v569, 40
        %v575 = vadd.s32 %v569, 48
        %v576 = vadd.s32 %v569, 56
        %vm577 = vcmp.lt.s32.totalorder %v569, 0
        %v578 = vsub.s32 0, %v569
        %v579 = vsel %vm577, %v578, %v569
        %v580 = vshrl.u32 %v579, 3
        %v581 = vand.u32 %v579, 7
        %v582 = vsub.s32 0, %v581
        %v583 = vsel %vm577, %v582, %v581
        %vm584 = vcmp.lt.s32.totalorder %v570, 0
        %v585 = vsub.s32 0, %v570
        %v586 = vsel %vm584, %v585, %v570
        %v587 = vshrl.u32 %v586, 3
        %v588 = vand.u32 %v586, 7
        %v589 = vsub.s32 0, %v588
        %v590 = vsel %vm584, %v589, %v588
        %vm591 = vcmp.lt.s32.totalorder %v571, 0
        %v592 = vsub.s32 0, %v571
        %v593 = vsel %vm591, %v592, %v571
        %v594 = vshrl.u32 %v593, 3
        %v595 = vand.u32 %v593, 7
        %v596 = vsub.s32 0, %v595
        %v597 = vsel %vm591, %v596, %v595
        %vm598 = vcmp.lt.s32.totalorder %v572, 0
        %v599 = vsub.s32 0, %v572
        %v600 = vsel %vm598, %v599, %v572
        %v601 = vshrl.u32 %v600, 3
        %v602 = vand.u32 %v600, 7
        %v603 = vsub.s32 0, %v602
        %v604 = vsel %vm598, %v603, %v602
        %vm605 = vcmp.lt.s32.totalorder %v573, 0
        %v606 = vsub.s32 0, %v573
        %v607 = vsel %vm605, %v606, %v573
        %v608 = vshrl.u32 %v607, 3
        %v609 = vand.u32 %v607, 7
        %v610 = vsub.s32 0, %v609
        %v611 = vsel %vm605, %v610, %v609
        %vm612 = vcmp.lt.s32.totalorder %v574, 0
        %v613 = vsub.s32 0, %v574
        %v614 = vsel %vm612, %v613, %v574
        %v615 = vshrl.u32 %v614, 3
        %v616 = vand.u32 %v614, 7
        %v617 = vsub.s32 0, %v616
        %v618 = vsel %vm612, %v617, %v616
        %vm619 = vcmp.lt.s32.totalorder %v575, 0
        %v620 = vsub.s32 0, %v575
        %v621 = vsel %vm619, %v620, %v575
        %v622 = vshrl.u32 %v621, 3
        %v623 = vand.u32 %v621, 7
        %v624 = vsub.s32 0, %v623
        %v625 = vsel %vm619, %v624, %v623
        %vm626 = vcmp.lt.s32.totalorder %v576, 0
        %v627 = vsub.s32 0, %v576
        %v628 = vsel %vm626, %v627, %v576
        %v629 = vshrl.u32 %v628, 3
        %v630 = vand.u32 %v628, 7
        %v631 = vsub.s32 0, %v630
        %v632 = vsel %vm626, %v631, %v630
        %vm633 = vcmp.ne.s32.totalorder %v583, 0
        %vm634 = vcmp.ne.s32.totalorder %v590, 0
        %vm635 = vcmp.ne.s32.totalorder %v597, 0
        %vm636 = vcmp.ne.s32.totalorder %v604, 0
        %vm637 = vcmp.ne.s32.totalorder %v611, 0
        %vm638 = vcmp.ne.s32.totalorder %v618, 0
        %vm639 = vcmp.ne.s32.totalorder %v625, 0
        %vm640 = vcmp.ne.s32.totalorder %v632, 0
        %vm641 = vcmp.lt.s32.totalorder %v583, 0
        %vm642 = vcmp.lt.s32.totalorder %v590, 0
        %vm643 = vcmp.lt.s32.totalorder %v597, 0
        %vm644 = vcmp.lt.s32.totalorder %v604, 0
        %vm645 = vcmp.lt.s32.totalorder %v611, 0
        %vm646 = vcmp.lt.s32.totalorder %v618, 0
        %vm647 = vcmp.lt.s32.totalorder %v625, 0
        %vm648 = vcmp.lt.s32.totalorder %v632, 0
        %vm649 = vmand %vm641, %vm633
        %vm650 = vmand %vm642, %vm634
        %vm651 = vmand %vm643, %vm635
        %vm652 = vmand %vm644, %vm636
        %vm653 = vmand %vm645, %vm637
        %vm654 = vmand %vm646, %vm638
        %vm655 = vmand %vm647, %vm639
        %vm656 = vmand %vm648, %vm640
        %v657 = vadd.s32 %v583, 8
        %v658 = vadd.s32 %v590, 8
        %v659 = vadd.s32 %v597, 8
        %v660 = vadd.s32 %v604, 8
        %v661 = vadd.s32 %v611, 8
        %v662 = vadd.s32 %v618, 8
        %v663 = vadd.s32 %v625, 8
        %v664 = vadd.s32 %v632, 8
        %v665 = vsel %vm649, %v657, %v583
        %v666 = vsel %vm650, %v658, %v590
        %v667 = vsel %vm651, %v659, %v597
        %v668 = vsel %vm652, %v660, %v604
        %v669 = vsel %vm653, %v661, %v611
        %v670 = vsel %vm654, %v662, %v618
        %v671 = vsel %vm655, %v663, %v625
        %v672 = vsel %vm656, %v664, %v632
        %vm673 = vcmp.ne.s32.totalorder %v665, 0
        %vm674 = vcmp.ne.s32.totalorder %v666, 0
        %vm675 = vcmp.ne.s32.totalorder %v667, 0
        %vm676 = vcmp.ne.s32.totalorder %v668, 0
        %vm677 = vcmp.ne.s32.totalorder %v669, 0
        %vm678 = vcmp.ne.s32.totalorder %v670, 0
        %vm679 = vcmp.ne.s32.totalorder %v671, 0
        %vm680 = vcmp.ne.s32.totalorder %v672, 0
        %vm681 = vcmp.ne.s32.totalorder %v665, 7
        %vm682 = vcmp.ne.s32.totalorder %v666, 7
        %vm683 = vcmp.ne.s32.totalorder %v667, 7
        %vm684 = vcmp.ne.s32.totalorder %v668, 7
        %vm685 = vcmp.ne.s32.totalorder %v669, 7
        %vm686 = vcmp.ne.s32.totalorder %v670, 7
        %vm687 = vcmp.ne.s32.totalorder %v671, 7
        %vm688 = vcmp.ne.s32.totalorder %v672, 7
        %v689 = vld [vmem:[#allocation8] sm:$0xff]
        %v690 = vld [vmem:[#allocation8 + $0x8] sm:$0xff]
        %v691 = vld [vmem:[#allocation8 + $0x10] sm:$0xff]
        %v692 = vld [vmem:[#allocation8 + $0x18] sm:$0xff]
        %v693 = vld [vmem:[%s473] sm:$0xff]
        %v694 = vld [vmem:[%s473 + $0x8] sm:$0xff]
        %v695 = vld [vmem:[%s473 + $0x10] sm:$0xff]
        %v696 = vld [vmem:[%s473 + $0x18] sm:$0xff]
        %v697 = vld [vmem:[%s473 + $0x20] sm:$0xff]
        %v698 = vld [vmem:[%s473 + $0x28] sm:$0xff]
        %v699 = vld [vmem:[%s473 + $0x30] sm:$0xff]
        %v700 = vld [vmem:[%s473 + $0x38] sm:$0xff]
        %v701 = vld [vmem:[#allocation9] sm:$0x1]
        %v702 = vld [vmem:[#allocation11] sm:$0x1]
        %v703 = vsel %vm563, %v693, 0.0
        %v704 = vsel %vm563, %v694, 0.0
        %v705 = vadd.f32 %v703, %v704
        %v706 = vsel %vm563, %v695, 0.0
        %v707 = vadd.f32 %v705, %v706
        %v708 = vsel %vm563, %v696, 0.0
        %v709 = vadd.f32 %v707, %v708
        %v710 = vsel %vm563, %v697, 0.0
        %v711 = vadd.f32 %v709, %v710
        %v712 = vsel %vm563, %v698, 0.0
        %v713 = vadd.f32 %v711, %v712
        %v714 = vsel %vm563, %v699, 0.0
        %v715 = vadd.f32 %v713, %v714
        %v716 = vsel %vm563, %v700, 0.0
        %v717 = vadd.f32 %v715, %v716
        %v718 = vrot.slane %v717, 4
        %v719 = vadd.f32 %v717, %v718
        %v720 = vrot.slane %v719, 2
        %v721 = vadd.f32 %v719, %v720
        %v722 = vrot.slane %v721, 1
        %v723 = vadd.f32 %v721, %v722
        %v724 = vmul.f32 %v723, 0.015625
        %v726 = vsel %vm563, %v724, 0
        %728 = vmatprep.subr.mxu0 0.0
        %729 = vmatpush1.msra.mxu0 %v689
        %730 = vmatprep.subr.mxu0 0.0
        %731 = vmatpush1.msra.mxu0 %v690
        %732 = vmatprep.subr.mxu0 0.0
        %733 = vmatpush1.msra.mxu0 %v691
        %734 = vmatprep.subr.mxu0 0.0
        %735 = vmatpush1.msra.mxu0 %v692
        %736 = vmatprep.subr.mxu0 0.0
        %737 = vmatpush1.msra.mxu0 0.0
        %738 = vmatprep.subr.mxu0 0.0
        %739 = vmatpush1.msra.mxu0 0.0
        %740 = vmatprep.subr.mxu0 0.0
        %741 = vmatpush1.msra.mxu0 0.0
        %742 = vmatprep.subr.mxu0 0.0
        %743 = vmatpush1.msra.mxu0 0.0
        %744 = vmatprep.subr.mxu0 0.0
        %745 = vmatpush1.msra.mxu0 0.0
        %746 = vmatprep.subr.mxu0 0.0
        %747 = vmatpush1.msra.mxu0 0.0
        %748 = vmatprep.subr.mxu0 0.0
        %749 = vmatpush1.msra.mxu0 0.0
        %750 = vmatprep.subr.mxu0 0.0
        %751 = vmatpush1.msra.mxu0 0.0
        %752 = vmatprep.subr.mxu0 0.0
        %753 = vmatpush1.msra.mxu0 0.0
        %754 = vmatprep.subr.mxu0 0.0
        %755 = vmatpush1.msra.mxu0 0.0
        %756 = vmatprep.subr.mxu0 0.0
        %757 = vmatpush1.msra.mxu0 0.0
        %758 = vmatprep.subr.mxu0 0.0
        %759 = vmatpush1.msra.mxu0 0.0
        %760 = vmatprep.subr.mxu0 0.0
        %761 = vmatpush1.msra.mxu0 0.0
        %762 = vmatprep.subr.mxu0 0.0
        %763 = vmatpush1.msra.mxu0 0.0
        %764 = vmatprep.subr.mxu0 0.0
        %765 = vmatpush1.msra.mxu0 0.0
        %766 = vmatprep.subr.mxu0 0.0
        %767 = vmatpush1.msra.mxu0 0.0
        %768 = vmatprep.subr.mxu0 0.0
        %769 = vmatpush1.msra.mxu0 0.0
        %770 = vmatprep.subr.mxu0 0.0
        %771 = vmatpush1.msra.mxu0 0.0
        %772 = vmatprep.subr.mxu0 0.0
        %773 = vmatpush1.msra.mxu0 0.0
        %774 = vmatprep.subr.mxu0 0.0
        %775 = vmatpush1.msra.mxu0 0.0
        %776 = vmatprep.subr.mxu0 0.0
        %777 = vmatpush1.msra.mxu0 0.0
        %778 = vmatprep.subr.mxu0 0.0
        %779 = vmatpush1.msra.mxu0 0.0
        %780 = vmatprep.subr.mxu0 0.0
        %781 = vmatpush1.msra.mxu0 0.0
        %782 = vmatprep.subr.mxu0 0.0
        %783 = vmatpush1.msra.mxu0 0.0
        %784 = vmatprep.subr.mxu0 0.0
        %785 = vmatpush1.msra.mxu0 0.0
        %786 = vmatprep.subr.mxu0 0.0
        %787 = vmatpush1.msra.mxu0 0.0
        %788 = vmatprep.subr.mxu0 0.0
        %789 = vmatpush1.msra.mxu0 0.0
        %790 = vmatprep.subr.mxu0 0.0
        %791 = vmatpush1.msra.mxu0 0.0
        %792 = vmatprep.mubr.f32.mxu0 0.0
        %793 = vmatmul.mubr.f32.gmra.mrb[0].mxu0 %v726
        %v794 = vpop.f32.mrb[0].mxu0
        %v795 = vadd.f32 0.0, %v794
        %v796 = vpop.f32.mrb[0].mxu0
        %797 = vdwg.mxu0
        %v798 = vlaneseq
        %v799 = vshrl.u32 %v798, 7
        %v800 = vsub.s32 0, %v799
        %v801 = vrot.slane %v795, %v800
        %v802 = vsub.f32 %v693, %v801
        %v803 = vsub.f32 %v694, %v801
        %v804 = vsub.f32 %v695, %v801
        %v805 = vsub.f32 %v696, %v801
        %v806 = vsub.f32 %v697, %v801
        %v807 = vsub.f32 %v698, %v801
        %v808 = vsub.f32 %v699, %v801
        %v809 = vsub.f32 %v700, %v801
        %v810 = vmul.f32 %v802, %v802
        %v811 = vmul.f32 %v803, %v803
        %v812 = vmul.f32 %v804, %v804
        %v813 = vmul.f32 %v805, %v805
        %v814 = vmul.f32 %v806, %v806
        %v815 = vmul.f32 %v807, %v807
        %v816 = vmul.f32 %v808, %v808
        %v817 = vmul.f32 %v809, %v809
        %v818 = vsel %vm563, %v810, 0.0
        %v819 = vsel %vm563, %v811, 0.0
        %v820 = vadd.f32 %v818, %v819
        %v821 = vsel %vm563, %v812, 0.0
        %v822 = vadd.f32 %v820, %v821
        %v823 = vsel %vm563, %v813, 0.0
        %v824 = vadd.f32 %v822, %v823
        %v825 = vsel %vm563, %v814, 0.0
        %v826 = vadd.f32 %v824, %v825
        %v827 = vsel %vm563, %v815, 0.0
        %v828 = vadd.f32 %v826, %v827
        %v829 = vsel %vm563, %v816, 0.0
        %v830 = vadd.f32 %v828, %v829
        %v831 = vsel %vm563, %v817, 0.0
        %v832 = vadd.f32 %v830, %v831
        %v833 = vrot.slane %v832, 4
        %v834 = vadd.f32 %v832, %v833
        %v835 = vrot.slane %v834, 2
        %v836 = vadd.f32 %v834, %v835
        %v837 = vrot.slane %v836, 1
        %v838 = vadd.f32 %v836, %v837
        %v839 = vmul.f32 %v838, 0.015625
        %v841 = vsel %vm563, %v839, 0
        %843 = vmatprep.subr.mxu0 0.0
        %844 = vmatpush1.msra.mxu0 %v689
        %845 = vmatprep.subr.mxu0 0.0
        %846 = vmatpush1.msra.mxu0 %v690
        %847 = vmatprep.subr.mxu0 0.0
        %848 = vmatpush1.msra.mxu0 %v691
        %849 = vmatprep.subr.mxu0 0.0
        %850 = vmatpush1.msra.mxu0 %v692
        %851 = vmatprep.subr.mxu0 0.0
        %852 = vmatpush1.msra.mxu0 0.0
        %853 = vmatprep.subr.mxu0 0.0
        %854 = vmatpush1.msra.mxu0 0.0
        %855 = vmatprep.subr.mxu0 0.0
        %856 = vmatpush1.msra.mxu0 0.0
        %857 = vmatprep.subr.mxu0 0.0
        %858 = vmatpush1.msra.mxu0 0.0
        %859 = vmatprep.subr.mxu0 0.0
        %860 = vmatpush1.msra.mxu0 0.0
        %861 = vmatprep.subr.mxu0 0.0
        %862 = vmatpush1.msra.mxu0 0.0
        %863 = vmatprep.subr.mxu0 0.0
        %864 = vmatpush1.msra.mxu0 0.0
        %865 = vmatprep.subr.mxu0 0.0
        %866 = vmatpush1.msra.mxu0 0.0
        %867 = vmatprep.subr.mxu0 0.0
        %868 = vmatpush1.msra.mxu0 0.0
        %869 = vmatprep.subr.mxu0 0.0
        %870 = vmatpush1.msra.mxu0 0.0
        %871 = vmatprep.subr.mxu0 0.0
        %872 = vmatpush1.msra.mxu0 0.0
        %873 = vmatprep.subr.mxu0 0.0
        %874 = vmatpush1.msra.mxu0 0.0
        %875 = vmatprep.subr.mxu0 0.0
        %876 = vmatpush1.msra.mxu0 0.0
        %877 = vmatprep.subr.mxu0 0.0
        %878 = vmatpush1.msra.mxu0 0.0
        %879 = vmatprep.subr.mxu0 0.0
        %880 = vmatpush1.msra.mxu0 0.0
        %881 = vmatprep.subr.mxu0 0.0
        %882 = vmatpush1.msra.mxu0 0.0
        %883 = vmatprep.subr.mxu0 0.0
        %884 = vmatpush1.msra.mxu0 0.0
        %885 = vmatprep.subr.mxu0 0.0
        %886 = vmatpush1.msra.mxu0 0.0
        %887 = vmatprep.subr.mxu0 0.0
        %888 = vmatpush1.msra.mxu0 0.0
        %889 = vmatprep.subr.mxu0 0.0
        %890 = vmatpush1.msra.mxu0 0.0
        %891 = vmatprep.subr.mxu0 0.0
        %892 = vmatpush1.msra.mxu0 0.0
        %893 = vmatprep.subr.mxu0 0.0
        %894 = vmatpush1.msra.mxu0 0.0
        %895 = vmatprep.subr.mxu0 0.0
        %896 = vmatpush1.msra.mxu0 0.0
        %897 = vmatprep.subr.mxu0 0.0
        %898 = vmatpush1.msra.mxu0 0.0
        %899 = vmatprep.subr.mxu0 0.0
        %900 = vmatpush1.msra.mxu0 0.0
        %901 = vmatprep.subr.mxu0 0.0
        %902 = vmatpush1.msra.mxu0 0.0
        %903 = vmatprep.subr.mxu0 0.0
        %904 = vmatpush1.msra.mxu0 0.0
        %905 = vmatprep.subr.mxu0 0.0
        %906 = vmatpush1.msra.mxu0 0.0
        %907 = vmatprep.mubr.f32.mxu0 0.0
        %908 = vmatmul.mubr.f32.gmra.mrb[0].mxu0 %v841
        %v909 = vpop.f32.mrb[0].mxu0
        %v910 = vadd.f32 1e-05, %v909
        %v911 = vpop.f32.mrb[0].mxu0
        %912 = vdwg.mxu0
        %v913 = vrsqrt.pop %v910
        %v914 = vlaneseq
        %v915 = vshrl.u32 %v914, 7
        %v916 = vsub.s32 0, %v915
        %v917 = vrot.slane %v913, %v916
        %v918 = vmul.f32 %v802, %v917
        %v919 = vmul.f32 %v803, %v917
        %v920 = vmul.f32 %v804, %v917
        %v921 = vmul.f32 %v805, %v917
        %v922 = vmul.f32 %v806, %v917
        %v923 = vmul.f32 %v807, %v917
        %v924 = vmul.f32 %v808, %v917
        %v925 = vmul.f32 %v809, %v917
        %v926 = vlaneseq
        %v927 = vshrl.u32 %v926, 7
        %v928 = vsub.s32 0, %v927
        %v929 = vrot.slane %v701, %v928
        %v930 = vmul.f32 %v918, %v929
        %v931 = vmul.f32 %v919, %v929
        %v932 = vmul.f32 %v920, %v929
        %v933 = vmul.f32 %v921, %v929
        %v934 = vmul.f32 %v922, %v929
        %v935 = vmul.f32 %v923, %v929
        %v936 = vmul.f32 %v924, %v929
        %v937 = vmul.f32 %v925, %v929
        %v938 = vlaneseq
        %v939 = vshrl.u32 %v938, 7
        %v940 = vsub.s32 0, %v939
        %v941 = vrot.slane %v702, %v940
        %v942 = vadd.f32 %v930, %v941
        %v943 = vadd.f32 %v931, %v941
        %v944 = vadd.f32 %v932, %v941
        %v945 = vadd.f32 %v933, %v941
        %v946 = vadd.f32 %v934, %v941
        %v947 = vadd.f32 %v935, %v941
        %v948 = vadd.f32 %v936, %v941
        %v949 = vadd.f32 %v937, %v941
        %v950 = vxor.u32 %v942, 2147483648
        %v951 = vxor.u32 %v943, 2147483648
        %v952 = vxor.u32 %v944, 2147483648
        %v953 = vxor.u32 %v945, 2147483648
        %v954 = vxor.u32 %v946, 2147483648
        %v955 = vxor.u32 %v947, 2147483648
        %v956 = vxor.u32 %v948, 2147483648
        %v957 = vxor.u32 %v949, 2147483648
        %v958 = vmul.f32 %v950, 1.442695
        %v959 = vpow.pop %v958
        %v960 = vmul.f32 %v951, 1.442695
        %v961 = vpow.pop %v960
        %v962 = vmul.f32 %v952, 1.442695
        %v963 = vpow.pop %v962
        %v964 = vmul.f32 %v953, 1.442695
        %v965 = vpow.pop %v964
        %v966 = vmul.f32 %v954, 1.442695
        %v967 = vpow.pop %v966
        %v968 = vmul.f32 %v955, 1.442695
        %v969 = vpow.pop %v968
        %v970 = vmul.f32 %v956, 1.442695
        %v971 = vpow.pop %v970
        %v972 = vmul.f32 %v957, 1.442695
        %v973 = vpow.pop %v972
        %v974 = vadd.f32 %v959, 1.0
        %v975 = vadd.f32 %v961, 1.0
        %v976 = vadd.f32 %v963, 1.0
        %v977 = vadd.f32 %v965, 1.0
        %v978 = vadd.f32 %v967, 1.0
        %v979 = vadd.f32 %v969, 1.0
        %v980 = vadd.f32 %v971, 1.0
        %v981 = vadd.f32 %v973, 1.0
        %v982 = vrcp.pop %v974
        %v983 = vmul.f32 1.0, %v982
        %v984 = vrcp.pop %v975
        %v985 = vmul.f32 1.0, %v984
        %v986 = vrcp.pop %v976
        %v987 = vmul.f32 1.0, %v986
        %v988 = vrcp.pop %v977
        %v989 = vmul.f32 1.0, %v988
        %v990 = vrcp.pop %v978
        %v991 = vmul.f32 1.0, %v990
        %v992 = vrcp.pop %v979
        %v993 = vmul.f32 1.0, %v992
        %v994 = vrcp.pop %v980
        %v995 = vmul.f32 1.0, %v994
        %v996 = vrcp.pop %v981
        %v997 = vmul.f32 1.0, %v996
        %v998 = vmul.f32 %v942, %v983
        %v999 = vmul.f32 %v943, %v985
        %v1000 = vmul.f32 %v944, %v987
        %v1001 = vmul.f32 %v945, %v989
        %v1002 = vmul.f32 %v946, %v991
        %v1003 = vmul.f32 %v947, %v993
        %v1004 = vmul.f32 %v948, %v995
        %v1005 = vmul.f32 %v949, %v997
        %1006 = vst.msk [vmem:[#allocation2 + $0x10] sm:$0xff] %vm563, %v998
        %1007 = vst.msk [vmem:[#allocation2 + $0x18] sm:$0xff] %vm563, %v999
        %1008 = vst.msk [vmem:[#allocation2 + $0x20] sm:$0xff] %vm563, %v1000
        %1009 = vst.msk [vmem:[#allocation2 + $0x28] sm:$0xff] %vm563, %v1001
        %1010 = vst.msk [vmem:[#allocation2 + $0x30] sm:$0xff] %vm563, %v1002
        %1011 = vst.msk [vmem:[#allocation2 + $0x38] sm:$0xff] %vm563, %v1003
        %1012 = vst.msk [vmem:[#allocation2 + $0x40] sm:$0xff] %vm563, %v1004
        %1013 = vst.msk [vmem:[#allocation2 + $0x48] sm:$0xff] %vm563, %v1005
        %v1014 = vld [vmem:[#allocation2 + $0x7] sm:$0xff]
        %v1015 = vld [vmem:[#allocation2 + $0xf] sm:$0xff]
        %v1016 = vld [vmem:[#allocation2 + $0x17] sm:$0xff]
        %v1017 = vld [vmem:[#allocation2 + $0x1f] sm:$0xff]
        %v1018 = vld [vmem:[#allocation2 + $0x27] sm:$0xff]
        %v1019 = vld [vmem:[#allocation2 + $0x2f] sm:$0xff]
        %v1020 = vld [vmem:[#allocation2 + $0x37] sm:$0xff]
        %v1021 = vld [vmem:[#allocation2 + $0x3f] sm:$0xff]
        %v1022 = vsel %vm673, %v1014, 0.0
        %v1023 = vsel %vm674, %v1015, 0.0
        %v1024 = vsel %vm675, %v1016, 0.0
        %v1025 = vsel %vm676, %v1017, 0.0
        %v1026 = vsel %vm677, %v1018, 0.0
        %v1027 = vsel %vm678, %v1019, 0.0
        %v1028 = vsel %vm679, %v1020, 0.0
        %v1029 = vsel %vm680, %v1021, 0.0
        %v1030 = vld [vmem:[#allocation2 + $0x8] sm:$0xff]
        %v1031 = vld [vmem:[#allocation2 + $0x10] sm:$0xff]
        %v1032 = vld [vmem:[#allocation2 + $0x18] sm:$0xff]
        %v1033 = vld [vmem:[#allocation2 + $0x20] sm:$0xff]
        %v1034 = vld [vmem:[#allocation2 + $0x28] sm:$0xff]
        %v1035 = vld [vmem:[#allocation2 + $0x30] sm:$0xff]
        %v1036 = vld [vmem:[#allocation2 + $0x38] sm:$0xff]
        %v1037 = vld [vmem:[#allocation2 + $0x40] sm:$0xff]
        %v1038 = vld [vmem:[#allocation2 + $0x9] sm:$0xff]
        %v1039 = vld [vmem:[#allocation2 + $0x11] sm:$0xff]
        %v1040 = vld [vmem:[#allocation2 + $0x19] sm:$0xff]
        %v1041 = vld [vmem:[#allocation2 + $0x21] sm:$0xff]
        %v1042 = vld [vmem:[#allocation2 + $0x29] sm:$0xff]
        %v1043 = vld [vmem:[#allocation2 + $0x31] sm:$0xff]
        %v1044 = vld [vmem:[#allocation2 + $0x39] sm:$0xff]
        %v1045 = vld [vmem:[#allocation2 + $0x41] sm:$0xff]
        %v1046 = vsel %vm681, %v1038, 0.0
        %v1047 = vsel %vm682, %v1039, 0.0
        %v1048 = vsel %vm683, %v1040, 0.0
        %v1049 = vsel %vm684, %v1041, 0.0
        %v1050 = vsel %vm685, %v1042, 0.0
        %v1051 = vsel %vm686, %v1043, 0.0
        %v1052 = vsel %vm687, %v1044, 0.0
        %v1053 = vsel %vm688, %v1045, 0.0
        %v1054 = vld [vmem:[#allocation2 + $0x47] sm:$0xff]
        %v1055 = vsel %vm673, %v1015, 0.0
        %v1056 = vsel %vm674, %v1016, 0.0
        %v1057 = vsel %vm675, %v1017, 0.0
        %v1058 = vsel %vm676, %v1018, 0.0
        %v1059 = vsel %vm677, %v1019, 0.0
        %v1060 = vsel %vm678, %v1020, 0.0
        %v1061 = vsel %vm679, %v1021, 0.0
        %v1062 = vsel %vm680, %v1054, 0.0
        %v1063 = vld [vmem:[#allocation2 + $0x48] sm:$0xff]
        %v1064 = vld [vmem:[#allocation2 + $0x49] sm:$0xff]
        %v1065 = vsel %vm681, %v1039, 0.0
        %v1066 = vsel %vm682, %v1040, 0.0
        %v1067 = vsel %vm683, %v1041, 0.0
        %v1068 = vsel %vm684, %v1042, 0.0
        %v1069 = vsel %vm685, %v1043, 0.0
        %v1070 = vsel %vm686, %v1044, 0.0
        %v1071 = vsel %vm687, %v1045, 0.0
        %v1072 = vsel %vm688, %v1064, 0.0
        %v1073 = vld [vmem:[#allocation2 + $0x4f] sm:$0xff]
        %v1074 = vsel %vm673, %v1016, 0.0
        %v1075 = vsel %vm674, %v1017, 0.0
        %v1076 = vsel %vm675, %v1018, 0.0
        %v1077 = vsel %vm676, %v1019, 0.0
        %v1078 = vsel %vm677, %v1020, 0.0
        %v1079 = vsel %vm678, %v1021, 0.0
        %v1080 = vsel %vm679, %v1054, 0.0
        %v1081 = vsel %vm680, %v1073, 0.0
        %v1082 = vld [vmem:[#allocation2 + $0x50] sm:$0xff]
        %v1083 = vld [vmem:[#allocation2 + $0x51] sm:$0xff]
        %v1084 = vsel %vm681, %v1040, 0.0
        %v1085 = vsel %vm682, %v1041, 0.0
        %v1086 = vsel %vm683, %v1042, 0.0
        %v1087 = vsel %vm684, %v1043, 0.0
        %v1088 = vsel %vm685, %v1044, 0.0
        %v1089 = vsel %vm686, %v1045, 0.0
        %v1090 = vsel %vm687, %v1064, 0.0
        %v1091 = vsel %vm688, %v1083, 0.0
        %1100 = vrot.lane.b32.xlu0 %v1030, 32
        %v1101 = vpop.permute.xlu0 %1100
        %1102 = vrot.lane.b32.xlu0 %v1031, 32
        %v1103 = vpop.permute.xlu0 %1102
        %1104 = vrot.lane.b32.xlu0 %v1032, 32
        %v1105 = vpop.permute.xlu0 %1104
        %1106 = vrot.lane.b32.xlu0 %v1033, 32
        %v1107 = vpop.permute.xlu0 %1106
        %1108 = vrot.lane.b32.xlu0 %v1034, 32
        %v1109 = vpop.permute.xlu0 %1108
        %1110 = vrot.lane.b32.xlu0 %v1035, 32
        %v1111 = vpop.permute.xlu0 %1110
        %1112 = vrot.lane.b32.xlu0 %v1036, 32
        %v1113 = vpop.permute.xlu0 %1112
        %1114 = vrot.lane.b32.xlu0 %v1037, 32
        %v1115 = vpop.permute.xlu0 %1114
        %1132 = vrot.lane.b32.xlu0 %v1046, 64
        %v1133 = vpop.permute.xlu0 %1132
        %1134 = vrot.lane.b32.xlu0 %v1047, 64
        %v1135 = vpop.permute.xlu0 %1134
        %1136 = vrot.lane.b32.xlu0 %v1048, 64
        %v1137 = vpop.permute.xlu0 %1136
        %1138 = vrot.lane.b32.xlu0 %v1049, 64
        %v1139 = vpop.permute.xlu0 %1138
        %1140 = vrot.lane.b32.xlu0 %v1050, 64
        %v1141 = vpop.permute.xlu0 %1140
        %1142 = vrot.lane.b32.xlu0 %v1051, 64
        %v1143 = vpop.permute.xlu0 %1142
        %1144 = vrot.lane.b32.xlu0 %v1052, 64
        %v1145 = vpop.permute.xlu0 %1144
        %1146 = vrot.lane.b32.xlu0 %v1053, 64
        %v1147 = vpop.permute.xlu0 %1146
        %1164 = vrot.lane.b32.xlu0 %v1055, 96
        %v1165 = vpop.permute.xlu0 %1164
        %1166 = vrot.lane.b32.xlu0 %v1056, 96
        %v1167 = vpop.permute.xlu0 %1166
        %1168 = vrot.lane.b32.xlu0 %v1057, 96
        %v1169 = vpop.permute.xlu0 %1168
        %1170 = vrot.lane.b32.xlu0 %v1058, 96
        %v1171 = vpop.permute.xlu0 %1170
        %1172 = vrot.lane.b32.xlu0 %v1059, 96
        %v1173 = vpop.permute.xlu0 %1172
        %1174 = vrot.lane.b32.xlu0 %v1060, 96
        %v1175 = vpop.permute.xlu0 %1174
        %1176 = vrot.lane.b32.xlu0 %v1061, 96
        %v1177 = vpop.permute.xlu0 %1176
        %1178 = vrot.lane.b32.xlu0 %v1062, 96
        %v1179 = vpop.permute.xlu0 %1178
        %1196 = vrot.lane.b32.xlu0 %v1065, 32
        %v1197 = vpop.permute.xlu0 %1196
        %1198 = vrot.lane.b32.xlu0 %v1066, 32
        %v1199 = vpop.permute.xlu0 %1198
        %1200 = vrot.lane.b32.xlu0 %v1067, 32
        %v1201 = vpop.permute.xlu0 %1200
        %1202 = vrot.lane.b32.xlu0 %v1068, 32
        %v1203 = vpop.permute.xlu0 %1202
        %1204 = vrot.lane.b32.xlu0 %v1069, 32
        %v1205 = vpop.permute.xlu0 %1204
        %1206 = vrot.lane.b32.xlu0 %v1070, 32
        %v1207 = vpop.permute.xlu0 %1206
        %1208 = vrot.lane.b32.xlu0 %v1071, 32
        %v1209 = vpop.permute.xlu0 %1208
        %1210 = vrot.lane.b32.xlu0 %v1072, 32
        %v1211 = vpop.permute.xlu0 %1210
        %1228 = vrot.lane.b32.xlu0 %v1074, 64
        %v1229 = vpop.permute.xlu0 %1228
        %1230 = vrot.lane.b32.xlu0 %v1075, 64
        %v1231 = vpop.permute.xlu0 %1230
        %1232 = vrot.lane.b32.xlu0 %v1076, 64
        %v1233 = vpop.permute.xlu0 %1232
        %1234 = vrot.lane.b32.xlu0 %v1077, 64
        %v1235 = vpop.permute.xlu0 %1234
        %1236 = vrot.lane.b32.xlu0 %v1078, 64
        %v1237 = vpop.permute.xlu0 %1236
        %1238 = vrot.lane.b32.xlu0 %v1079, 64
        %v1239 = vpop.permute.xlu0 %1238
        %1240 = vrot.lane.b32.xlu0 %v1080, 64
        %v1241 = vpop.permute.xlu0 %1240
        %1242 = vrot.lane.b32.xlu0 %v1081, 64
        %v1243 = vpop.permute.xlu0 %1242
        %1254 = vrot.lane.b32.xlu0 %v1032, 96
        %v1255 = vpop.permute.xlu0 %1254
        %1256 = vrot.lane.b32.xlu0 %v1033, 96
        %v1257 = vpop.permute.xlu0 %1256
        %1258 = vrot.lane.b32.xlu0 %v1034, 96
        %v1259 = vpop.permute.xlu0 %1258
        %1260 = vrot.lane.b32.xlu0 %v1035, 96
        %v1261 = vpop.permute.xlu0 %1260
        %1262 = vrot.lane.b32.xlu0 %v1036, 96
        %v1263 = vpop.permute.xlu0 %1262
        %1264 = vrot.lane.b32.xlu0 %v1037, 96
        %v1265 = vpop.permute.xlu0 %1264
        %1266 = vrot.lane.b32.xlu0 %v1063, 96
        %v1267 = vpop.permute.xlu0 %1266
        %1268 = vrot.lane.b32.xlu0 %v1082, 96
        %v1269 = vpop.permute.xlu0 %1268
        %v1278 = vsel %vm563, %v1022, %v1101
        %v1279 = vsel %vm563, %v1023, %v1103
        %v1280 = vsel %vm563, %v1024, %v1105
        %v1281 = vsel %vm563, %v1025, %v1107
        %v1282 = vsel %vm563, %v1026, %v1109
        %v1283 = vsel %vm563, %v1027, %v1111
        %v1284 = vsel %vm563, %v1028, %v1113
        %v1285 = vsel %vm563, %v1029, %v1115
        %vm1286 = vcmask 523264
        %v1287 = vsel %vm1286, %v1278, %v1133
        %v1288 = vsel %vm1286, %v1279, %v1135
        %v1289 = vsel %vm1286, %v1280, %v1137
        %v1290 = vsel %vm1286, %v1281, %v1139
        %v1291 = vsel %vm1286, %v1282, %v1141
        %v1292 = vsel %vm1286, %v1283, %v1143
        %v1293 = vsel %vm1286, %v1284, %v1145
        %v1294 = vsel %vm1286, %v1285, %v1147
        %vm1295 = vcmask 785408
        %v1296 = vsel %vm1295, %v1287, %v1165
        %v1297 = vsel %vm1295, %v1288, %v1167
        %v1298 = vsel %vm1295, %v1289, %v1169
        %v1299 = vsel %vm1295, %v1290, %v1171
        %v1300 = vsel %vm1295, %v1291, %v1173
        %v1301 = vsel %vm1295, %v1292, %v1175
        %v1302 = vsel %vm1295, %v1293, %v1177
        %v1303 = vsel %vm1295, %v1294, %v1179
        %v1304 = vsel %vm563, %v1031, %v1197
        %v1305 = vsel %vm563, %v1032, %v1199
        %v1306 = vsel %vm563, %v1033, %v1201
        %v1307 = vsel %vm563, %v1034, %v1203
        %v1308 = vsel %vm563, %v1035, %v1205
        %v1309 = vsel %vm563, %v1036, %v1207
        %v1310 = vsel %vm563, %v1037, %v1209
        %v1311 = vsel %vm563, %v1063, %v1211
        %v1312 = vsel %vm1286, %v1304, %v1229
        %v1313 = vsel %vm1286, %v1305, %v1231
        %v1314 = vsel %vm1286, %v1306, %v1233
        %v1315 = vsel %vm1286, %v1307, %v1235
        %v1316 = vsel %vm1286, %v1308, %v1237
        %v1317 = vsel %vm1286, %v1309, %v1239
        %v1318 = vsel %vm1286, %v1310, %v1241
        %v1319 = vsel %vm1286, %v1311, %v1243
        %v1320 = vsel %vm1295, %v1312, %v1255
        %v1321 = vsel %vm1295, %v1313, %v1257
        %v1322 = vsel %vm1295, %v1314, %v1259
        %v1323 = vsel %vm1295, %v1315, %v1261
        %v1324 = vsel %vm1295, %v1316, %v1263
        %v1325 = vsel %vm1295, %v1317, %v1265
        %v1326 = vsel %vm1295, %v1318, %v1267
        %v1327 = vsel %vm1295, %v1319, %v1269
        %v1328 = vpack.c.bf16 %v1297, %v1296
        %v1329 = vpack.c.bf16 %v1321, %v1320
        %v1330 = vpack.c.bf16 %v1085, %v1084
        %v1331 = vpack.c.bf16 %v1299, %v1298
        %v1332 = vpack.c.bf16 %v1323, %v1322
        %v1333 = vpack.c.bf16 %v1087, %v1086
        %v1334 = vpack.c.bf16 %v1301, %v1300
        %v1335 = vpack.c.bf16 %v1325, %v1324
        %v1336 = vpack.c.bf16 %v1089, %v1088
        %v1337 = vpack.c.bf16 %v1303, %v1302
        %v1338 = vpack.c.bf16 %v1327, %v1326
        %v1339 = vpack.c.bf16 %v1091, %v1090
        %v1340 = vld [vmem:[#allocation12] sm:$0xf]
        %v1341 = vld [vmem:[#allocation12 + $0x4] sm:$0xf]
        %v1342 = vld [vmem:[#allocation12 + $0x8] sm:$0xf]
        %v1343 = vld [vmem:[#allocation12 + $0xc] sm:$0xf]
        %v1344 = vld [vmem:[#allocation12 + $0x10] sm:$0xf]
        %v1345 = vld [vmem:[#allocation12 + $0x14] sm:$0xf]
        %v1346 = vld [vmem:[#allocation12 + $0x18] sm:$0xf]
        %v1347 = vld [vmem:[#allocation12 + $0x1c] sm:$0xf]
        %v1348 = vld [vmem:[#allocation12 + $0x20] sm:$0xf]
        %v1349 = vld [vmem:[#allocation12 + $0x24] sm:$0xf]
        %v1350 = vld [vmem:[#allocation12 + $0x28] sm:$0xf]
        %v1351 = vld [vmem:[#allocation12 + $0x2c] sm:$0xf]
        %v1352 = vld [vmem:[#allocation12 + $0x30] sm:$0xf]
        %v1353 = vld [vmem:[#allocation12 + $0x34] sm:$0xf]
        %v1354 = vld [vmem:[#allocation12 + $0x38] sm:$0xf]
        %v1355 = vld [vmem:[#allocation12 + $0x3c] sm:$0xf]
        %v1356 = vld [vmem:[#allocation12 + $0x40] sm:$0xf]
        %v1357 = vld [vmem:[#allocation12 + $0x44] sm:$0xf]
        %v1358 = vld [vmem:[#allocation12 + $0x48] sm:$0xf]
        %v1359 = vld [vmem:[#allocation12 + $0x4c] sm:$0xf]
        %v1360 = vld [vmem:[#allocation12 + $0x50] sm:$0xf]
        %v1361 = vld [vmem:[#allocation12 + $0x54] sm:$0xf]
        %v1362 = vld [vmem:[#allocation12 + $0x58] sm:$0xf]
        %v1363 = vld [vmem:[#allocation12 + $0x5c] sm:$0xf]
        %v1364 = vld [vmem:[#allocation12 + $0x60] sm:$0xf]
        %v1365 = vld [vmem:[#allocation12 + $0x64] sm:$0xf]
        %v1366 = vld [vmem:[#allocation12 + $0x68] sm:$0xf]
        %v1367 = vld [vmem:[#allocation12 + $0x6c] sm:$0xf]
        %v1368 = vld [vmem:[#allocation12 + $0x70] sm:$0xf]
        %v1369 = vld [vmem:[#allocation12 + $0x74] sm:$0xf]
        %v1370 = vld [vmem:[#allocation12 + $0x78] sm:$0xf]
        %v1371 = vld [vmem:[#allocation12 + $0x7c] sm:$0xf]
        %v1372 = vld [vmem:[#allocation12 + $0x80] sm:$0xf]
        %v1373 = vld [vmem:[#allocation12 + $0x84] sm:$0xf]
        %v1374 = vld [vmem:[#allocation12 + $0x88] sm:$0xf]
        %v1375 = vld [vmem:[#allocation12 + $0x8c] sm:$0xf]
        %v1376 = vld [vmem:[#allocation14] sm:$0x1]
        %v1377 = vlaneseq
        %v1378 = vshrl.u32 %v1377, 7
        %v1379 = vsub.s32 0, %v1378
        %v1380 = vrot.slane %v1376, %v1379
        %v1417 = vunpack.c.l.b16 %v1340
        %v1418 = vunpack.c.l.b16 %v1341
        %v1419 = vunpack.c.l.b16 %v1342
        %v1420 = vunpack.c.l.b16 %v1343
        %v1421 = vunpack.c.l.b16 %v1344
        %v1422 = vunpack.c.l.b16 %v1345
        %v1423 = vunpack.c.l.b16 %v1346
        %v1424 = vunpack.c.l.b16 %v1347
        %v1425 = vunpack.c.l.b16 %v1348
        %v1426 = vunpack.c.l.b16 %v1349
        %v1427 = vunpack.c.l.b16 %v1350
        %v1428 = vunpack.c.l.b16 %v1351
        %v1429 = vunpack.c.l.b16 %v1352
        %v1430 = vunpack.c.l.b16 %v1353
        %v1431 = vunpack.c.l.b16 %v1354
        %v1432 = vunpack.c.l.b16 %v1355
        %v1433 = vunpack.c.l.b16 %v1356
        %v1434 = vunpack.c.l.b16 %v1357
        %v1435 = vunpack.c.l.b16 %v1358
        %v1436 = vunpack.c.l.b16 %v1359
        %v1437 = vunpack.c.l.b16 %v1360
        %v1438 = vunpack.c.l.b16 %v1361
        %v1439 = vunpack.c.l.b16 %v1362
        %v1440 = vunpack.c.l.b16 %v1363
        %v1441 = vunpack.c.l.b16 %v1364
        %v1442 = vunpack.c.l.b16 %v1365
        %v1443 = vunpack.c.l.b16 %v1366
        %v1444 = vunpack.c.l.b16 %v1367
        %v1445 = vunpack.c.l.b16 %v1368
        %v1446 = vunpack.c.l.b16 %v1369
        %v1447 = vunpack.c.l.b16 %v1370
        %v1448 = vunpack.c.l.b16 %v1371
        %v1449 = vunpack.c.l.b16 %v1372
        %v1450 = vunpack.c.l.b16 %v1373
        %v1451 = vunpack.c.l.b16 %v1374
        %v1452 = vunpack.c.l.b16 %v1375
        %v1453 = vpack.c.b16 %v1418, %v1417
        %v1454 = vpack.c.b16 %v1420, %v1419
        %v1455 = vpack.c.b16 %v1422, %v1421
        %v1456 = vpack.c.b16 %v1424, %v1423
        %v1457 = vpack.c.b16 %v1426, %v1425
        %v1458 = vpack.c.b16 %v1428, %v1427
        %v1459 = vpack.c.b16 %v1430, %v1429
        %v1460 = vpack.c.b16 %v1432, %v1431
        %v1461 = vpack.c.b16 %v1434, %v1433
        %v1462 = vpack.c.b16 %v1436, %v1435
        %v1463 = vpack.c.b16 %v1438, %v1437
        %v1464 = vpack.c.b16 %v1440, %v1439
        %v1465 = vpack.c.b16 %v1442, %v1441
        %v1466 = vpack.c.b16 %v1444, %v1443
        %v1467 = vpack.c.b16 %v1446, %v1445
        %v1468 = vpack.c.b16 %v1448, %v1447
        %v1469 = vpack.c.b16 %v1450, %v1449
        %v1470 = vpack.c.b16 %v1452, %v1451
        %v1490 = vsel %vm563, %v1330, 0
        %v1493 = vsel %vm563, %v1333, 0
        %v1496 = vsel %vm563, %v1336, 0
        %v1499 = vsel %vm563, %v1339, 0
        %1501 = vmatprep.subr.bf16.mxu0 0
        %1502 = vmatpush1.bf16.msra.mxu0 %v1453
        %1503 = vmatprep.subr.bf16.mxu0 0
        %1504 = vmatpush1.bf16.msra.mxu0 %v1454
        %1505 = vmatprep.subr.bf16.mxu0 0
        %1506 = vmatpush1.bf16.msra.mxu0 %v1455
        %1507 = vmatprep.subr.bf16.mxu0 0
        %1508 = vmatpush1.bf16.msra.mxu0 %v1456
        %1509 = vmatprep.subr.bf16.mxu0 0
        %1510 = vmatpush1.bf16.msra.mxu0 %v1457
        %1511 = vmatprep.subr.bf16.mxu0 0
        %1512 = vmatpush1.bf16.msra.mxu0 %v1458
        %1513 = vmatprep.subr.bf16.mxu0 0
        %1514 = vmatpush1.bf16.msra.mxu0 %v1459
        %1515 = vmatprep.subr.bf16.mxu0 0
        %1516 = vmatpush1.bf16.msra.mxu0 %v1460
        %1517 = vmatprep.subr.bf16.mxu0 0
        %1518 = vmatpush1.bf16.msra.mxu0 %v1461
        %1519 = vmatprep.subr.bf16.mxu0 0
        %1520 = vmatpush1.bf16.msra.mxu0 %v1462
        %1521 = vmatprep.subr.bf16.mxu0 0
        %1522 = vmatpush1.bf16.msra.mxu0 %v1463
        %1523 = vmatprep.subr.bf16.mxu0 0
        %1524 = vmatpush1.bf16.msra.mxu0 %v1464
        %1525 = vmatprep.subr.bf16.mxu0 0
        %1526 = vmatpush1.bf16.msra.mxu0 %v1465
        %1527 = vmatprep.subr.bf16.mxu0 0
        %1528 = vmatpush1.bf16.msra.mxu0 %v1466
        %1529 = vmatprep.subr.bf16.mxu0 0
        %1530 = vmatpush1.bf16.msra.mxu0 %v1467
        %1531 = vmatprep.subr.bf16.mxu0 0
        %1532 = vmatpush1.bf16.msra.mxu0 %v1468
        %1533 = vmatprep.mubr.bf16.mxu0 %v1329
        %1534 = vmatmul.mubr.bf16.gmra.mrb[0].mxu0 %v1328
        %v1535 = vpop.f32.mrb[0].mxu0
        %v1536 = vadd.f32 %v1380, %v1535
        %v1537 = vpop.f32.mrb[0].mxu0
        %v1538 = vpop.f32.mrb[0].mxu0
        %v1539 = vadd.f32 %v1380, %v1538
        %v1540 = vpop.f32.mrb[0].mxu0
        %1541 = vmatprep.mubr.bf16.mxu0 %v1332
        %1542 = vmatmul.mubr.bf16.gmra.mrb[0].mxu0 %v1331
        %v1543 = vpop.f32.mrb[0].mxu0
        %v1544 = vadd.f32 %v1380, %v1543
        %v1545 = vpop.f32.mrb[0].mxu0
        %v1546 = vpop.f32.mrb[0].mxu0
        %v1547 = vadd.f32 %v1380, %v1546
        %v1548 = vpop.f32.mrb[0].mxu0
        %1549 = vmatprep.mubr.bf16.mxu0 %v1335
        %1550 = vmatmul.mubr.bf16.gmra.mrb[0].mxu0 %v1334
        %v1551 = vpop.f32.mrb[0].mxu0
        %v1552 = vadd.f32 %v1380, %v1551
        %v1553 = vpop.f32.mrb[0].mxu0
        %v1554 = vpop.f32.mrb[0].mxu0
        %v1555 = vadd.f32 %v1380, %v1554
        %v1556 = vpop.f32.mrb[0].mxu0
        %1557 = vmatprep.mubr.bf16.mxu0 %v1338
        %1558 = vmatmul.mubr.bf16.gmra.mrb[0].mxu0 %v1337
        %v1559 = vpop.f32.mrb[0].mxu0
        %v1560 = vadd.f32 %v1380, %v1559
        %v1561 = vpop.f32.mrb[0].mxu0
        %v1562 = vpop.f32.mrb[0].mxu0
        %v1563 = vadd.f32 %v1380, %v1562
        %v1564 = vpop.f32.mrb[0].mxu0
        %1565 = vdwg.mxu0
        %1566 = vmatprep.subr.bf16.mxu0 0
        %1567 = vmatpush1.bf16.msra.mxu0 %v1469
        %1568 = vmatprep.subr.bf16.mxu0 0
        %1569 = vmatpush1.bf16.msra.mxu0 %v1470
        %1570 = vmatprep.subr.bf16.mxu0 0
        %1571 = vmatpush1.bf16.msra.mxu0 0
        %1572 = vmatprep.subr.bf16.mxu0 0
        %1573 = vmatpush1.bf16.msra.mxu0 0
        %1574 = vmatprep.subr.bf16.mxu0 0
        %1575 = vmatpush1.bf16.msra.mxu0 0
        %1576 = vmatprep.subr.bf16.mxu0 0
        %1577 = vmatpush1.bf16.msra.mxu0 0
        %1578 = vmatprep.subr.bf16.mxu0 0
        %1579 = vmatpush1.bf16.msra.mxu0 0
        %1580 = vmatprep.subr.bf16.mxu0 0
        %1581 = vmatpush1.bf16.msra.mxu0 0
        %1582 = vmatprep.subr.bf16.mxu0 0
        %1583 = vmatpush1.bf16.msra.mxu0 0
        %1584 = vmatprep.subr.bf16.mxu0 0
        %1585 = vmatpush1.bf16.msra.mxu0 0
        %1586 = vmatprep.subr.bf16.mxu0 0
        %1587 = vmatpush1.bf16.msra.mxu0 0
        %1588 = vmatprep.subr.bf16.mxu0 0
        %1589 = vmatpush1.bf16.msra.mxu0 0
        %1590 = vmatprep.subr.bf16.mxu0 0
        %1591 = vmatpush1.bf16.msra.mxu0 0
        %1592 = vmatprep.subr.bf16.mxu0 0
        %1593 = vmatpush1.bf16.msra.mxu0 0
        %1594 = vmatprep.subr.bf16.mxu0 0
        %1595 = vmatpush1.bf16.msra.mxu0 0
        %1596 = vmatprep.subr.bf16.mxu0 0
        %1597 = vmatpush1.bf16.msra.mxu0 0
        %1598 = vmatprep.mubr.bf16.mxu0 0
        %1599 = vmatmul.mubr.bf16.gmra.mrb[0].mxu0 %v1490
        %v1600 = vpop.f32.mrb[0].mxu0
        %v1601 = vadd.f32 %v1536, %v1600
        %v1602 = vpop.f32.mrb[0].mxu0
        %v1603 = vpop.f32.mrb[0].mxu0
        %v1604 = vadd.f32 %v1539, %v1603
        %v1605 = vpop.f32.mrb[0].mxu0
        %1606 = vmatprep.mubr.bf16.mxu0 0
        %1607 = vmatmul.mubr.bf16.gmra.mrb[0].mxu0 %v1493
        %v1608 = vpop.f32.mrb[0].mxu0
        %v1609 = vadd.f32 %v1544, %v1608
        %v1610 = vpop.f32.mrb[0].mxu0
        %v1611 = vpop.f32.mrb[0].mxu0
        %v1612 = vadd.f32 %v1547, %v1611
        %v1613 = vpop.f32.mrb[0].mxu0
        %1614 = vmatprep.mubr.bf16.mxu0 0
        %1615 = vmatmul.mubr.bf16.gmra.mrb[0].mxu0 %v1496
        %v1616 = vpop.f32.mrb[0].mxu0
        %v1617 = vadd.f32 %v1552, %v1616
        %v1618 = vpop.f32.mrb[0].mxu0
        %v1619 = vpop.f32.mrb[0].mxu0
        %v1620 = vadd.f32 %v1555, %v1619
        %v1621 = vpop.f32.mrb[0].mxu0
        %1622 = vmatprep.mubr.bf16.mxu0 0
        %1623 = vmatmul.mubr.bf16.gmra.mrb[0].mxu0 %v1499
        %v1624 = vpop.f32.mrb[0].mxu0
        %v1625 = vadd.f32 %v1560, %v1624
        %v1626 = vpop.f32.mrb[0].mxu0
        %v1627 = vpop.f32.mrb[0].mxu0
        %v1628 = vadd.f32 %v1563, %v1627
        %v1629 = vpop.f32.mrb[0].mxu0
        %1630 = vdwg.mxu0
        %v1631 = vld [vmem:[%s482] sm:$0x1]
        %v1632 = vlaneseq
        %v1633 = vshrl.u32 %v1632, 7
        %v1634 = vsub.s32 0, %v1633
        %v1635 = vrot.slane %v1631, %v1634
        %v1636 = vadd.f32 %v1601, %v1635
        %v1637 = vadd.f32 %v1604, %v1635
        %v1638 = vadd.f32 %v1609, %v1635
        %v1639 = vadd.f32 %v1612, %v1635
        %v1640 = vadd.f32 %v1617, %v1635
        %v1641 = vadd.f32 %v1620, %v1635
        %v1642 = vadd.f32 %v1625, %v1635
        %v1643 = vadd.f32 %v1628, %v1635
        %v1644 = vld [vmem:[#allocation9 + $0x1] sm:$0x1]
        %v1645 = vld [vmem:[#allocation11 + $0x1] sm:$0x1]
        %v1646 = vsel %vm563, %v1636, 0.0
        %v1647 = vsel %vm563, %v1637, 0.0
        %v1648 = vadd.f32 %v1646, %v1647
        %v1649 = vsel %vm563, %v1638, 0.0
        %v1650 = vadd.f32 %v1648, %v1649
        %v1651 = vsel %vm563, %v1639, 0.0
        %v1652 = vadd.f32 %v1650, %v1651
        %v1653 = vsel %vm563, %v1640, 0.0
        %v1654 = vadd.f32 %v1652, %v1653
        %v1655 = vsel %vm563, %v1641, 0.0
        %v1656 = vadd.f32 %v1654, %v1655
        %v1657 = vsel %vm563, %v1642, 0.0
        %v1658 = vadd.f32 %v1656, %v1657
        %v1659 = vsel %vm563, %v1643, 0.0
        %v1660 = vadd.f32 %v1658, %v1659
        %v1661 = vrot.slane %v1660, 4
        %v1662 = vadd.f32 %v1660, %v1661
        %v1663 = vrot.slane %v1662, 2
        %v1664 = vadd.f32 %v1662, %v1663
        %v1665 = vrot.slane %v1664, 1
        %v1666 = vadd.f32 %v1664, %v1665
        %v1667 = vmul.f32 %v1666, 0.015625
        %v1669 = vsel %vm563, %v1667, 0
        %1671 = vmatprep.subr.mxu0 0.0
        %1672 = vmatpush1.msra.mxu0 %v689
        %1673 = vmatprep.subr.mxu0 0.0
        %1674 = vmatpush1.msra.mxu0 %v690
        %1675 = vmatprep.subr.mxu0 0.0
        %1676 = vmatpush1.msra.mxu0 %v691
        %1677 = vmatprep.subr.mxu0 0.0
        %1678 = vmatpush1.msra.mxu0 %v692
        %1679 = vmatprep.subr.mxu0 0.0
        %1680 = vmatpush1.msra.mxu0 0.0
        %1681 = vmatprep.subr.mxu0 0.0
        %1682 = vmatpush1.msra.mxu0 0.0
        %1683 = vmatprep.subr.mxu0 0.0
        %1684 = vmatpush1.msra.mxu0 0.0
        %1685 = vmatprep.subr.mxu0 0.0
        %1686 = vmatpush1.msra.mxu0 0.0
        %1687 = vmatprep.subr.mxu0 0.0
        %1688 = vmatpush1.msra.mxu0 0.0
        %1689 = vmatprep.subr.mxu0 0.0
        %1690 = vmatpush1.msra.mxu0 0.0
        %1691 = vmatprep.subr.mxu0 0.0
        %1692 = vmatpush1.msra.mxu0 0.0
        %1693 = vmatprep.subr.mxu0 0.0
        %1694 = vmatpush1.msra.mxu0 0.0
        %1695 = vmatprep.subr.mxu0 0.0
        %1696 = vmatpush1.msra.mxu0 0.0
        %1697 = vmatprep.subr.mxu0 0.0
        %1698 = vmatpush1.msra.mxu0 0.0
        %1699 = vmatprep.subr.mxu0 0.0
        %1700 = vmatpush1.msra.mxu0 0.0
        %1701 = vmatprep.subr.mxu0 0.0
        %1702 = vmatpush1.msra.mxu0 0.0
        %1703 = vmatprep.subr.mxu0 0.0
        %1704 = vmatpush1.msra.mxu0 0.0
        %1705 = vmatprep.subr.mxu0 0.0
        %1706 = vmatpush1.msra.mxu0 0.0
        %1707 = vmatprep.subr.mxu0 0.0
        %1708 = vmatpush1.msra.mxu0 0.0
        %1709 = vmatprep.subr.mxu0 0.0
        %1710 = vmatpush1.msra.mxu0 0.0
        %1711 = vmatprep.subr.mxu0 0.0
        %1712 = vmatpush1.msra.mxu0 0.0
        %1713 = vmatprep.subr.mxu0 0.0
        %1714 = vmatpush1.msra.mxu0 0.0
        %1715 = vmatprep.subr.mxu0 0.0
        %1716 = vmatpush1.msra.mxu0 0.0
        %1717 = vmatprep.subr.mxu0 0.0
        %1718 = vmatpush1.msra.mxu0 0.0
        %1719 = vmatprep.subr.mxu0 0.0
        %1720 = vmatpush1.msra.mxu0 0.0
        %1721 = vmatprep.subr.mxu0 0.0
        %1722 = vmatpush1.msra.mxu0 0.0
        %1723 = vmatprep.subr.mxu0 0.0
        %1724 = vmatpush1.msra.mxu0 0.0
        %1725 = vmatprep.subr.mxu0 0.0
        %1726 = vmatpush1.msra.mxu0 0.0
        %1727 = vmatprep.subr.mxu0 0.0
        %1728 = vmatpush1.msra.mxu0 0.0
        %1729 = vmatprep.subr.mxu0 0.0
        %1730 = vmatpush1.msra.mxu0 0.0
        %1731 = vmatprep.subr.mxu0 0.0
        %1732 = vmatpush1.msra.mxu0 0.0
        %1733 = vmatprep.subr.mxu0 0.0
        %1734 = vmatpush1.msra.mxu0 0.0
        %1735 = vmatprep.mubr.f32.mxu0 0.0
        %1736 = vmatmul.mubr.f32.gmra.mrb[0].mxu0 %v1669
        %v1737 = vpop.f32.mrb[0].mxu0
        %v1738 = vadd.f32 0.0, %v1737
        %v1739 = vpop.f32.mrb[0].mxu0
        %1740 = vdwg.mxu0
        %v1741 = vlaneseq
        %v1742 = vshrl.u32 %v1741, 7
        %v1743 = vsub.s32 0, %v1742
        %v1744 = vrot.slane %v1738, %v1743
        %v1745 = vsub.f32 %v1636, %v1744
        %v1746 = vsub.f32 %v1637, %v1744
        %v1747 = vsub.f32 %v1638, %v1744
        %v1748 = vsub.f32 %v1639, %v1744
        %v1749 = vsub.f32 %v1640, %v1744
        %v1750 = vsub.f32 %v1641, %v1744
        %v1751 = vsub.f32 %v1642, %v1744
        %v1752 = vsub.f32 %v1643, %v1744
        %v1753 = vmul.f32 %v1745, %v1745
        %v1754 = vmul.f32 %v1746, %v1746
        %v1755 = vmul.f32 %v1747, %v1747
        %v1756 = vmul.f32 %v1748, %v1748
        %v1757 = vmul.f32 %v1749, %v1749
        %v1758 = vmul.f32 %v1750, %v1750
        %v1759 = vmul.f32 %v1751, %v1751
        %v1760 = vmul.f32 %v1752, %v1752
        %v1761 = vsel %vm563, %v1753, 0.0
        %v1762 = vsel %vm563, %v1754, 0.0
        %v1763 = vadd.f32 %v1761, %v1762
        %v1764 = vsel %vm563, %v1755, 0.0
        %v1765 = vadd.f32 %v1763, %v1764
        %v1766 = vsel %vm563, %v1756, 0.0
        %v1767 = vadd.f32 %v1765, %v1766
        %v1768 = vsel %vm563, %v1757, 0.0
        %v1769 = vadd.f32 %v1767, %v1768
        %v1770 = vsel %vm563, %v1758, 0.0
        %v1771 = vadd.f32 %v1769, %v1770
        %v1772 = vsel %vm563, %v1759, 0.0
        %v1773 = vadd.f32 %v1771, %v1772
        %v1774 = vsel %vm563, %v1760, 0.0
        %v1775 = vadd.f32 %v1773, %v1774
        %v1776 = vrot.slane %v1775, 4
        %v1777 = vadd.f32 %v1775, %v1776
        %v1778 = vrot.slane %v1777, 2
        %v1779 = vadd.f32 %v1777, %v1778
        %v1780 = vrot.slane %v1779, 1
        %v1781 = vadd.f32 %v1779, %v1780
        %v1782 = vmul.f32 %v1781, 0.015625
        %v1784 = vsel %vm563, %v1782, 0
        %1786 = vmatprep.subr.mxu0 0.0
        %1787 = vmatpush1.msra.mxu0 %v689
        %1788 = vmatprep.subr.mxu0 0.0
        %1789 = vmatpush1.msra.mxu0 %v690
        %1790 = vmatprep.subr.mxu0 0.0
        %1791 = vmatpush1.msra.mxu0 %v691
        %1792 = vmatprep.subr.mxu0 0.0
        %1793 = vmatpush1.msra.mxu0 %v692
        %1794 = vmatprep.subr.mxu0 0.0
        %1795 = vmatpush1.msra.mxu0 0.0
        %1796 = vmatprep.subr.mxu0 0.0
        %1797 = vmatpush1.msra.mxu0 0.0
        %1798 = vmatprep.subr.mxu0 0.0
        %1799 = vmatpush1.msra.mxu0 0.0
        %1800 = vmatprep.subr.mxu0 0.0
        %1801 = vmatpush1.msra.mxu0 0.0
        %1802 = vmatprep.subr.mxu0 0.0
        %1803 = vmatpush1.msra.mxu0 0.0
        %1804 = vmatprep.subr.mxu0 0.0
        %1805 = vmatpush1.msra.mxu0 0.0
        %1806 = vmatprep.subr.mxu0 0.0
        %1807 = vmatpush1.msra.mxu0 0.0
        %1808 = vmatprep.subr.mxu0 0.0
        %1809 = vmatpush1.msra.mxu0 0.0
        %1810 = vmatprep.subr.mxu0 0.0
        %1811 = vmatpush1.msra.mxu0 0.0
        %1812 = vmatprep.subr.mxu0 0.0
        %1813 = vmatpush1.msra.mxu0 0.0
        %1814 = vmatprep.subr.mxu0 0.0
        %1815 = vmatpush1.msra.mxu0 0.0
        %1816 = vmatprep.subr.mxu0 0.0
        %1817 = vmatpush1.msra.mxu0 0.0
        %1818 = vmatprep.subr.mxu0 0.0
        %1819 = vmatpush1.msra.mxu0 0.0
        %1820 = vmatprep.subr.mxu0 0.0
        %1821 = vmatpush1.msra.mxu0 0.0
        %1822 = vmatprep.subr.mxu0 0.0
        %1823 = vmatpush1.msra.mxu0 0.0
        %1824 = vmatprep.subr.mxu0 0.0
        %1825 = vmatpush1.msra.mxu0 0.0
        %1826 = vmatprep.subr.mxu0 0.0
        %1827 = vmatpush1.msra.mxu0 0.0
        %1828 = vmatprep.subr.mxu0 0.0
        %1829 = vmatpush1.msra.mxu0 0.0
        %1830 = vmatprep.subr.mxu0 0.0
        %1831 = vmatpush1.msra.mxu0 0.0
        %1832 = vmatprep.subr.mxu0 0.0
        %1833 = vmatpush1.msra.mxu0 0.0
        %1834 = vmatprep.subr.mxu0 0.0
        %1835 = vmatpush1.msra.mxu0 0.0
        %1836 = vmatprep.subr.mxu0 0.0
        %1837 = vmatpush1.msra.mxu0 0.0
        %1838 = vmatprep.subr.mxu0 0.0
        %1839 = vmatpush1.msra.mxu0 0.0
        %1840 = vmatprep.subr.mxu0 0.0
        %1841 = vmatpush1.msra.mxu0 0.0
        %1842 = vmatprep.subr.mxu0 0.0
        %1843 = vmatpush1.msra.mxu0 0.0
        %1844 = vmatprep.subr.mxu0 0.0
        %1845 = vmatpush1.msra.mxu0 0.0
        %1846 = vmatprep.subr.mxu0 0.0
        %1847 = vmatpush1.msra.mxu0 0.0
        %1848 = vmatprep.subr.mxu0 0.0
        %1849 = vmatpush1.msra.mxu0 0.0
        %1850 = vmatprep.mubr.f32.mxu0 0.0
        %1851 = vmatmul.mubr.f32.gmra.mrb[0].mxu0 %v1784
        %v1852 = vpop.f32.mrb[0].mxu0
        %v1853 = vadd.f32 1e-05, %v1852
        %v1854 = vpop.f32.mrb[0].mxu0
        %1855 = vdwg.mxu0
        %v1856 = vrsqrt.pop %v1853
        %v1857 = vlaneseq
        %v1858 = vshrl.u32 %v1857, 7
        %v1859 = vsub.s32 0, %v1858
        %v1860 = vrot.slane %v1856, %v1859
        %v1861 = vmul.f32 %v1745, %v1860
        %v1862 = vmul.f32 %v1746, %v1860
        %v1863 = vmul.f32 %v1747, %v1860
        %v1864 = vmul.f32 %v1748, %v1860
        %v1865 = vmul.f32 %v1749, %v1860
        %v1866 = vmul.f32 %v1750, %v1860
        %v1867 = vmul.f32 %v1751, %v1860
        %v1868 = vmul.f32 %v1752, %v1860
        %v1869 = vlaneseq
        %v1870 = vshrl.u32 %v1869, 7
        %v1871 = vsub.s32 0, %v1870
        %v1872 = vrot.slane %v1644, %v1871
        %v1873 = vmul.f32 %v1861, %v1872
        %v1874 = vmul.f32 %v1862, %v1872
        %v1875 = vmul.f32 %v1863, %v1872
        %v1876 = vmul.f32 %v1864, %v1872
        %v1877 = vmul.f32 %v1865, %v1872
        %v1878 = vmul.f32 %v1866, %v1872
        %v1879 = vmul.f32 %v1867, %v1872
        %v1880 = vmul.f32 %v1868, %v1872
        %v1881 = vlaneseq
        %v1882 = vshrl.u32 %v1881, 7
        %v1883 = vsub.s32 0, %v1882
        %v1884 = vrot.slane %v1645, %v1883
        %v1885 = vadd.f32 %v1873, %v1884
        %v1886 = vadd.f32 %v1874, %v1884
        %v1887 = vadd.f32 %v1875, %v1884
        %v1888 = vadd.f32 %v1876, %v1884
        %v1889 = vadd.f32 %v1877, %v1884
        %v1890 = vadd.f32 %v1878, %v1884
        %v1891 = vadd.f32 %v1879, %v1884
        %v1892 = vadd.f32 %v1880, %v1884
        %v1893 = vxor.u32 %v1885, 2147483648
        %v1894 = vxor.u32 %v1886, 2147483648
        %v1895 = vxor.u32 %v1887, 2147483648
        %v1896 = vxor.u32 %v1888, 2147483648
        %v1897 = vxor.u32 %v1889, 2147483648
        %v1898 = vxor.u32 %v1890, 2147483648
        %v1899 = vxor.u32 %v1891, 2147483648
        %v1900 = vxor.u32 %v1892, 2147483648
        %v1901 = vmul.f32 %v1893, 1.442695
        %v1902 = vpow.pop %v1901
        %v1903 = vmul.f32 %v1894, 1.442695
        %v1904 = vpow.pop %v1903
        %v1905 = vmul.f32 %v1895, 1.442695
        %v1906 = vpow.pop %v1905
        %v1907 = vmul.f32 %v1896, 1.442695
        %v1908 = vpow.pop %v1907
        %v1909 = vmul.f32 %v1897, 1.442695
        %v1910 = vpow.pop %v1909
        %v1911 = vmul.f32 %v1898, 1.442695
        %v1912 = vpow.pop %v1911
        %v1913 = vmul.f32 %v1899, 1.442695
        %v1914 = vpow.pop %v1913
        %v1915 = vmul.f32 %v1900, 1.442695
        %v1916 = vpow.pop %v1915
        %v1917 = vadd.f32 %v1902, 1.0
        %v1918 = vadd.f32 %v1904, 1.0
        %v1919 = vadd.f32 %v1906, 1.0
        %v1920 = vadd.f32 %v1908, 1.0
        %v1921 = vadd.f32 %v1910, 1.0
        %v1922 = vadd.f32 %v1912, 1.0
        %v1923 = vadd.f32 %v1914, 1.0
        %v1924 = vadd.f32 %v1916, 1.0
        %v1925 = vrcp.pop %v1917
        %v1926 = vmul.f32 1.0, %v1925
        %v1927 = vrcp.pop %v1918
        %v1928 = vmul.f32 1.0, %v1927
        %v1929 = vrcp.pop %v1919
        %v1930 = vmul.f32 1.0, %v1929
        %v1931 = vrcp.pop %v1920
        %v1932 = vmul.f32 1.0, %v1931
        %v1933 = vrcp.pop %v1921
        %v1934 = vmul.f32 1.0, %v1933
        %v1935 = vrcp.pop %v1922
        %v1936 = vmul.f32 1.0, %v1935
        %v1937 = vrcp.pop %v1923
        %v1938 = vmul.f32 1.0, %v1937
        %v1939 = vrcp.pop %v1924
        %v1940 = vmul.f32 1.0, %v1939
        %v1941 = vmul.f32 %v1885, %v1926
        %v1942 = vmul.f32 %v1886, %v1928
        %v1943 = vmul.f32 %v1887, %v1930
        %v1944 = vmul.f32 %v1888, %v1932
        %v1945 = vmul.f32 %v1889, %v1934
        %v1946 = vmul.f32 %v1890, %v1936
        %v1947 = vmul.f32 %v1891, %v1938
        %v1948 = vmul.f32 %v1892, %v1940
        %1949 = vst.msk [vmem:[#allocation2 + $0x10] sm:$0xff] %vm563, %v1941
        %1950 = vst.msk [vmem:[#allocation2 + $0x18] sm:$0xff] %vm563, %v1942
        %1951 = vst.msk [vmem:[#allocation2 + $0x20] sm:$0xff] %vm563, %v1943
        %1952 = vst.msk [vmem:[#allocation2 + $0x28] sm:$0xff] %vm563, %v1944
        %1953 = vst.msk [vmem:[#allocation2 + $0x30] sm:$0xff] %vm563, %v1945
        %1954 = vst.msk [vmem:[#allocation2 + $0x38] sm:$0xff] %vm563, %v1946
        %1955 = vst.msk [vmem:[#allocation2 + $0x40] sm:$0xff] %vm563, %v1947
        %1956 = vst.msk [vmem:[#allocation2 + $0x48] sm:$0xff] %vm563, %v1948
        %v1957 = vld [vmem:[#allocation2 + $0x7] sm:$0xff]
        %v1958 = vld [vmem:[#allocation2 + $0xf] sm:$0xff]
        %v1959 = vld [vmem:[#allocation2 + $0x17] sm:$0xff]
        %v1960 = vld [vmem:[#allocation2 + $0x1f] sm:$0xff]
        %v1961 = vld [vmem:[#allocation2 + $0x27] sm:$0xff]
        %v1962 = vld [vmem:[#allocation2 + $0x2f] sm:$0xff]
        %v1963 = vld [vmem:[#allocation2 + $0x37] sm:$0xff]
        %v1964 = vld [vmem:[#allocation2 + $0x3f] sm:$0xff]
        %v1965 = vsel %vm673, %v1957, 0.0
        %v1966 = vsel %vm674, %v1958, 0.0
        %v1967 = vsel %vm675, %v1959, 0.0
        %v1968 = vsel %vm676, %v1960, 0.0
        %v1969 = vsel %vm677, %v1961, 0.0
        %v1970 = vsel %vm678, %v1962, 0.0
        %v1971 = vsel %vm679, %v1963, 0.0
        %v1972 = vsel %vm680, %v1964, 0.0
        %v1973 = vld [vmem:[#allocation2 + $0x8] sm:$0xff]
        %v1974 = vld [vmem:[#allocation2 + $0x10] sm:$0xff]
        %v1975 = vld [vmem:[#allocation2 + $0x18] sm:$0xff]
        %v1976 = vld [vmem:[#allocation2 + $0x20] sm:$0xff]
        %v1977 = vld [vmem:[#allocation2 + $0x28] sm:$0xff]
        %v1978 = vld [vmem:[#allocation2 + $0x30] sm:$0xff]
        %v1979 = vld [vmem:[#allocation2 + $0x38] sm:$0xff]
        %v1980 = vld [vmem:[#allocation2 + $0x40] sm:$0xff]
        %v1981 = vld [vmem:[#allocation2 + $0x9] sm:$0xff]
        %v1982 = vld [vmem:[#allocation2 + $0x11] sm:$0xff]
        %v1983 = vld [vmem:[#allocation2 + $0x19] sm:$0xff]
        %v1984 = vld [vmem:[#allocation2 + $0x21] sm:$0xff]
        %v1985 = vld [vmem:[#allocation2 + $0x29] sm:$0xff]
        %v1986 = vld [vmem:[#allocation2 + $0x31] sm:$0xff]
        %v1987 = vld [vmem:[#allocation2 + $0x39] sm:$0xff]
        %v1988 = vld [vmem:[#allocation2 + $0x41] sm:$0xff]
        %v1989 = vsel %vm681, %v1981, 0.0
        %v1990 = vsel %vm682, %v1982, 0.0
        %v1991 = vsel %vm683, %v1983, 0.0
        %v1992 = vsel %vm684, %v1984, 0.0
        %v1993 = vsel %vm685, %v1985, 0.0
        %v1994 = vsel %vm686, %v1986, 0.0
        %v1995 = vsel %vm687, %v1987, 0.0
        %v1996 = vsel %vm688, %v1988, 0.0
        %v1997 = vld [vmem:[#allocation2 + $0x47] sm:$0xff]
        %v1998 = vsel %vm673, %v1958, 0.0
        %v1999 = vsel %vm674, %v1959, 0.0
        %v2000 = vsel %vm675, %v1960, 0.0
        %v2001 = vsel %vm676, %v1961, 0.0
        %v2002 = vsel %vm677, %v1962, 0.0
        %v2003 = vsel %vm678, %v1963, 0.0
        %v2004 = vsel %vm679, %v1964, 0.0
        %v2005 = vsel %vm680, %v1997, 0.0
        %v2006 = vld [vmem:[#allocation2 + $0x48] sm:$0xff]
        %v2007 = vld [vmem:[#allocation2 + $0x49] sm:$0xff]
        %v2008 = vsel %vm681, %v1982, 0.0
        %v2009 = vsel %vm682, %v1983, 0.0
        %v2010 = vsel %vm683, %v1984, 0.0
        %v2011 = vsel %vm684, %v1985, 0.0
        %v2012 = vsel %vm685, %v1986, 0.0
        %v2013 = vsel %vm686, %v1987, 0.0
        %v2014 = vsel %vm687, %v1988, 0.0
        %v2015 = vsel %vm688, %v2007, 0.0
        %v2016 = vld [vmem:[#allocation2 + $0x4f] sm:$0xff]
        %v2017 = vsel %vm673, %v1959, 0.0
        %v2018 = vsel %vm674, %v1960, 0.0
        %v2019 = vsel %vm675, %v1961, 0.0
        %v2020 = vsel %vm676, %v1962, 0.0
        %v2021 = vsel %vm677, %v1963, 0.0
        %v2022 = vsel %vm678, %v1964, 0.0
        %v2023 = vsel %vm679, %v1997, 0.0
        %v2024 = vsel %vm680, %v2016, 0.0
        %v2025 = vld [vmem:[#allocation2 + $0x50] sm:$0xff]
        %v2026 = vld [vmem:[#allocation2 + $0x51] sm:$0xff]
        %v2027 = vsel %vm681, %v1983, 0.0
        %v2028 = vsel %vm682, %v1984, 0.0
        %v2029 = vsel %vm683, %v1985, 0.0
        %v2030 = vsel %vm684, %v1986, 0.0
        %v2031 = vsel %vm685, %v1987, 0.0
        %v2032 = vsel %vm686, %v1988, 0.0
        %v2033 = vsel %vm687, %v2007, 0.0
        %v2034 = vsel %vm688, %v2026, 0.0
        %2043 = vrot.lane.b32.xlu0 %v1973, 32
        %v2044 = vpop.permute.xlu0 %2043
        %2045 = vrot.lane.b32.xlu0 %v1974, 32
        %v2046 = vpop.permute.xlu0 %2045
        %2047 = vrot.lane.b32.xlu0 %v1975, 32
        %v2048 = vpop.permute.xlu0 %2047
        %2049 = vrot.lane.b32.xlu0 %v1976, 32
        %v2050 = vpop.permute.xlu0 %2049
        %2051 = vrot.lane.b32.xlu0 %v1977, 32
        %v2052 = vpop.permute.xlu0 %2051
        %2053 = vrot.lane.b32.xlu0 %v1978, 32
        %v2054 = vpop.permute.xlu0 %2053
        %2055 = vrot.lane.b32.xlu0 %v1979, 32
        %v2056 = vpop.permute.xlu0 %2055
        %2057 = vrot.lane.b32.xlu0 %v1980, 32
        %v2058 = vpop.permute.xlu0 %2057
        %2075 = vrot.lane.b32.xlu0 %v1989, 64
        %v2076 = vpop.permute.xlu0 %2075
        %2077 = vrot.lane.b32.xlu0 %v1990, 64
        %v2078 = vpop.permute.xlu0 %2077
        %2079 = vrot.lane.b32.xlu0 %v1991, 64
        %v2080 = vpop.permute.xlu0 %2079
        %2081 = vrot.lane.b32.xlu0 %v1992, 64
        %v2082 = vpop.permute.xlu0 %2081
        %2083 = vrot.lane.b32.xlu0 %v1993, 64
        %v2084 = vpop.permute.xlu0 %2083
        %2085 = vrot.lane.b32.xlu0 %v1994, 64
        %v2086 = vpop.permute.xlu0 %2085
        %2087 = vrot.lane.b32.xlu0 %v1995, 64
        %v2088 = vpop.permute.xlu0 %2087
        %2089 = vrot.lane.b32.xlu0 %v1996, 64
        %v2090 = vpop.permute.xlu0 %2089
        %2107 = vrot.lane.b32.xlu0 %v1998, 96
        %v2108 = vpop.permute.xlu0 %2107
        %2109 = vrot.lane.b32.xlu0 %v1999, 96
        %v2110 = vpop.permute.xlu0 %2109
        %2111 = vrot.lane.b32.xlu0 %v2000, 96
        %v2112 = vpop.permute.xlu0 %2111
        %2113 = vrot.lane.b32.xlu0 %v2001, 96
        %v2114 = vpop.permute.xlu0 %2113
        %2115 = vrot.lane.b32.xlu0 %v2002, 96
        %v2116 = vpop.permute.xlu0 %2115
        %2117 = vrot.lane.b32.xlu0 %v2003, 96
        %v2118 = vpop.permute.xlu0 %2117
        %2119 = vrot.lane.b32.xlu0 %v2004, 96
        %v2120 = vpop.permute.xlu0 %2119
        %2121 = vrot.lane.b32.xlu0 %v2005, 96
        %v2122 = vpop.permute.xlu0 %2121
        %2139 = vrot.lane.b32.xlu0 %v2008, 32
        %v2140 = vpop.permute.xlu0 %2139
        %2141 = vrot.lane.b32.xlu0 %v2009, 32
        %v2142 = vpop.permute.xlu0 %2141
        %2143 = vrot.lane.b32.xlu0 %v2010, 32
        %v2144 = vpop.permute.xlu0 %2143
        %2145 = vrot.lane.b32.xlu0 %v2011, 32
        %v2146 = vpop.permute.xlu0 %2145
        %2147 = vrot.lane.b32.xlu0 %v2012, 32
        %v2148 = vpop.permute.xlu0 %2147
        %2149 = vrot.lane.b32.xlu0 %v2013, 32
        %v2150 = vpop.permute.xlu0 %2149
        %2151 = vrot.lane.b32.xlu0 %v2014, 32
        %v2152 = vpop.permute.xlu0 %2151
        %2153 = vrot.lane.b32.xlu0 %v2015, 32
        %v2154 = vpop.permute.xlu0 %2153
        %2171 = vrot.lane.b32.xlu0 %v2017, 64
        %v2172 = vpop.permute.xlu0 %2171
        %2173 = vrot.lane.b32.xlu0 %v2018, 64
        %v2174 = vpop.permute.xlu0 %2173
        %2175 = vrot.lane.b32.xlu0 %v2019, 64
        %v2176 = vpop.permute.xlu0 %2175
        %2177 = vrot.lane.b32.xlu0 %v2020, 64
        %v2178 = vpop.permute.xlu0 %2177
        %2179 = vrot.lane.b32.xlu0 %v2021, 64
        %v2180 = vpop.permute.xlu0 %2179
        %2181 = vrot.lane.b32.xlu0 %v2022, 64
        %v2182 = vpop.permute.xlu0 %2181
        %2183 = vrot.lane.b32.xlu0 %v2023, 64
        %v2184 = vpop.permute.xlu0 %2183
        %2185 = vrot.lane.b32.xlu0 %v2024, 64
        %v2186 = vpop.permute.xlu0 %2185
        %2197 = vrot.lane.b32.xlu0 %v1975, 96
        %v2198 = vpop.permute.xlu0 %2197
        %2199 = vrot.lane.b32.xlu0 %v1976, 96
        %v2200 = vpop.permute.xlu0 %2199
        %2201 = vrot.lane.b32.xlu0 %v1977, 96
        %v2202 = vpop.permute.xlu0 %2201
        %2203 = vrot.lane.b32.xlu0 %v1978, 96
        %v2204 = vpop.permute.xlu0 %2203
        %2205 = vrot.lane.b32.xlu0 %v1979, 96
        %v2206 = vpop.permute.xlu0 %2205
        %2207 = vrot.lane.b32.xlu0 %v1980, 96
        %v2208 = vpop.permute.xlu0 %2207
        %2209 = vrot.lane.b32.xlu0 %v2006, 96
        %v2210 = vpop.permute.xlu0 %2209
        %2211 = vrot.lane.b32.xlu0 %v2025, 96
        %v2212 = vpop.permute.xlu0 %2211
        %v2221 = vsel %vm563, %v1965, %v2044
        %v2222 = vsel %vm563, %v1966, %v2046
        %v2223 = vsel %vm563, %v1967, %v2048
        %v2224 = vsel %vm563, %v1968, %v2050
        %v2225 = vsel %vm563, %v1969, %v2052
        %v2226 = vsel %vm563, %v1970, %v2054
        %v2227 = vsel %vm563, %v1971, %v2056
        %v2228 = vsel %vm563, %v1972, %v2058
        %v2229 = vsel %vm1286, %v2221, %v2076
        %v2230 = vsel %vm1286, %v2222, %v2078
        %v2231 = vsel %vm1286, %v2223, %v2080
        %v2232 = vsel %vm1286, %v2224, %v2082
        %v2233 = vsel %vm1286, %v2225, %v2084
        %v2234 = vsel %vm1286, %v2226, %v2086
        %v2235 = vsel %vm1286, %v2227, %v2088
        %v2236 = vsel %vm1286, %v2228, %v2090
        %v2237 = vsel %vm1295, %v2229, %v2108
        %v2238 = vsel %vm1295, %v2230, %v2110
        %v2239 = vsel %vm1295, %v2231, %v2112
        %v2240 = vsel %vm1295, %v2232, %v2114
        %v2241 = vsel %vm1295, %v2233, %v2116
        %v2242 = vsel %vm1295, %v2234, %v2118
        %v2243 = vsel %vm1295, %v2235, %v2120
        %v2244 = vsel %vm1295, %v2236, %v2122
        %v2245 = vsel %vm563, %v1974, %v2140
        %v2246 = vsel %vm563, %v1975, %v2142
        %v2247 = vsel %vm563, %v1976, %v2144
        %v2248 = vsel %vm563, %v1977, %v2146
        %v2249 = vsel %vm563, %v1978, %v2148
        %v2250 = vsel %vm563, %v1979, %v2150
        %v2251 = vsel %vm563, %v1980, %v2152
        %v2252 = vsel %vm563, %v2006, %v2154
        %v2253 = vsel %vm1286, %v2245, %v2172
        %v2254 = vsel %vm1286, %v2246, %v2174
        %v2255 = vsel %vm1286, %v2247, %v2176
        %v2256 = vsel %vm1286, %v2248, %v2178
        %v2257 = vsel %vm1286, %v2249, %v2180
        %v2258 = vsel %vm1286, %v2250, %v2182
        %v2259 = vsel %vm1286, %v2251, %v2184
        %v2260 = vsel %vm1286, %v2252, %v2186
        %v2261 = vsel %vm1295, %v2253, %v2198
        %v2262 = vsel %vm1295, %v2254, %v2200
        %v2263 = vsel %vm1295, %v2255, %v2202
        %v2264 = vsel %vm1295, %v2256, %v2204
        %v2265 = vsel %vm1295, %v2257, %v2206
        %v2266 = vsel %vm1295, %v2258, %v2208
        %v2267 = vsel %vm1295, %v2259, %v2210
        %v2268 = vsel %vm1295, %v2260, %v2212
        %v2269 = vpack.c.bf16 %v2238, %v2237
        %v2270 = vpack.c.bf16 %v2262, %v2261
        %v2271 = vpack.c.bf16 %v2028, %v2027
        %v2272 = vpack.c.bf16 %v2240, %v2239
        %v2273 = vpack.c.bf16 %v2264, %v2263
        %v2274 = vpack.c.bf16 %v2030, %v2029
        %v2275 = vpack.c.bf16 %v2242, %v2241
        %v2276 = vpack.c.bf16 %v2266, %v2265
        %v2277 = vpack.c.bf16 %v2032, %v2031
        %v2278 = vpack.c.bf16 %v2244, %v2243
        %v2279 = vpack.c.bf16 %v2268, %v2267
        %v2280 = vpack.c.bf16 %v2034, %v2033
        %s2281 = scalar_lea.vmem [#allocation12], 144
        %v2282 = vld [vmem:[%s2281] sm:$0xf]
        %v2283 = vld [vmem:[%s2281 + $0x4] sm:$0xf]
        %v2284 = vld [vmem:[%s2281 + $0x8] sm:$0xf]
        %v2285 = vld [vmem:[%s2281 + $0xc] sm:$0xf]
        %v2286 = vld [vmem:[%s2281 + $0x10] sm:$0xf]
        %v2287 = vld [vmem:[%s2281 + $0x14] sm:$0xf]
        %v2288 = vld [vmem:[%s2281 + $0x18] sm:$0xf]
        %v2289 = vld [vmem:[%s2281 + $0x1c] sm:$0xf]
        %v2290 = vld [vmem:[%s2281 + $0x20] sm:$0xf]
        %v2291 = vld [vmem:[%s2281 + $0x24] sm:$0xf]
        %v2292 = vld [vmem:[%s2281 + $0x28] sm:$0xf]
        %v2293 = vld [vmem:[%s2281 + $0x2c] sm:$0xf]
        %v2294 = vld [vmem:[%s2281 + $0x30] sm:$0xf]
        %v2295 = vld [vmem:[%s2281 + $0x34] sm:$0xf]
        %v2296 = vld [vmem:[%s2281 + $0x38] sm:$0xf]
        %v2297 = vld [vmem:[%s2281 + $0x3c] sm:$0xf]
        %v2298 = vld [vmem:[%s2281 + $0x40] sm:$0xf]
        %v2299 = vld [vmem:[%s2281 + $0x44] sm:$0xf]
        %v2300 = vld [vmem:[%s2281 + $0x48] sm:$0xf]
        %v2301 = vld [vmem:[%s2281 + $0x4c] sm:$0xf]
        %v2302 = vld [vmem:[%s2281 + $0x50] sm:$0xf]
        %v2303 = vld [vmem:[%s2281 + $0x54] sm:$0xf]
        %v2304 = vld [vmem:[%s2281 + $0x58] sm:$0xf]
        %v2305 = vld [vmem:[%s2281 + $0x5c] sm:$0xf]
        %v2306 = vld [vmem:[%s2281 + $0x60] sm:$0xf]
        %v2307 = vld [vmem:[%s2281 + $0x64] sm:$0xf]
        %v2308 = vld [vmem:[%s2281 + $0x68] sm:$0xf]
        %v2309 = vld [vmem:[%s2281 + $0x6c] sm:$0xf]
        %v2310 = vld [vmem:[%s2281 + $0x70] sm:$0xf]
        %v2311 = vld [vmem:[%s2281 + $0x74] sm:$0xf]
        %v2312 = vld [vmem:[%s2281 + $0x78] sm:$0xf]
        %v2313 = vld [vmem:[%s2281 + $0x7c] sm:$0xf]
        %v2314 = vld [vmem:[%s2281 + $0x80] sm:$0xf]
        %v2315 = vld [vmem:[%s2281 + $0x84] sm:$0xf]
        %v2316 = vld [vmem:[%s2281 + $0x88] sm:$0xf]
        %v2317 = vld [vmem:[%s2281 + $0x8c] sm:$0xf]
        %v2318 = vld [vmem:[#allocation14 + $0x1] sm:$0x1]
        %v2319 = vlaneseq
        %v2320 = vshrl.u32 %v2319, 7
        %v2321 = vsub.s32 0, %v2320
        %v2322 = vrot.slane %v2318, %v2321
        %v2359 = vunpack.c.l.b16 %v2282
        %v2360 = vunpack.c.l.b16 %v2283
        %v2361 = vunpack.c.l.b16 %v2284
        %v2362 = vunpack.c.l.b16 %v2285
        %v2363 = vunpack.c.l.b16 %v2286
        %v2364 = vunpack.c.l.b16 %v2287
        %v2365 = vunpack.c.l.b16 %v2288
        %v2366 = vunpack.c.l.b16 %v2289
        %v2367 = vunpack.c.l.b16 %v2290
        %v2368 = vunpack.c.l.b16 %v2291
        %v2369 = vunpack.c.l.b16 %v2292
        %v2370 = vunpack.c.l.b16 %v2293
        %v2371 = vunpack.c.l.b16 %v2294
        %v2372 = vunpack.c.l.b16 %v2295
        %v2373 = vunpack.c.l.b16 %v2296
        %v2374 = vunpack.c.l.b16 %v2297
        %v2375 = vunpack.c.l.b16 %v2298
        %v2376 = vunpack.c.l.b16 %v2299
        %v2377 = vunpack.c.l.b16 %v2300
        %v2378 = vunpack.c.l.b16 %v2301
        %v2379 = vunpack.c.l.b16 %v2302
        %v2380 = vunpack.c.l.b16 %v2303
        %v2381 = vunpack.c.l.b16 %v2304
        %v2382 = vunpack.c.l.b16 %v2305
        %v2383 = vunpack.c.l.b16 %v2306
        %v2384 = vunpack.c.l.b16 %v2307
        %v2385 = vunpack.c.l.b16 %v2308
        %v2386 = vunpack.c.l.b16 %v2309
        %v2387 = vunpack.c.l.b16 %v2310
        %v2388 = vunpack.c.l.b16 %v2311
        %v2389 = vunpack.c.l.b16 %v2312
        %v2390 = vunpack.c.l.b16 %v2313
        %v2391 = vunpack.c.l.b16 %v2314
        %v2392 = vunpack.c.l.b16 %v2315
        %v2393 = vunpack.c.l.b16 %v2316
        %v2394 = vunpack.c.l.b16 %v2317
        %v2395 = vpack.c.b16 %v2360, %v2359
        %v2396 = vpack.c.b16 %v2362, %v2361
        %v2397 = vpack.c.b16 %v2364, %v2363
        %v2398 = vpack.c.b16 %v2366, %v2365
        %v2399 = vpack.c.b16 %v2368, %v2367
        %v2400 = vpack.c.b16 %v2370, %v2369
        %v2401 = vpack.c.b16 %v2372, %v2371
        %v2402 = vpack.c.b16 %v2374, %v2373
        %v2403 = vpack.c.b16 %v2376, %v2375
        %v2404 = vpack.c.b16 %v2378, %v2377
        %v2405 = vpack.c.b16 %v2380, %v2379
        %v2406 = vpack.c.b16 %v2382, %v2381
        %v2407 = vpack.c.b16 %v2384, %v2383
        %v2408 = vpack.c.b16 %v2386, %v2385
        %v2409 = vpack.c.b16 %v2388, %v2387
        %v2410 = vpack.c.b16 %v2390, %v2389
        %v2411 = vpack.c.b16 %v2392, %v2391
        %v2412 = vpack.c.b16 %v2394, %v2393
        %v2432 = vsel %vm563, %v2271, 0
        %v2435 = vsel %vm563, %v2274, 0
        %v2438 = vsel %vm563, %v2277, 0
        %v2441 = vsel %vm563, %v2280, 0
        %2443 = vmatprep.subr.bf16.mxu0 0
        %2444 = vmatpush1.bf16.msra.mxu0 %v2395
        %2445 = vmatprep.subr.bf16.mxu0 0
        %2446 = vmatpush1.bf16.msra.mxu0 %v2396
        %2447 = vmatprep.subr.bf16.mxu0 0
        %2448 = vmatpush1.bf16.msra.mxu0 %v2397
        %2449 = vmatprep.subr.bf16.mxu0 0
        %2450 = vmatpush1.bf16.msra.mxu0 %v2398
        %2451 = vmatprep.subr.bf16.mxu0 0
        %2452 = vmatpush1.bf16.msra.mxu0 %v2399
        %2453 = vmatprep.subr.bf16.mxu0 0
        %2454 = vmatpush1.bf16.msra.mxu0 %v2400
        %2455 = vmatprep.subr.bf16.mxu0 0
        %2456 = vmatpush1.bf16.msra.mxu0 %v2401
        %2457 = vmatprep.subr.bf16.mxu0 0
        %2458 = vmatpush1.bf16.msra.mxu0 %v2402
        %2459 = vmatprep.subr.bf16.mxu0 0
        %2460 = vmatpush1.bf16.msra.mxu0 %v2403
        %2461 = vmatprep.subr.bf16.mxu0 0
        %2462 = vmatpush1.bf16.msra.mxu0 %v2404
        %2463 = vmatprep.subr.bf16.mxu0 0
        %2464 = vmatpush1.bf16.msra.mxu0 %v2405
        %2465 = vmatprep.subr.bf16.mxu0 0
        %2466 = vmatpush1.bf16.msra.mxu0 %v2406
        %2467 = vmatprep.subr.bf16.mxu0 0
        %2468 = vmatpush1.bf16.msra.mxu0 %v2407
        %2469 = vmatprep.subr.bf16.mxu0 0
        %2470 = vmatpush1.bf16.msra.mxu0 %v2408
        %2471 = vmatprep.subr.bf16.mxu0 0
        %2472 = vmatpush1.bf16.msra.mxu0 %v2409
        %2473 = vmatprep.subr.bf16.mxu0 0
        %2474 = vmatpush1.bf16.msra.mxu0 %v2410
        %2475 = vmatprep.mubr.bf16.mxu0 %v2270
        %2476 = vmatmul.mubr.bf16.gmra.mrb[0].mxu0 %v2269
        %v2477 = vpop.f32.mrb[0].mxu0
        %v2478 = vadd.f32 %v2322, %v2477
        %v2479 = vpop.f32.mrb[0].mxu0
        %v2480 = vpop.f32.mrb[0].mxu0
        %v2481 = vadd.f32 %v2322, %v2480
        %v2482 = vpop.f32.mrb[0].mxu0
        %2483 = vmatprep.mubr.bf16.mxu0 %v2273
        %2484 = vmatmul.mubr.bf16.gmra.mrb[0].mxu0 %v2272
        %v2485 = vpop.f32.mrb[0].mxu0
        %v2486 = vadd.f32 %v2322, %v2485
        %v2487 = vpop.f32.mrb[0].mxu0
        %v2488 = vpop.f32.mrb[0].mxu0
        %v2489 = vadd.f32 %v2322, %v2488
        %v2490 = vpop.f32.mrb[0].mxu0
        %2491 = vmatprep.mubr.bf16.mxu0 %v2276
        %2492 = vmatmul.mubr.bf16.gmra.mrb[0].mxu0 %v2275
        %v2493 = vpop.f32.mrb[0].mxu0
        %v2494 = vadd.f32 %v2322, %v2493
        %v2495 = vpop.f32.mrb[0].mxu0
        %v2496 = vpop.f32.mrb[0].mxu0
        %v2497 = vadd.f32 %v2322, %v2496
        %v2498 = vpop.f32.mrb[0].mxu0
        %2499 = vmatprep.mubr.bf16.mxu0 %v2279
        %2500 = vmatmul.mubr.bf16.gmra.mrb[0].mxu0 %v2278
        %v2501 = vpop.f32.mrb[0].mxu0
        %v2502 = vadd.f32 %v2322, %v2501
        %v2503 = vpop.f32.mrb[0].mxu0
        %v2504 = vpop.f32.mrb[0].mxu0
        %v2505 = vadd.f32 %v2322, %v2504
        %v2506 = vpop.f32.mrb[0].mxu0
        %2507 = vdwg.mxu0
        %2508 = vmatprep.subr.bf16.mxu0 0
        %2509 = vmatpush1.bf16.msra.mxu0 %v2411
        %2510 = vmatprep.subr.bf16.mxu0 0
        %2511 = vmatpush1.bf16.msra.mxu0 %v2412
        %2512 = vmatprep.subr.bf16.mxu0 0
        %2513 = vmatpush1.bf16.msra.mxu0 0
        %2514 = vmatprep.subr.bf16.mxu0 0
        %2515 = vmatpush1.bf16.msra.mxu0 0
        %2516 = vmatprep.subr.bf16.mxu0 0
        %2517 = vmatpush1.bf16.msra.mxu0 0
        %2518 = vmatprep.subr.bf16.mxu0 0
        %2519 = vmatpush1.bf16.msra.mxu0 0
        %2520 = vmatprep.subr.bf16.mxu0 0
        %2521 = vmatpush1.bf16.msra.mxu0 0
        %2522 = vmatprep.subr.bf16.mxu0 0
        %2523 = vmatpush1.bf16.msra.mxu0 0
        %2524 = vmatprep.subr.bf16.mxu0 0
        %2525 = vmatpush1.bf16.msra.mxu0 0
        %2526 = vmatprep.subr.bf16.mxu0 0
        %2527 = vmatpush1.bf16.msra.mxu0 0
        %2528 = vmatprep.subr.bf16.mxu0 0
        %2529 = vmatpush1.bf16.msra.mxu0 0
        %2530 = vmatprep.subr.bf16.mxu0 0
        %2531 = vmatpush1.bf16.msra.mxu0 0
        %2532 = vmatprep.subr.bf16.mxu0 0
        %2533 = vmatpush1.bf16.msra.mxu0 0
        %2534 = vmatprep.subr.bf16.mxu0 0
        %2535 = vmatpush1.bf16.msra.mxu0 0
        %2536 = vmatprep.subr.bf16.mxu0 0
        %2537 = vmatpush1.bf16.msra.mxu0 0
        %2538 = vmatprep.subr.bf16.mxu0 0
        %2539 = vmatpush1.bf16.msra.mxu0 0
        %2540 = vmatprep.mubr.bf16.mxu0 0
        %2541 = vmatmul.mubr.bf16.gmra.mrb[0].mxu0 %v2432
        %v2542 = vpop.f32.mrb[0].mxu0
        %v2543 = vadd.f32 %v2478, %v2542
        %v2544 = vpop.f32.mrb[0].mxu0
        %v2545 = vpop.f32.mrb[0].mxu0
        %v2546 = vadd.f32 %v2481, %v2545
        %v2547 = vpop.f32.mrb[0].mxu0
        %2548 = vmatprep.mubr.bf16.mxu0 0
        %2549 = vmatmul.mubr.bf16.gmra.mrb[0].mxu0 %v2435
        %v2550 = vpop.f32.mrb[0].mxu0
        %v2551 = vadd.f32 %v2486, %v2550
        %v2552 = vpop.f32.mrb[0].mxu0
        %v2553 = vpop.f32.mrb[0].mxu0
        %v2554 = vadd.f32 %v2489, %v2553
        %v2555 = vpop.f32.mrb[0].mxu0
        %2556 = vmatprep.mubr.bf16.mxu0 0
        %2557 = vmatmul.mubr.bf16.gmra.mrb[0].mxu0 %v2438
        %v2558 = vpop.f32.mrb[0].mxu0
        %v2559 = vadd.f32 %v2494, %v2558
        %v2560 = vpop.f32.mrb[0].mxu0
        %v2561 = vpop.f32.mrb[0].mxu0
        %v2562 = vadd.f32 %v2497, %v2561
        %v2563 = vpop.f32.mrb[0].mxu0
        %2564 = vmatprep.mubr.bf16.mxu0 0
        %2565 = vmatmul.mubr.bf16.gmra.mrb[0].mxu0 %v2441
        %v2566 = vpop.f32.mrb[0].mxu0
        %v2567 = vadd.f32 %v2502, %v2566
        %v2568 = vpop.f32.mrb[0].mxu0
        %v2569 = vpop.f32.mrb[0].mxu0
        %v2570 = vadd.f32 %v2505, %v2569
        %v2571 = vpop.f32.mrb[0].mxu0
        %2572 = vdwg.mxu0
        %v2573 = vadd.f32 %v693, %v2543
        %v2574 = vadd.f32 %v694, %v2546
        %v2575 = vadd.f32 %v695, %v2551
        %v2576 = vadd.f32 %v696, %v2554
        %v2577 = vadd.f32 %v697, %v2559
        %v2578 = vadd.f32 %v698, %v2562
        %v2579 = vadd.f32 %v699, %v2567
        %v2580 = vadd.f32 %v700, %v2570
        %v2581 = vld [vmem:[#allocation9 + $0x2] sm:$0x1]
        %v2582 = vld [vmem:[#allocation11 + $0x2] sm:$0x1]
        %v2583 = vsel %vm563, %v2573, 0.0
        %v2584 = vsel %vm563, %v2574, 0.0
        %v2585 = vadd.f32 %v2583, %v2584
        %v2586 = vsel %vm563, %v2575, 0.0
        %v2587 = vadd.f32 %v2585, %v2586
        %v2588 = vsel %vm563, %v2576, 0.0
        %v2589 = vadd.f32 %v2587, %v2588
        %v2590 = vsel %vm563, %v2577, 0.0
        %v2591 = vadd.f32 %v2589, %v2590
        %v2592 = vsel %vm563, %v2578, 0.0
        %v2593 = vadd.f32 %v2591, %v2592
        %v2594 = vsel %vm563, %v2579, 0.0
        %v2595 = vadd.f32 %v2593, %v2594
        %v2596 = vsel %vm563, %v2580, 0.0
        %v2597 = vadd.f32 %v2595, %v2596
        %v2598 = vrot.slane %v2597, 4
        %v2599 = vadd.f32 %v2597, %v2598
        %v2600 = vrot.slane %v2599, 2
        %v2601 = vadd.f32 %v2599, %v2600
        %v2602 = vrot.slane %v2601, 1
        %v2603 = vadd.f32 %v2601, %v2602
        %v2604 = vmul.f32 %v2603, 0.015625
        %v2606 = vsel %vm563, %v2604, 0
        %2608 = vmatprep.subr.mxu0 0.0
        %2609 = vmatpush1.msra.mxu0 %v689
        %2610 = vmatprep.subr.mxu0 0.0
        %2611 = vmatpush1.msra.mxu0 %v690
        %2612 = vmatprep.subr.mxu0 0.0
        %2613 = vmatpush1.msra.mxu0 %v691
        %2614 = vmatprep.subr.mxu0 0.0
        %2615 = vmatpush1.msra.mxu0 %v692
        %2616 = vmatprep.subr.mxu0 0.0
        %2617 = vmatpush1.msra.mxu0 0.0
        %2618 = vmatprep.subr.mxu0 0.0
        %2619 = vmatpush1.msra.mxu0 0.0
        %2620 = vmatprep.subr.mxu0 0.0
        %2621 = vmatpush1.msra.mxu0 0.0
        %2622 = vmatprep.subr.mxu0 0.0
        %2623 = vmatpush1.msra.mxu0 0.0
        %2624 = vmatprep.subr.mxu0 0.0
        %2625 = vmatpush1.msra.mxu0 0.0
        %2626 = vmatprep.subr.mxu0 0.0
        %2627 = vmatpush1.msra.mxu0 0.0
        %2628 = vmatprep.subr.mxu0 0.0
        %2629 = vmatpush1.msra.mxu0 0.0
        %2630 = vmatprep.subr.mxu0 0.0
        %2631 = vmatpush1.msra.mxu0 0.0
        %2632 = vmatprep.subr.mxu0 0.0
        %2633 = vmatpush1.msra.mxu0 0.0
        %2634 = vmatprep.subr.mxu0 0.0
        %2635 = vmatpush1.msra.mxu0 0.0
        %2636 = vmatprep.subr.mxu0 0.0
        %2637 = vmatpush1.msra.mxu0 0.0
        %2638 = vmatprep.subr.mxu0 0.0
        %2639 = vmatpush1.msra.mxu0 0.0
        %2640 = vmatprep.subr.mxu0 0.0
        %2641 = vmatpush1.msra.mxu0 0.0
        %2642 = vmatprep.subr.mxu0 0.0
        %2643 = vmatpush1.msra.mxu0 0.0
        %2644 = vmatprep.subr.mxu0 0.0
        %2645 = vmatpush1.msra.mxu0 0.0
        %2646 = vmatprep.subr.mxu0 0.0
        %2647 = vmatpush1.msra.mxu0 0.0
        %2648 = vmatprep.subr.mxu0 0.0
        %2649 = vmatpush1.msra.mxu0 0.0
        %2650 = vmatprep.subr.mxu0 0.0
        %2651 = vmatpush1.msra.mxu0 0.0
        %2652 = vmatprep.subr.mxu0 0.0
        %2653 = vmatpush1.msra.mxu0 0.0
        %2654 = vmatprep.subr.mxu0 0.0
        %2655 = vmatpush1.msra.mxu0 0.0
        %2656 = vmatprep.subr.mxu0 0.0
        %2657 = vmatpush1.msra.mxu0 0.0
        %2658 = vmatprep.subr.mxu0 0.0
        %2659 = vmatpush1.msra.mxu0 0.0
        %2660 = vmatprep.subr.mxu0 0.0
        %2661 = vmatpush1.msra.mxu0 0.0
        %2662 = vmatprep.subr.mxu0 0.0
        %2663 = vmatpush1.msra.mxu0 0.0
        %2664 = vmatprep.subr.mxu0 0.0
        %2665 = vmatpush1.msra.mxu0 0.0
        %2666 = vmatprep.subr.mxu0 0.0
        %2667 = vmatpush1.msra.mxu0 0.0
        %2668 = vmatprep.subr.mxu0 0.0
        %2669 = vmatpush1.msra.mxu0 0.0
        %2670 = vmatprep.subr.mxu0 0.0
        %2671 = vmatpush1.msra.mxu0 0.0
        %2672 = vmatprep.mubr.f32.mxu0 0.0
        %2673 = vmatmul.mubr.f32.gmra.mrb[0].mxu0 %v2606
        %v2674 = vpop.f32.mrb[0].mxu0
        %v2675 = vadd.f32 0.0, %v2674
        %v2676 = vpop.f32.mrb[0].mxu0
        %2677 = vdwg.mxu0
        %v2678 = vlaneseq
        %v2679 = vshrl.u32 %v2678, 7
        %v2680 = vsub.s32 0, %v2679
        %v2681 = vrot.slane %v2675, %v2680
        %v2682 = vsub.f32 %v2573, %v2681
        %v2683 = vsub.f32 %v2574, %v2681
        %v2684 = vsub.f32 %v2575, %v2681
        %v2685 = vsub.f32 %v2576, %v2681
        %v2686 = vsub.f32 %v2577, %v2681
        %v2687 = vsub.f32 %v2578, %v2681
        %v2688 = vsub.f32 %v2579, %v2681
        %v2689 = vsub.f32 %v2580, %v2681
        %v2690 = vmul.f32 %v2682, %v2682
        %v2691 = vmul.f32 %v2683, %v2683
        %v2692 = vmul.f32 %v2684, %v2684
        %v2693 = vmul.f32 %v2685, %v2685
        %v2694 = vmul.f32 %v2686, %v2686
        %v2695 = vmul.f32 %v2687, %v2687
        %v2696 = vmul.f32 %v2688, %v2688
        %v2697 = vmul.f32 %v2689, %v2689
        %v2698 = vsel %vm563, %v2690, 0.0
        %v2699 = vsel %vm563, %v2691, 0.0
        %v2700 = vadd.f32 %v2698, %v2699
        %v2701 = vsel %vm563, %v2692, 0.0
        %v2702 = vadd.f32 %v2700, %v2701
        %v2703 = vsel %vm563, %v2693, 0.0
        %v2704 = vadd.f32 %v2702, %v2703
        %v2705 = vsel %vm563, %v2694, 0.0
        %v2706 = vadd.f32 %v2704, %v2705
        %v2707 = vsel %vm563, %v2695, 0.0
        %v2708 = vadd.f32 %v2706, %v2707
        %v2709 = vsel %vm563, %v2696, 0.0
        %v2710 = vadd.f32 %v2708, %v2709
        %v2711 = vsel %vm563, %v2697, 0.0
        %v2712 = vadd.f32 %v2710, %v2711
        %v2713 = vrot.slane %v2712, 4
        %v2714 = vadd.f32 %v2712, %v2713
        %v2715 = vrot.slane %v2714, 2
        %v2716 = vadd.f32 %v2714, %v2715
        %v2717 = vrot.slane %v2716, 1
        %v2718 = vadd.f32 %v2716, %v2717
        %v2719 = vmul.f32 %v2718, 0.015625
        %v2721 = vsel %vm563, %v2719, 0
        %2723 = vmatprep.subr.mxu0 0.0
        %2724 = vmatpush1.msra.mxu0 %v689
        %2725 = vmatprep.subr.mxu0 0.0
        %2726 = vmatpush1.msra.mxu0 %v690
        %2727 = vmatprep.subr.mxu0 0.0
        %2728 = vmatpush1.msra.mxu0 %v691
        %2729 = vmatprep.subr.mxu0 0.0
        %2730 = vmatpush1.msra.mxu0 %v692
        %2731 = vmatprep.subr.mxu0 0.0
        %2732 = vmatpush1.msra.mxu0 0.0
        %2733 = vmatprep.subr.mxu0 0.0
        %2734 = vmatpush1.msra.mxu0 0.0
        %2735 = vmatprep.subr.mxu0 0.0
        %2736 = vmatpush1.msra.mxu0 0.0
        %2737 = vmatprep.subr.mxu0 0.0
        %2738 = vmatpush1.msra.mxu0 0.0
        %2739 = vmatprep.subr.mxu0 0.0
        %2740 = vmatpush1.msra.mxu0 0.0
        %2741 = vmatprep.subr.mxu0 0.0
        %2742 = vmatpush1.msra.mxu0 0.0
        %2743 = vmatprep.subr.mxu0 0.0
        %2744 = vmatpush1.msra.mxu0 0.0
        %2745 = vmatprep.subr.mxu0 0.0
        %2746 = vmatpush1.msra.mxu0 0.0
        %2747 = vmatprep.subr.mxu0 0.0
        %2748 = vmatpush1.msra.mxu0 0.0
        %2749 = vmatprep.subr.mxu0 0.0
        %2750 = vmatpush1.msra.mxu0 0.0
        %2751 = vmatprep.subr.mxu0 0.0
        %2752 = vmatpush1.msra.mxu0 0.0
        %2753 = vmatprep.subr.mxu0 0.0
        %2754 = vmatpush1.msra.mxu0 0.0
        %2755 = vmatprep.subr.mxu0 0.0
        %2756 = vmatpush1.msra.mxu0 0.0
        %2757 = vmatprep.subr.mxu0 0.0
        %2758 = vmatpush1.msra.mxu0 0.0
        %2759 = vmatprep.subr.mxu0 0.0
        %2760 = vmatpush1.msra.mxu0 0.0
        %2761 = vmatprep.subr.mxu0 0.0
        %2762 = vmatpush1.msra.mxu0 0.0
        %2763 = vmatprep.subr.mxu0 0.0
        %2764 = vmatpush1.msra.mxu0 0.0
        %2765 = vmatprep.subr.mxu0 0.0
        %2766 = vmatpush1.msra.mxu0 0.0
        %2767 = vmatprep.subr.mxu0 0.0
        %2768 = vmatpush1.msra.mxu0 0.0
        %2769 = vmatprep.subr.mxu0 0.0
        %2770 = vmatpush1.msra.mxu0 0.0
        %2771 = vmatprep.subr.mxu0 0.0
        %2772 = vmatpush1.msra.mxu0 0.0
        %2773 = vmatprep.subr.mxu0 0.0
        %2774 = vmatpush1.msra.mxu0 0.0
        %2775 = vmatprep.subr.mxu0 0.0
        %2776 = vmatpush1.msra.mxu0 0.0
        %2777 = vmatprep.subr.mxu0 0.0
        %2778 = vmatpush1.msra.mxu0 0.0
        %2779 = vmatprep.subr.mxu0 0.0
        %2780 = vmatpush1.msra.mxu0 0.0
        %2781 = vmatprep.subr.mxu0 0.0
        %2782 = vmatpush1.msra.mxu0 0.0
        %2783 = vmatprep.subr.mxu0 0.0
        %2784 = vmatpush1.msra.mxu0 0.0
        %2785 = vmatprep.subr.mxu0 0.0
        %2786 = vmatpush1.msra.mxu0 0.0
        %2787 = vmatprep.mubr.f32.mxu0 0.0
        %2788 = vmatmul.mubr.f32.gmra.mrb[0].mxu0 %v2721
        %v2789 = vpop.f32.mrb[0].mxu0
        %v2790 = vadd.f32 1e-05, %v2789
        %v2791 = vpop.f32.mrb[0].mxu0
        %2792 = vdwg.mxu0
        %v2793 = vrsqrt.pop %v2790
        %v2794 = vlaneseq
        %v2795 = vshrl.u32 %v2794, 7
        %v2796 = vsub.s32 0, %v2795
        %v2797 = vrot.slane %v2793, %v2796
        %v2798 = vmul.f32 %v2682, %v2797
        %v2799 = vmul.f32 %v2683, %v2797
        %v2800 = vmul.f32 %v2684, %v2797
        %v2801 = vmul.f32 %v2685, %v2797
        %v2802 = vmul.f32 %v2686, %v2797
        %v2803 = vmul.f32 %v2687, %v2797
        %v2804 = vmul.f32 %v2688, %v2797
        %v2805 = vmul.f32 %v2689, %v2797
        %v2806 = vlaneseq
        %v2807 = vshrl.u32 %v2806, 7
        %v2808 = vsub.s32 0, %v2807
        %v2809 = vrot.slane %v2581, %v2808
        %v2810 = vmul.f32 %v2798, %v2809
        %v2811 = vmul.f32 %v2799, %v2809
        %v2812 = vmul.f32 %v2800, %v2809
        %v2813 = vmul.f32 %v2801, %v2809
        %v2814 = vmul.f32 %v2802, %v2809
        %v2815 = vmul.f32 %v2803, %v2809
        %v2816 = vmul.f32 %v2804, %v2809
        %v2817 = vmul.f32 %v2805, %v2809
        %v2818 = vlaneseq
        %v2819 = vshrl.u32 %v2818, 7
        %v2820 = vsub.s32 0, %v2819
        %v2821 = vrot.slane %v2582, %v2820
        %v2822 = vadd.f32 %v2810, %v2821
        %v2823 = vadd.f32 %v2811, %v2821
        %v2824 = vadd.f32 %v2812, %v2821
        %v2825 = vadd.f32 %v2813, %v2821
        %v2826 = vadd.f32 %v2814, %v2821
        %v2827 = vadd.f32 %v2815, %v2821
        %v2828 = vadd.f32 %v2816, %v2821
        %v2829 = vadd.f32 %v2817, %v2821
        %v2830 = vpack.c.bf16 %v2823, %v2822
        %v2831 = vpack.c.bf16 %v2825, %v2824
        %v2832 = vpack.c.bf16 %v2827, %v2826
        %v2833 = vpack.c.bf16 %v2829, %v2828
        %v2834 = vld [vmem:[#allocation15] sm:$0xf]
        %v2835 = vld [vmem:[#allocation15 + $0x4] sm:$0xf]
        %v2836 = vld [vmem:[#allocation15 + $0x8] sm:$0xf]
        %v2837 = vld [vmem:[#allocation15 + $0xc] sm:$0xf]
        %v2838 = vld [vmem:[#allocation17] sm:$0x1]
        %v2840 = vlaneseq
        %v2841 = vshrl.u32 %v2840, 7
        %v2842 = vsub.s32 0, %v2841
        %v2843 = vrot.slane %v2838, %v2842
        %v2849 = vunpack.c.l.b16 %v2834
        %v2850 = vunpack.c.l.b16 %v2835
        %v2851 = vunpack.c.l.b16 %v2836
        %v2852 = vunpack.c.l.b16 %v2837
        %v2853 = vpack.c.b16 %v2850, %v2849
        %v2854 = vpack.c.b16 %v2852, %v2851
        %v2858 = vsel %vm563, %v2830, 0
        %v2861 = vsel %vm563, %v2831, 0
        %v2864 = vsel %vm563, %v2832, 0
        %v2867 = vsel %vm563, %v2833, 0
        %2869 = vmatprep.subr.bf16.mxu0 0
        %2870 = vmatpush1.bf16.msra.mxu0 %v2853
        %2871 = vmatprep.subr.bf16.mxu0 0
        %2872 = vmatpush1.bf16.msra.mxu0 %v2854
        %2873 = vmatprep.subr.bf16.mxu0 0
        %2874 = vmatpush1.bf16.msra.mxu0 0
        %2875 = vmatprep.subr.bf16.mxu0 0
        %2876 = vmatpush1.bf16.msra.mxu0 0
        %2877 = vmatprep.subr.bf16.mxu0 0
        %2878 = vmatpush1.bf16.msra.mxu0 0
        %2879 = vmatprep.subr.bf16.mxu0 0
        %2880 = vmatpush1.bf16.msra.mxu0 0
        %2881 = vmatprep.subr.bf16.mxu0 0
        %2882 = vmatpush1.bf16.msra.mxu0 0
        %2883 = vmatprep.subr.bf16.mxu0 0
        %2884 = vmatpush1.bf16.msra.mxu0 0
        %2885 = vmatprep.subr.bf16.mxu0 0
        %2886 = vmatpush1.bf16.msra.mxu0 0
        %2887 = vmatprep.subr.bf16.mxu0 0
        %2888 = vmatpush1.bf16.msra.mxu0 0
        %2889 = vmatprep.subr.bf16.mxu0 0
        %2890 = vmatpush1.bf16.msra.mxu0 0
        %2891 = vmatprep.subr.bf16.mxu0 0
        %2892 = vmatpush1.bf16.msra.mxu0 0
        %2893 = vmatprep.subr.bf16.mxu0 0
        %2894 = vmatpush1.bf16.msra.mxu0 0
        %2895 = vmatprep.subr.bf16.mxu0 0
        %2896 = vmatpush1.bf16.msra.mxu0 0
        %2897 = vmatprep.subr.bf16.mxu0 0
        %2898 = vmatpush1.bf16.msra.mxu0 0
        %2899 = vmatprep.subr.bf16.mxu0 0
        %2900 = vmatpush1.bf16.msra.mxu0 0
        %2901 = vmatprep.mubr.bf16.mxu0 0
        %2902 = vmatmul.mubr.bf16.gmra.mrb[0].mxu0 %v2858
        %v2903 = vpop.f32.mrb[0].mxu0
        %v2904 = vadd.f32 %v2843, %v2903
        %v2905 = vpop.f32.mrb[0].mxu0
        %v2906 = vpop.f32.mrb[0].mxu0
        %v2907 = vadd.f32 %v2843, %v2906
        %v2908 = vpop.f32.mrb[0].mxu0
        %2909 = vmatprep.mubr.bf16.mxu0 0
        %2910 = vmatmul.mubr.bf16.gmra.mrb[0].mxu0 %v2861
        %v2911 = vpop.f32.mrb[0].mxu0
        %v2912 = vadd.f32 %v2843, %v2911
        %v2913 = vpop.f32.mrb[0].mxu0
        %v2914 = vpop.f32.mrb[0].mxu0
        %v2915 = vadd.f32 %v2843, %v2914
        %v2916 = vpop.f32.mrb[0].mxu0
        %2917 = vmatprep.mubr.bf16.mxu0 0
        %2918 = vmatmul.mubr.bf16.gmra.mrb[0].mxu0 %v2864
        %v2919 = vpop.f32.mrb[0].mxu0
        %v2920 = vadd.f32 %v2843, %v2919
        %v2921 = vpop.f32.mrb[0].mxu0
        %v2922 = vpop.f32.mrb[0].mxu0
        %v2923 = vadd.f32 %v2843, %v2922
        %v2924 = vpop.f32.mrb[0].mxu0
        %2925 = vmatprep.mubr.bf16.mxu0 0
        %2926 = vmatmul.mubr.bf16.gmra.mrb[0].mxu0 %v2867
        %v2927 = vpop.f32.mrb[0].mxu0
        %v2928 = vadd.f32 %v2843, %v2927
        %v2929 = vpop.f32.mrb[0].mxu0
        %v2930 = vpop.f32.mrb[0].mxu0
        %v2931 = vadd.f32 %v2843, %v2930
        %v2932 = vpop.f32.mrb[0].mxu0
        %2933 = vdwg.mxu0
        %v2934 = vpack.c.bf16 %v2907, %v2904
        %v2935 = vpack.c.bf16 %v2915, %v2912
        %v2936 = vpack.c.bf16 %v2923, %v2920
        %v2937 = vpack.c.bf16 %v2931, %v2928
        %2942 = vrot.lane.b32.xlu0 %v2934, 96
        %v2943 = vpop.permute.xlu0 %2942
        %2944 = vrot.lane.b32.xlu0 %v2935, 96
        %v2945 = vpop.permute.xlu0 %2944
        %2946 = vrot.lane.b32.xlu0 %v2936, 96
        %v2947 = vpop.permute.xlu0 %2946
        %2948 = vrot.lane.b32.xlu0 %v2937, 96
        %v2949 = vpop.permute.xlu0 %2948
        %v2951 = vsel %vm563, %v2934, 0
        %v2954 = vsel %vm563, %v2935, 0
        %v2957 = vsel %vm563, %v2936, 0
        %v2960 = vsel %vm563, %v2937, 0
        %v2963 = vsel %vm563, %v2943, 0
        %v2966 = vsel %vm563, %v2945, 0
        %v2969 = vsel %vm563, %v2947, 0
        %v2972 = vsel %vm563, %v2949, 0
        %2974 = vmatprep.subr.bf16.mxu0 0
        %2975 = vmatpush1.bf16.xpose.msra.mxu0 %v2963
        %2976 = vmatprep.subr.bf16.mxu0 0
        %2977 = vmatpush1.bf16.xpose.msra.mxu0 %v2966
        %2978 = vmatprep.subr.bf16.mxu0 0
        %2979 = vmatpush1.bf16.xpose.msra.mxu0 %v2969
        %2980 = vmatprep.subr.bf16.mxu0 0
        %2981 = vmatpush1.bf16.xpose.msra.mxu0 %v2972
        %2982 = vmatprep.subr.bf16.mxu0 0
        %2983 = vmatpush1.bf16.xpose.msra.mxu0 0
        %2984 = vmatprep.subr.bf16.mxu0 0
        %2985 = vmatpush1.bf16.xpose.msra.mxu0 0
        %2986 = vmatprep.subr.bf16.mxu0 0
        %2987 = vmatpush1.bf16.xpose.msra.mxu0 0
        %2988 = vmatprep.subr.bf16.mxu0 0
        %2989 = vmatpush1.bf16.xpose.msra.mxu0 0
        %2990 = vmatprep.subr.bf16.mxu0 0
        %2991 = vmatpush1.bf16.xpose.msra.mxu0 0
        %2992 = vmatprep.subr.bf16.mxu0 0
        %2993 = vmatpush1.bf16.xpose.msra.mxu0 0
        %2994 = vmatprep.subr.bf16.mxu0 0
        %2995 = vmatpush1.bf16.xpose.msra.mxu0 0
        %2996 = vmatprep.subr.bf16.mxu0 0
        %2997 = vmatpush1.bf16.xpose.msra.mxu0 0
        %2998 = vmatprep.subr.bf16.mxu0 0
        %2999 = vmatpush1.bf16.xpose.msra.mxu0 0
        %3000 = vmatprep.subr.bf16.mxu0 0
        %3001 = vmatpush1.bf16.xpose.msra.mxu0 0
        %3002 = vmatprep.subr.bf16.mxu0 0
        %3003 = vmatpush1.bf16.xpose.msra.mxu0 0
        %3004 = vmatprep.subr.bf16.mxu0 0
        %3005 = vmatpush1.bf16.xpose.msra.mxu0 0
        %3006 = vmatprep.mubr.bf16.mxu0 0
        %3007 = vmatmul.mubr.bf16.gmra.mrb[0].mxu0 %v2951
        %v3008 = vpop.f32.mrb[0].mxu0
        %v3009 = vadd.f32 0.0, %v3008
        %v3010 = vpop.f32.mrb[0].mxu0
        %v3011 = vpop.f32.mrb[0].mxu0
        %v3012 = vadd.f32 0.0, %v3011
        %v3013 = vpop.f32.mrb[0].mxu0
        %3014 = vmatprep.mubr.bf16.mxu0 0
        %3015 = vmatmul.mubr.bf16.gmra.mrb[0].mxu0 %v2954
        %v3016 = vpop.f32.mrb[0].mxu0
        %v3017 = vadd.f32 0.0, %v3016
        %v3018 = vpop.f32.mrb[0].mxu0
        %v3019 = vpop.f32.mrb[0].mxu0
        %v3020 = vadd.f32 0.0, %v3019
        %v3021 = vpop.f32.mrb[0].mxu0
        %3022 = vmatprep.mubr.bf16.mxu0 0
        %3023 = vmatmul.mubr.bf16.gmra.mrb[0].mxu0 %v2957
        %v3024 = vpop.f32.mrb[0].mxu0
        %v3025 = vadd.f32 0.0, %v3024
        %v3026 = vpop.f32.mrb[0].mxu0
        %v3027 = vpop.f32.mrb[0].mxu0
        %v3028 = vadd.f32 0.0, %v3027
        %v3029 = vpop.f32.mrb[0].mxu0
        %3030 = vmatprep.mubr.bf16.mxu0 0
        %3031 = vmatmul.mubr.bf16.gmra.mrb[0].mxu0 %v2960
        %v3032 = vpop.f32.mrb[0].mxu0
        %v3033 = vadd.f32 0.0, %v3032
        %v3034 = vpop.f32.mrb[0].mxu0
        %v3035 = vpop.f32.mrb[0].mxu0
        %v3036 = vadd.f32 0.0, %v3035
        %v3037 = vpop.f32.mrb[0].mxu0
        %3038 = vdwg.mxu0
        %v3039 = vsel %vm1286, %v3009, -inf
        %3040 = vmax.xlane.f32.xlu0 %v3039
        %v3041 = vpop.xlane.xlu0 %3040
        %v3042 = vsel %vm1286, %v3012, -inf
        %3043 = vmax.xlane.f32.xlu0 %v3042
        %v3044 = vpop.xlane.xlu0 %3043
        %v3045 = vsel %vm1286, %v3017, -inf
        %3046 = vmax.xlane.f32.xlu0 %v3045
        %v3047 = vpop.xlane.xlu0 %3046
        %v3048 = vsel %vm1286, %v3020, -inf
        %3049 = vmax.xlane.f32.xlu0 %v3048
        %v3050 = vpop.xlane.xlu0 %3049
        %v3051 = vsel %vm1286, %v3025, -inf
        %3052 = vmax.xlane.f32.xlu0 %v3051
        %v3053 = vpop.xlane.xlu0 %3052
        %v3054 = vsel %vm1286, %v3028, -inf
        %3055 = vmax.xlane.f32.xlu0 %v3054
        %v3056 = vpop.xlane.xlu0 %3055
        %v3057 = vsel %vm1286, %v3033, -inf
        %3058 = vmax.xlane.f32.xlu0 %v3057
        %v3059 = vpop.xlane.xlu0 %3058
        %v3060 = vsel %vm1286, %v3036, -inf
        %3061 = vmax.xlane.f32.xlu0 %v3060
        %v3062 = vpop.xlane.xlu0 %3061
        %v3063 = vsub.f32 %v3009, %v3041
        %v3064 = vsub.f32 %v3012, %v3044
        %v3065 = vsub.f32 %v3017, %v3047
        %v3066 = vsub.f32 %v3020, %v3050
        %v3067 = vsub.f32 %v3025, %v3053
        %v3068 = vsub.f32 %v3028, %v3056
        %v3069 = vsub.f32 %v3033, %v3059
        %v3070 = vsub.f32 %v3036, %v3062
        %v3071 = vmul.f32 %v3063, 1.442695
        %v3072 = vpow.pop %v3071
        %v3073 = vmul.f32 %v3064, 1.442695
        %v3074 = vpow.pop %v3073
        %v3075 = vmul.f32 %v3065, 1.442695
        %v3076 = vpow.pop %v3075
        %v3077 = vmul.f32 %v3066, 1.442695
        %v3078 = vpow.pop %v3077
        %v3079 = vmul.f32 %v3067, 1.442695
        %v3080 = vpow.pop %v3079
        %v3081 = vmul.f32 %v3068, 1.442695
        %v3082 = vpow.pop %v3081
        %v3083 = vmul.f32 %v3069, 1.442695
        %v3084 = vpow.pop %v3083
        %v3085 = vmul.f32 %v3070, 1.442695
        %v3086 = vpow.pop %v3085
        %v3087 = vsel %vm1286, %v3072, 0.0
        %3088 = vadd.xlane.f32.xlu0 %v3087
        %v3089 = vpop.xlane.xlu0 %3088
        %v3090 = vsel %vm1286, %v3074, 0.0
        %3091 = vadd.xlane.f32.xlu0 %v3090
        %v3092 = vpop.xlane.xlu0 %3091
        %v3093 = vsel %vm1286, %v3076, 0.0
        %3094 = vadd.xlane.f32.xlu0 %v3093
        %v3095 = vpop.xlane.xlu0 %3094
        %v3096 = vsel %vm1286, %v3078, 0.0
        %3097 = vadd.xlane.f32.xlu0 %v3096
        %v3098 = vpop.xlane.xlu0 %3097
        %v3099 = vsel %vm1286, %v3080, 0.0
        %3100 = vadd.xlane.f32.xlu0 %v3099
        %v3101 = vpop.xlane.xlu0 %3100
        %v3102 = vsel %vm1286, %v3082, 0.0
        %3103 = vadd.xlane.f32.xlu0 %v3102
        %v3104 = vpop.xlane.xlu0 %3103
        %v3105 = vsel %vm1286, %v3084, 0.0
        %3106 = vadd.xlane.f32.xlu0 %v3105
        %v3107 = vpop.xlane.xlu0 %3106
        %v3108 = vsel %vm1286, %v3086, 0.0
        %3109 = vadd.xlane.f32.xlu0 %v3108
        %v3110 = vpop.xlane.xlu0 %3109
        %v3111 = vrcp.pop %v3089
        %v3112 = vrcp.pop %v3092
        %v3113 = vrcp.pop %v3095
        %v3114 = vrcp.pop %v3098
        %v3115 = vrcp.pop %v3101
        %v3116 = vrcp.pop %v3104
        %v3117 = vrcp.pop %v3107
        %v3118 = vrcp.pop %v3110
        %v3119 = vmul.f32 %v3072, %v3111
        %v3120 = vmul.f32 %v3074, %v3112
        %v3121 = vmul.f32 %v3076, %v3113
        %v3122 = vmul.f32 %v3078, %v3114
        %v3123 = vmul.f32 %v3080, %v3115
        %v3124 = vmul.f32 %v3082, %v3116
        %v3125 = vmul.f32 %v3084, %v3117
        %v3126 = vmul.f32 %v3086, %v3118
        %v3127 = vpack.c.bf16 %v3120, %v3119
        %v3128 = vpack.c.bf16 %v3122, %v3121
        %v3129 = vpack.c.bf16 %v3124, %v3123
        %v3130 = vpack.c.bf16 %v3126, %v3125
        %3131 = vrot.lane.b32.xlu0 %v2934, 64
        %v3132 = vpop.permute.xlu0 %3131
        %3133 = vrot.lane.b32.xlu0 %v2935, 64
        %v3134 = vpop.permute.xlu0 %3133
        %3135 = vrot.lane.b32.xlu0 %v2936, 64
        %v3136 = vpop.permute.xlu0 %3135
        %3137 = vrot.lane.b32.xlu0 %v2937, 64
        %v3138 = vpop.permute.xlu0 %3137
        %v3144 = vsel %vm1286, %v3127, 0
        %v3147 = vsel %vm1286, %v3128, 0
        %v3150 = vsel %vm1286, %v3129, 0
        %v3153 = vsel %vm1286, %v3130, 0
        %3155 = vmatprep.subr.bf16.mxu0 0
        %3156 = vmatpush1.bf16.msra.mxu0 %v3132
        %3157 = vmatprep.subr.bf16.mxu0 0
        %3158 = vmatpush1.bf16.msra.mxu0 %v3134
        %3159 = vmatprep.subr.bf16.mxu0 0
        %3160 = vmatpush1.bf16.msra.mxu0 %v3136
        %3161 = vmatprep.subr.bf16.mxu0 0
        %3162 = vmatpush1.bf16.msra.mxu0 %v3138
        %3163 = vmatprep.subr.bf16.mxu0 0
        %3164 = vmatpush1.bf16.msra.mxu0 0
        %3165 = vmatprep.subr.bf16.mxu0 0
        %3166 = vmatpush1.bf16.msra.mxu0 0
        %3167 = vmatprep.subr.bf16.mxu0 0
        %3168 = vmatpush1.bf16.msra.mxu0 0
        %3169 = vmatprep.subr.bf16.mxu0 0
        %3170 = vmatpush1.bf16.msra.mxu0 0
        %3171 = vmatprep.subr.bf16.mxu0 0
        %3172 = vmatpush1.bf16.msra.mxu0 0
        %3173 = vmatprep.subr.bf16.mxu0 0
        %3174 = vmatpush1.bf16.msra.mxu0 0
        %3175 = vmatprep.subr.bf16.mxu0 0
        %3176 = vmatpush1.bf16.msra.mxu0 0
        %3177 = vmatprep.subr.bf16.mxu0 0
        %3178 = vmatpush1.bf16.msra.mxu0 0
        %3179 = vmatprep.subr.bf16.mxu0 0
        %3180 = vmatpush1.bf16.msra.mxu0 0
        %3181 = vmatprep.subr.bf16.mxu0 0
        %3182 = vmatpush1.bf16.msra.mxu0 0
        %3183 = vmatprep.subr.bf16.mxu0 0
        %3184 = vmatpush1.bf16.msra.mxu0 0
        %3185 = vmatprep.subr.bf16.mxu0 0
        %3186 = vmatpush1.bf16.msra.mxu0 0
        %3187 = vmatprep.mubr.bf16.mxu0 0
        %3188 = vmatmul.mubr.bf16.gmra.mrb[0].mxu0 %v3144
        %v3189 = vpop.f32.mrb[0].mxu0
        %v3190 = vadd.f32 0.0, %v3189
        %v3191 = vpop.f32.mrb[0].mxu0
        %v3192 = vpop.f32.mrb[0].mxu0
        %v3193 = vadd.f32 0.0, %v3192
        %v3194 = vpop.f32.mrb[0].mxu0
        %3195 = vmatprep.mubr.bf16.mxu0 0
        %3196 = vmatmul.mubr.bf16.gmra.mrb[0].mxu0 %v3147
        %v3197 = vpop.f32.mrb[0].mxu0
        %v3198 = vadd.f32 0.0, %v3197
        %v3199 = vpop.f32.mrb[0].mxu0
        %v3200 = vpop.f32.mrb[0].mxu0
        %v3201 = vadd.f32 0.0, %v3200
        %v3202 = vpop.f32.mrb[0].mxu0
        %3203 = vmatprep.mubr.bf16.mxu0 0
        %3204 = vmatmul.mubr.bf16.gmra.mrb[0].mxu0 %v3150
        %v3205 = vpop.f32.mrb[0].mxu0
        %v3206 = vadd.f32 0.0, %v3205
        %v3207 = vpop.f32.mrb[0].mxu0
        %v3208 = vpop.f32.mrb[0].mxu0
        %v3209 = vadd.f32 0.0, %v3208
        %v3210 = vpop.f32.mrb[0].mxu0
        %3211 = vmatprep.mubr.bf16.mxu0 0
        %3212 = vmatmul.mubr.bf16.gmra.mrb[0].mxu0 %v3153
        %v3213 = vpop.f32.mrb[0].mxu0
        %v3214 = vadd.f32 0.0, %v3213
        %v3215 = vpop.f32.mrb[0].mxu0
        %v3216 = vpop.f32.mrb[0].mxu0
        %v3217 = vadd.f32 0.0, %v3216
        %v3218 = vpop.f32.mrb[0].mxu0
        %3219 = vdwg.mxu0
        %v3220 = vpack.c.bf16 %v3193, %v3190
        %v3221 = vpack.c.bf16 %v3201, %v3198
        %v3222 = vpack.c.bf16 %v3209, %v3206
        %v3223 = vpack.c.bf16 %v3217, %v3214
        %v3224 = vld [vmem:[#allocation18] sm:$0xf]
        %v3225 = vld [vmem:[#allocation18 + $0x4] sm:$0xf]
        %v3226 = vld [vmem:[#allocation18 + $0x8] sm:$0xf]
        %v3227 = vld [vmem:[#allocation18 + $0xc] sm:$0xf]
        %v3228 = vld [vmem:[#allocation20] sm:$0x1]
        %v3230 = vlaneseq
        %v3231 = vshrl.u32 %v3230, 7
        %v3232 = vsub.s32 0, %v3231
        %v3233 = vrot.slane %v3228, %v3232
        %v3239 = vunpack.c.l.b16 %v3224
        %v3240 = vunpack.c.l.b16 %v3225
        %v3241 = vunpack.c.l.b16 %v3226
        %v3242 = vunpack.c.l.b16 %v3227
        %v3243 = vpack.c.b16 %v3240, %v3239
        %v3244 = vpack.c.b16 %v3242, %v3241
        %v3248 = vsel %vm563, %v3220, 0
        %v3251 = vsel %vm563, %v3221, 0
        %v3254 = vsel %vm563, %v3222, 0
        %v3257 = vsel %vm563, %v3223, 0
        %3259 = vmatprep.subr.bf16.mxu0 0
        %3260 = vmatpush1.bf16.msra.mxu0 %v3243
        %3261 = vmatprep.subr.bf16.mxu0 0
        %3262 = vmatpush1.bf16.msra.mxu0 %v3244
        %3263 = vmatprep.subr.bf16.mxu0 0
        %3264 = vmatpush1.bf16.msra.mxu0 0
        %3265 = vmatprep.subr.bf16.mxu0 0
        %3266 = vmatpush1.bf16.msra.mxu0 0
        %3267 = vmatprep.subr.bf16.mxu0 0
        %3268 = vmatpush1.bf16.msra.mxu0 0
        %3269 = vmatprep.subr.bf16.mxu0 0
        %3270 = vmatpush1.bf16.msra.mxu0 0
        %3271 = vmatprep.subr.bf16.mxu0 0
        %3272 = vmatpush1.bf16.msra.mxu0 0
        %3273 = vmatprep.subr.bf16.mxu0 0
        %3274 = vmatpush1.bf16.msra.mxu0 0
        %3275 = vmatprep.subr.bf16.mxu0 0
        %3276 = vmatpush1.bf16.msra.mxu0 0
        %3277 = vmatprep.subr.bf16.mxu0 0
        %3278 = vmatpush1.bf16.msra.mxu0 0
        %3279 = vmatprep.subr.bf16.mxu0 0
        %3280 = vmatpush1.bf16.msra.mxu0 0
        %3281 = vmatprep.subr.bf16.mxu0 0
        %3282 = vmatpush1.bf16.msra.mxu0 0
        %3283 = vmatprep.subr.bf16.mxu0 0
        %3284 = vmatpush1.bf16.msra.mxu0 0
        %3285 = vmatprep.subr.bf16.mxu0 0
        %3286 = vmatpush1.bf16.msra.mxu0 0
        %3287 = vmatprep.subr.bf16.mxu0 0
        %3288 = vmatpush1.bf16.msra.mxu0 0
        %3289 = vmatprep.subr.bf16.mxu0 0
        %3290 = vmatpush1.bf16.msra.mxu0 0
        %3291 = vmatprep.mubr.bf16.mxu0 0
        %3292 = vmatmul.mubr.bf16.gmra.mrb[0].mxu0 %v3248
        %v3293 = vpop.f32.mrb[0].mxu0
        %v3294 = vadd.f32 %v3233, %v3293
        %v3295 = vpop.f32.mrb[0].mxu0
        %v3296 = vpop.f32.mrb[0].mxu0
        %v3297 = vadd.f32 %v3233, %v3296
        %v3298 = vpop.f32.mrb[0].mxu0
        %3299 = vmatprep.mubr.bf16.mxu0 0
        %3300 = vmatmul.mubr.bf16.gmra.mrb[0].mxu0 %v3251
        %v3301 = vpop.f32.mrb[0].mxu0
        %v3302 = vadd.f32 %v3233, %v3301
        %v3303 = vpop.f32.mrb[0].mxu0
        %v3304 = vpop.f32.mrb[0].mxu0
        %v3305 = vadd.f32 %v3233, %v3304
        %v3306 = vpop.f32.mrb[0].mxu0
        %3307 = vmatprep.mubr.bf16.mxu0 0
        %3308 = vmatmul.mubr.bf16.gmra.mrb[0].mxu0 %v3254
        %v3309 = vpop.f32.mrb[0].mxu0
        %v3310 = vadd.f32 %v3233, %v3309
        %v3311 = vpop.f32.mrb[0].mxu0
        %v3312 = vpop.f32.mrb[0].mxu0
        %v3313 = vadd.f32 %v3233, %v3312
        %v3314 = vpop.f32.mrb[0].mxu0
        %3315 = vmatprep.mubr.bf16.mxu0 0
        %3316 = vmatmul.mubr.bf16.gmra.mrb[0].mxu0 %v3257
        %v3317 = vpop.f32.mrb[0].mxu0
        %v3318 = vadd.f32 %v3233, %v3317
        %v3319 = vpop.f32.mrb[0].mxu0
        %v3320 = vpop.f32.mrb[0].mxu0
        %v3321 = vadd.f32 %v3233, %v3320
        %v3322 = vpop.f32.mrb[0].mxu0
        %3323 = vdwg.mxu0
        %v3324 = vadd.f32 %v2573, %v3294
        %v3325 = vadd.f32 %v2574, %v3297
        %v3326 = vadd.f32 %v2575, %v3302
        %v3327 = vadd.f32 %v2576, %v3305
        %v3328 = vadd.f32 %v2577, %v3310
        %v3329 = vadd.f32 %v2578, %v3313
        %v3330 = vadd.f32 %v2579, %v3318
        %v3331 = vadd.f32 %v2580, %v3321
        %v3332 = vld [vmem:[#allocation9 + $0x3] sm:$0x1]
        %v3333 = vld [vmem:[#allocation11 + $0x3] sm:$0x1]
        %v3334 = vsel %vm563, %v3324, 0.0
        %v3335 = vsel %vm563, %v3325, 0.0
        %v3336 = vadd.f32 %v3334, %v3335
        %v3337 = vsel %vm563, %v3326, 0.0
        %v3338 = vadd.f32 %v3336, %v3337
        %v3339 = vsel %vm563, %v3327, 0.0
        %v3340 = vadd.f32 %v3338, %v3339
        %v3341 = vsel %vm563, %v3328, 0.0
        %v3342 = vadd.f32 %v3340, %v3341
        %v3343 = vsel %vm563, %v3329, 0.0
        %v3344 = vadd.f32 %v3342, %v3343
        %v3345 = vsel %vm563, %v3330, 0.0
        %v3346 = vadd.f32 %v3344, %v3345
        %v3347 = vsel %vm563, %v3331, 0.0
        %v3348 = vadd.f32 %v3346, %v3347
        %v3349 = vrot.slane %v3348, 4
        %v3350 = vadd.f32 %v3348, %v3349
        %v3351 = vrot.slane %v3350, 2
        %v3352 = vadd.f32 %v3350, %v3351
        %v3353 = vrot.slane %v3352, 1
        %v3354 = vadd.f32 %v3352, %v3353
        %v3355 = vmul.f32 %v3354, 0.015625
        %v3357 = vsel %vm563, %v3355, 0
        %3359 = vmatprep.subr.mxu0 0.0
        %3360 = vmatpush1.msra.mxu0 %v689
        %3361 = vmatprep.subr.mxu0 0.0
        %3362 = vmatpush1.msra.mxu0 %v690
        %3363 = vmatprep.subr.mxu0 0.0
        %3364 = vmatpush1.msra.mxu0 %v691
        %3365 = vmatprep.subr.mxu0 0.0
        %3366 = vmatpush1.msra.mxu0 %v692
        %3367 = vmatprep.subr.mxu0 0.0
        %3368 = vmatpush1.msra.mxu0 0.0
        %3369 = vmatprep.subr.mxu0 0.0
        %3370 = vmatpush1.msra.mxu0 0.0
        %3371 = vmatprep.subr.mxu0 0.0
        %3372 = vmatpush1.msra.mxu0 0.0
        %3373 = vmatprep.subr.mxu0 0.0
        %3374 = vmatpush1.msra.mxu0 0.0
        %3375 = vmatprep.subr.mxu0 0.0
        %3376 = vmatpush1.msra.mxu0 0.0
        %3377 = vmatprep.subr.mxu0 0.0
        %3378 = vmatpush1.msra.mxu0 0.0
        %3379 = vmatprep.subr.mxu0 0.0
        %3380 = vmatpush1.msra.mxu0 0.0
        %3381 = vmatprep.subr.mxu0 0.0
        %3382 = vmatpush1.msra.mxu0 0.0
        %3383 = vmatprep.subr.mxu0 0.0
        %3384 = vmatpush1.msra.mxu0 0.0
        %3385 = vmatprep.subr.mxu0 0.0
        %3386 = vmatpush1.msra.mxu0 0.0
        %3387 = vmatprep.subr.mxu0 0.0
        %3388 = vmatpush1.msra.mxu0 0.0
        %3389 = vmatprep.subr.mxu0 0.0
        %3390 = vmatpush1.msra.mxu0 0.0
        %3391 = vmatprep.subr.mxu0 0.0
        %3392 = vmatpush1.msra.mxu0 0.0
        %3393 = vmatprep.subr.mxu0 0.0
        %3394 = vmatpush1.msra.mxu0 0.0
        %3395 = vmatprep.subr.mxu0 0.0
        %3396 = vmatpush1.msra.mxu0 0.0
        %3397 = vmatprep.subr.mxu0 0.0
        %3398 = vmatpush1.msra.mxu0 0.0
        %3399 = vmatprep.subr.mxu0 0.0
        %3400 = vmatpush1.msra.mxu0 0.0
        %3401 = vmatprep.subr.mxu0 0.0
        %3402 = vmatpush1.msra.mxu0 0.0
        %3403 = vmatprep.subr.mxu0 0.0
        %3404 = vmatpush1.msra.mxu0 0.0
        %3405 = vmatprep.subr.mxu0 0.0
        %3406 = vmatpush1.msra.mxu0 0.0
        %3407 = vmatprep.subr.mxu0 0.0
        %3408 = vmatpush1.msra.mxu0 0.0
        %3409 = vmatprep.subr.mxu0 0.0
        %3410 = vmatpush1.msra.mxu0 0.0
        %3411 = vmatprep.subr.mxu0 0.0
        %3412 = vmatpush1.msra.mxu0 0.0
        %3413 = vmatprep.subr.mxu0 0.0
        %3414 = vmatpush1.msra.mxu0 0.0
        %3415 = vmatprep.subr.mxu0 0.0
        %3416 = vmatpush1.msra.mxu0 0.0
        %3417 = vmatprep.subr.mxu0 0.0
        %3418 = vmatpush1.msra.mxu0 0.0
        %3419 = vmatprep.subr.mxu0 0.0
        %3420 = vmatpush1.msra.mxu0 0.0
        %3421 = vmatprep.subr.mxu0 0.0
        %3422 = vmatpush1.msra.mxu0 0.0
        %3423 = vmatprep.mubr.f32.mxu0 0.0
        %3424 = vmatmul.mubr.f32.gmra.mrb[0].mxu0 %v3357
        %v3425 = vpop.f32.mrb[0].mxu0
        %v3426 = vadd.f32 0.0, %v3425
        %v3427 = vpop.f32.mrb[0].mxu0
        %3428 = vdwg.mxu0
        %v3429 = vlaneseq
        %v3430 = vshrl.u32 %v3429, 7
        %v3431 = vsub.s32 0, %v3430
        %v3432 = vrot.slane %v3426, %v3431
        %v3433 = vsub.f32 %v3324, %v3432
        %v3434 = vsub.f32 %v3325, %v3432
        %v3435 = vsub.f32 %v3326, %v3432
        %v3436 = vsub.f32 %v3327, %v3432
        %v3437 = vsub.f32 %v3328, %v3432
        %v3438 = vsub.f32 %v3329, %v3432
        %v3439 = vsub.f32 %v3330, %v3432
        %v3440 = vsub.f32 %v3331, %v3432
        %v3441 = vmul.f32 %v3433, %v3433
        %v3442 = vmul.f32 %v3434, %v3434
        %v3443 = vmul.f32 %v3435, %v3435
        %v3444 = vmul.f32 %v3436, %v3436
        %v3445 = vmul.f32 %v3437, %v3437
        %v3446 = vmul.f32 %v3438, %v3438
        %v3447 = vmul.f32 %v3439, %v3439
        %v3448 = vmul.f32 %v3440, %v3440
        %v3449 = vsel %vm563, %v3441, 0.0
        %v3450 = vsel %vm563, %v3442, 0.0
        %v3451 = vadd.f32 %v3449, %v3450
        %v3452 = vsel %vm563, %v3443, 0.0
        %v3453 = vadd.f32 %v3451, %v3452
        %v3454 = vsel %vm563, %v3444, 0.0
        %v3455 = vadd.f32 %v3453, %v3454
        %v3456 = vsel %vm563, %v3445, 0.0
        %v3457 = vadd.f32 %v3455, %v3456
        %v3458 = vsel %vm563, %v3446, 0.0
        %v3459 = vadd.f32 %v3457, %v3458
        %v3460 = vsel %vm563, %v3447, 0.0
        %v3461 = vadd.f32 %v3459, %v3460
        %v3462 = vsel %vm563, %v3448, 0.0
        %v3463 = vadd.f32 %v3461, %v3462
        %v3464 = vrot.slane %v3463, 4
        %v3465 = vadd.f32 %v3463, %v3464
        %v3466 = vrot.slane %v3465, 2
        %v3467 = vadd.f32 %v3465, %v3466
        %v3468 = vrot.slane %v3467, 1
        %v3469 = vadd.f32 %v3467, %v3468
        %v3470 = vmul.f32 %v3469, 0.015625
        %v3472 = vsel %vm563, %v3470, 0
        %3474 = vmatprep.subr.mxu0 0.0
        %3475 = vmatpush1.msra.mxu0 %v689
        %3476 = vmatprep.subr.mxu0 0.0
        %3477 = vmatpush1.msra.mxu0 %v690
        %3478 = vmatprep.subr.mxu0 0.0
        %3479 = vmatpush1.msra.mxu0 %v691
        %3480 = vmatprep.subr.mxu0 0.0
        %3481 = vmatpush1.msra.mxu0 %v692
        %3482 = vmatprep.subr.mxu0 0.0
        %3483 = vmatpush1.msra.mxu0 0.0
        %3484 = vmatprep.subr.mxu0 0.0
        %3485 = vmatpush1.msra.mxu0 0.0
        %3486 = vmatprep.subr.mxu0 0.0
        %3487 = vmatpush1.msra.mxu0 0.0
        %3488 = vmatprep.subr.mxu0 0.0
        %3489 = vmatpush1.msra.mxu0 0.0
        %3490 = vmatprep.subr.mxu0 0.0
        %3491 = vmatpush1.msra.mxu0 0.0
        %3492 = vmatprep.subr.mxu0 0.0
        %3493 = vmatpush1.msra.mxu0 0.0
        %3494 = vmatprep.subr.mxu0 0.0
        %3495 = vmatpush1.msra.mxu0 0.0
        %3496 = vmatprep.subr.mxu0 0.0
        %3497 = vmatpush1.msra.mxu0 0.0
        %3498 = vmatprep.subr.mxu0 0.0
        %3499 = vmatpush1.msra.mxu0 0.0
        %3500 = vmatprep.subr.mxu0 0.0
        %3501 = vmatpush1.msra.mxu0 0.0
        %3502 = vmatprep.subr.mxu0 0.0
        %3503 = vmatpush1.msra.mxu0 0.0
        %3504 = vmatprep.subr.mxu0 0.0
        %3505 = vmatpush1.msra.mxu0 0.0
        %3506 = vmatprep.subr.mxu0 0.0
        %3507 = vmatpush1.msra.mxu0 0.0
        %3508 = vmatprep.subr.mxu0 0.0
        %3509 = vmatpush1.msra.mxu0 0.0
        %3510 = vmatprep.subr.mxu0 0.0
        %3511 = vmatpush1.msra.mxu0 0.0
        %3512 = vmatprep.subr.mxu0 0.0
        %3513 = vmatpush1.msra.mxu0 0.0
        %3514 = vmatprep.subr.mxu0 0.0
        %3515 = vmatpush1.msra.mxu0 0.0
        %3516 = vmatprep.subr.mxu0 0.0
        %3517 = vmatpush1.msra.mxu0 0.0
        %3518 = vmatprep.subr.mxu0 0.0
        %3519 = vmatpush1.msra.mxu0 0.0
        %3520 = vmatprep.subr.mxu0 0.0
        %3521 = vmatpush1.msra.mxu0 0.0
        %3522 = vmatprep.subr.mxu0 0.0
        %3523 = vmatpush1.msra.mxu0 0.0
        %3524 = vmatprep.subr.mxu0 0.0
        %3525 = vmatpush1.msra.mxu0 0.0
        %3526 = vmatprep.subr.mxu0 0.0
        %3527 = vmatpush1.msra.mxu0 0.0
        %3528 = vmatprep.subr.mxu0 0.0
        %3529 = vmatpush1.msra.mxu0 0.0
        %3530 = vmatprep.subr.mxu0 0.0
        %3531 = vmatpush1.msra.mxu0 0.0
        %3532 = vmatprep.subr.mxu0 0.0
        %3533 = vmatpush1.msra.mxu0 0.0
        %3534 = vmatprep.subr.mxu0 0.0
        %3535 = vmatpush1.msra.mxu0 0.0
        %3536 = vmatprep.subr.mxu0 0.0
        %3537 = vmatpush1.msra.mxu0 0.0
        %3538 = vmatprep.mubr.f32.mxu0 0.0
        %3539 = vmatmul.mubr.f32.gmra.mrb[0].mxu0 %v3472
        %v3540 = vpop.f32.mrb[0].mxu0
        %v3541 = vadd.f32 1e-05, %v3540
        %v3542 = vpop.f32.mrb[0].mxu0
        %3543 = vdwg.mxu0
        %v3544 = vrsqrt.pop %v3541
        %v3545 = vlaneseq
        %v3546 = vshrl.u32 %v3545, 7
        %v3547 = vsub.s32 0, %v3546
        %v3548 = vrot.slane %v3544, %v3547
        %v3549 = vmul.f32 %v3433, %v3548
        %v3550 = vmul.f32 %v3434, %v3548
        %v3551 = vmul.f32 %v3435, %v3548
        %v3552 = vmul.f32 %v3436, %v3548
        %v3553 = vmul.f32 %v3437, %v3548
        %v3554 = vmul.f32 %v3438, %v3548
        %v3555 = vmul.f32 %v3439, %v3548
        %v3556 = vmul.f32 %v3440, %v3548
        %v3557 = vlaneseq
        %v3558 = vshrl.u32 %v3557, 7
        %v3559 = vsub.s32 0, %v3558
        %v3560 = vrot.slane %v3332, %v3559
        %v3561 = vmul.f32 %v3549, %v3560
        %v3562 = vmul.f32 %v3550, %v3560
        %v3563 = vmul.f32 %v3551, %v3560
        %v3564 = vmul.f32 %v3552, %v3560
        %v3565 = vmul.f32 %v3553, %v3560
        %v3566 = vmul.f32 %v3554, %v3560
        %v3567 = vmul.f32 %v3555, %v3560
        %v3568 = vmul.f32 %v3556, %v3560
        %v3569 = vlaneseq
        %v3570 = vshrl.u32 %v3569, 7
        %v3571 = vsub.s32 0, %v3570
        %v3572 = vrot.slane %v3333, %v3571
        %v3573 = vadd.f32 %v3561, %v3572
        %v3574 = vadd.f32 %v3562, %v3572
        %v3575 = vadd.f32 %v3563, %v3572
        %v3576 = vadd.f32 %v3564, %v3572
        %v3577 = vadd.f32 %v3565, %v3572
        %v3578 = vadd.f32 %v3566, %v3572
        %v3579 = vadd.f32 %v3567, %v3572
        %v3580 = vadd.f32 %v3568, %v3572
        %v3581 = vxor.u32 %v3573, 2147483648
        %v3582 = vxor.u32 %v3574, 2147483648
        %v3583 = vxor.u32 %v3575, 2147483648
        %v3584 = vxor.u32 %v3576, 2147483648
        %v3585 = vxor.u32 %v3577, 2147483648
        %v3586 = vxor.u32 %v3578, 2147483648
        %v3587 = vxor.u32 %v3579, 2147483648
        %v3588 = vxor.u32 %v3580, 2147483648
        %v3589 = vmul.f32 %v3581, 1.442695
        %v3590 = vpow.pop %v3589
        %v3591 = vmul.f32 %v3582, 1.442695
        %v3592 = vpow.pop %v3591
        %v3593 = vmul.f32 %v3583, 1.442695
        %v3594 = vpow.pop %v3593
        %v3595 = vmul.f32 %v3584, 1.442695
        %v3596 = vpow.pop %v3595
        %v3597 = vmul.f32 %v3585, 1.442695
        %v3598 = vpow.pop %v3597
        %v3599 = vmul.f32 %v3586, 1.442695
        %v3600 = vpow.pop %v3599
        %v3601 = vmul.f32 %v3587, 1.442695
        %v3602 = vpow.pop %v3601
        %v3603 = vmul.f32 %v3588, 1.442695
        %v3604 = vpow.pop %v3603
        %v3605 = vadd.f32 %v3590, 1.0
        %v3606 = vadd.f32 %v3592, 1.0
        %v3607 = vadd.f32 %v3594, 1.0
        %v3608 = vadd.f32 %v3596, 1.0
        %v3609 = vadd.f32 %v3598, 1.0
        %v3610 = vadd.f32 %v3600, 1.0
        %v3611 = vadd.f32 %v3602, 1.0
        %v3612 = vadd.f32 %v3604, 1.0
        %v3613 = vrcp.pop %v3605
        %v3614 = vmul.f32 1.0, %v3613
        %v3615 = vrcp.pop %v3606
        %v3616 = vmul.f32 1.0, %v3615
        %v3617 = vrcp.pop %v3607
        %v3618 = vmul.f32 1.0, %v3617
        %v3619 = vrcp.pop %v3608
        %v3620 = vmul.f32 1.0, %v3619
        %v3621 = vrcp.pop %v3609
        %v3622 = vmul.f32 1.0, %v3621
        %v3623 = vrcp.pop %v3610
        %v3624 = vmul.f32 1.0, %v3623
        %v3625 = vrcp.pop %v3611
        %v3626 = vmul.f32 1.0, %v3625
        %v3627 = vrcp.pop %v3612
        %v3628 = vmul.f32 1.0, %v3627
        %v3629 = vmul.f32 %v3573, %v3614
        %v3630 = vmul.f32 %v3574, %v3616
        %v3631 = vmul.f32 %v3575, %v3618
        %v3632 = vmul.f32 %v3576, %v3620
        %v3633 = vmul.f32 %v3577, %v3622
        %v3634 = vmul.f32 %v3578, %v3624
        %v3635 = vmul.f32 %v3579, %v3626
        %v3636 = vmul.f32 %v3580, %v3628
        %3637 = vst.msk [vmem:[#allocation2 + $0x10] sm:$0xff] %vm563, %v3629
        %3638 = vst.msk [vmem:[#allocation2 + $0x18] sm:$0xff] %vm563, %v3630
        %3639 = vst.msk [vmem:[#allocation2 + $0x20] sm:$0xff] %vm563, %v3631
        %3640 = vst.msk [vmem:[#allocation2 + $0x28] sm:$0xff] %vm563, %v3632
        %3641 = vst.msk [vmem:[#allocation2 + $0x30] sm:$0xff] %vm563, %v3633
        %3642 = vst.msk [vmem:[#allocation2 + $0x38] sm:$0xff] %vm563, %v3634
        %3643 = vst.msk [vmem:[#allocation2 + $0x40] sm:$0xff] %vm563, %v3635
        %3644 = vst.msk [vmem:[#allocation2 + $0x48] sm:$0xff] %vm563, %v3636
        %v3645 = vld [vmem:[#allocation2 + $0x7] sm:$0xff]
        %v3646 = vld [vmem:[#allocation2 + $0xf] sm:$0xff]
        %v3647 = vld [vmem:[#allocation2 + $0x17] sm:$0xff]
        %v3648 = vld [vmem:[#allocation2 + $0x1f] sm:$0xff]
        %v3649 = vld [vmem:[#allocation2 + $0x27] sm:$0xff]
        %v3650 = vld [vmem:[#allocation2 + $0x2f] sm:$0xff]
        %v3651 = vld [vmem:[#allocation2 + $0x37] sm:$0xff]
        %v3652 = vld [vmem:[#allocation2 + $0x3f] sm:$0xff]
        %v3653 = vsel %vm673, %v3645, 0.0
        %v3654 = vsel %vm674, %v3646, 0.0
        %v3655 = vsel %vm675, %v3647, 0.0
        %v3656 = vsel %vm676, %v3648, 0.0
        %v3657 = vsel %vm677, %v3649, 0.0
        %v3658 = vsel %vm678, %v3650, 0.0
        %v3659 = vsel %vm679, %v3651, 0.0
        %v3660 = vsel %vm680, %v3652, 0.0
        %v3661 = vld [vmem:[#allocation2 + $0x8] sm:$0xff]
        %v3662 = vld [vmem:[#allocation2 + $0x10] sm:$0xff]
        %v3663 = vld [vmem:[#allocation2 + $0x18] sm:$0xff]
        %v3664 = vld [vmem:[#allocation2 + $0x20] sm:$0xff]
        %v3665 = vld [vmem:[#allocation2 + $0x28] sm:$0xff]
        %v3666 = vld [vmem:[#allocation2 + $0x30] sm:$0xff]
        %v3667 = vld [vmem:[#allocation2 + $0x38] sm:$0xff]
        %v3668 = vld [vmem:[#allocation2 + $0x40] sm:$0xff]
        %v3669 = vld [vmem:[#allocation2 + $0x9] sm:$0xff]
        %v3670 = vld [vmem:[#allocation2 + $0x11] sm:$0xff]
        %v3671 = vld [vmem:[#allocation2 + $0x19] sm:$0xff]
        %v3672 = vld [vmem:[#allocation2 + $0x21] sm:$0xff]
        %v3673 = vld [vmem:[#allocation2 + $0x29] sm:$0xff]
        %v3674 = vld [vmem:[#allocation2 + $0x31] sm:$0xff]
        %v3675 = vld [vmem:[#allocation2 + $0x39] sm:$0xff]
        %v3676 = vld [vmem:[#allocation2 + $0x41] sm:$0xff]
        %v3677 = vsel %vm681, %v3669, 0.0
        %v3678 = vsel %vm682, %v3670, 0.0
        %v3679 = vsel %vm683, %v3671, 0.0
        %v3680 = vsel %vm684, %v3672, 0.0
        %v3681 = vsel %vm685, %v3673, 0.0
        %v3682 = vsel %vm686, %v3674, 0.0
        %v3683 = vsel %vm687, %v3675, 0.0
        %v3684 = vsel %vm688, %v3676, 0.0
        %v3685 = vld [vmem:[#allocation2 + $0x47] sm:$0xff]
        %v3686 = vsel %vm673, %v3646, 0.0
        %v3687 = vsel %vm674, %v3647, 0.0
        %v3688 = vsel %vm675, %v3648, 0.0
        %v3689 = vsel %vm676, %v3649, 0.0
        %v3690 = vsel %vm677, %v3650, 0.0
        %v3691 = vsel %vm678, %v3651, 0.0
        %v3692 = vsel %vm679, %v3652, 0.0
        %v3693 = vsel %vm680, %v3685, 0.0
        %v3694 = vld [vmem:[#allocation2 + $0x48] sm:$0xff]
        %v3695 = vld [vmem:[#allocation2 + $0x49] sm:$0xff]
        %v3696 = vsel %vm681, %v3670, 0.0
        %v3697 = vsel %vm682, %v3671, 0.0
        %v3698 = vsel %vm683, %v3672, 0.0
        %v3699 = vsel %vm684, %v3673, 0.0
        %v3700 = vsel %vm685, %v3674, 0.0
        %v3701 = vsel %vm686, %v3675, 0.0
        %v3702 = vsel %vm687, %v3676, 0.0
        %v3703 = vsel %vm688, %v3695, 0.0
        %v3704 = vld [vmem:[#allocation2 + $0x4f] sm:$0xff]
        %v3705 = vsel %vm673, %v3647, 0.0
        %v3706 = vsel %vm674, %v3648, 0.0
        %v3707 = vsel %vm675, %v3649, 0.0
        %v3708 = vsel %vm676, %v3650, 0.0
        %v3709 = vsel %vm677, %v3651, 0.0
        %v3710 = vsel %vm678, %v3652, 0.0
        %v3711 = vsel %vm679, %v3685, 0.0
        %v3712 = vsel %vm680, %v3704, 0.0
        %v3713 = vld [vmem:[#allocation2 + $0x50] sm:$0xff]
        %v3714 = vld [vmem:[#allocation2 + $0x51] sm:$0xff]
        %v3715 = vsel %vm681, %v3671, 0.0
        %v3716 = vsel %vm682, %v3672, 0.0
        %v3717 = vsel %vm683, %v3673, 0.0
        %v3718 = vsel %vm684, %v3674, 0.0
        %v3719 = vsel %vm685, %v3675, 0.0
        %v3720 = vsel %vm686, %v3676, 0.0
        %v3721 = vsel %vm687, %v3695, 0.0
        %v3722 = vsel %vm688, %v3714, 0.0
        %3731 = vrot.lane.b32.xlu0 %v3661, 32
        %v3732 = vpop.permute.xlu0 %3731
        %3733 = vrot.lane.b32.xlu0 %v3662, 32
        %v3734 = vpop.permute.xlu0 %3733
        %3735 = vrot.lane.b32.xlu0 %v3663, 32
        %v3736 = vpop.permute.xlu0 %3735
        %3737 = vrot.lane.b32.xlu0 %v3664, 32
        %v3738 = vpop.permute.xlu0 %3737
        %3739 = vrot.lane.b32.xlu0 %v3665, 32
        %v3740 = vpop.permute.xlu0 %3739
        %3741 = vrot.lane.b32.xlu0 %v3666, 32
        %v3742 = vpop.permute.xlu0 %3741
        %3743 = vrot.lane.b32.xlu0 %v3667, 32
        %v3744 = vpop.permute.xlu0 %3743
        %3745 = vrot.lane.b32.xlu0 %v3668, 32
        %v3746 = vpop.permute.xlu0 %3745
        %3763 = vrot.lane.b32.xlu0 %v3677, 64
        %v3764 = vpop.permute.xlu0 %3763
        %3765 = vrot.lane.b32.xlu0 %v3678, 64
        %v3766 = vpop.permute.xlu0 %3765
        %3767 = vrot.lane.b32.xlu0 %v3679, 64
        %v3768 = vpop.permute.xlu0 %3767
        %3769 = vrot.lane.b32.xlu0 %v3680, 64
        %v3770 = vpop.permute.xlu0 %3769
        %3771 = vrot.lane.b32.xlu0 %v3681, 64
        %v3772 = vpop.permute.xlu0 %3771
        %3773 = vrot.lane.b32.xlu0 %v3682, 64
        %v3774 = vpop.permute.xlu0 %3773
        %3775 = vrot.lane.b32.xlu0 %v3683, 64
        %v3776 = vpop.permute.xlu0 %3775
        %3777 = vrot.lane.b32.xlu0 %v3684, 64
        %v3778 = vpop.permute.xlu0 %3777
        %3795 = vrot.lane.b32.xlu0 %v3686, 96
        %v3796 = vpop.permute.xlu0 %3795
        %3797 = vrot.lane.b32.xlu0 %v3687, 96
        %v3798 = vpop.permute.xlu0 %3797
        %3799 = vrot.lane.b32.xlu0 %v3688, 96
        %v3800 = vpop.permute.xlu0 %3799
        %3801 = vrot.lane.b32.xlu0 %v3689, 96
        %v3802 = vpop.permute.xlu0 %3801
        %3803 = vrot.lane.b32.xlu0 %v3690, 96
        %v3804 = vpop.permute.xlu0 %3803
        %3805 = vrot.lane.b32.xlu0 %v3691, 96
        %v3806 = vpop.permute.xlu0 %3805
        %3807 = vrot.lane.b32.xlu0 %v3692, 96
        %v3808 = vpop.permute.xlu0 %3807
        %3809 = vrot.lane.b32.xlu0 %v3693, 96
        %v3810 = vpop.permute.xlu0 %3809
        %3827 = vrot.lane.b32.xlu0 %v3696, 32
        %v3828 = vpop.permute.xlu0 %3827
        %3829 = vrot.lane.b32.xlu0 %v3697, 32
        %v3830 = vpop.permute.xlu0 %3829
        %3831 = vrot.lane.b32.xlu0 %v3698, 32
        %v3832 = vpop.permute.xlu0 %3831
        %3833 = vrot.lane.b32.xlu0 %v3699, 32
        %v3834 = vpop.permute.xlu0 %3833
        %3835 = vrot.lane.b32.xlu0 %v3700, 32
        %v3836 = vpop.permute.xlu0 %3835
        %3837 = vrot.lane.b32.xlu0 %v3701, 32
        %v3838 = vpop.permute.xlu0 %3837
        %3839 = vrot.lane.b32.xlu0 %v3702, 32
        %v3840 = vpop.permute.xlu0 %3839
        %3841 = vrot.lane.b32.xlu0 %v3703, 32
        %v3842 = vpop.permute.xlu0 %3841
        %3859 = vrot.lane.b32.xlu0 %v3705, 64
        %v3860 = vpop.permute.xlu0 %3859
        %3861 = vrot.lane.b32.xlu0 %v3706, 64
        %v3862 = vpop.permute.xlu0 %3861
        %3863 = vrot.lane.b32.xlu0 %v3707, 64
        %v3864 = vpop.permute.xlu0 %3863
        %3865 = vrot.lane.b32.xlu0 %v3708, 64
        %v3866 = vpop.permute.xlu0 %3865
        %3867 = vrot.lane.b32.xlu0 %v3709, 64
        %v3868 = vpop.permute.xlu0 %3867
        %3869 = vrot.lane.b32.xlu0 %v3710, 64
        %v3870 = vpop.permute.xlu0 %3869
        %3871 = vrot.lane.b32.xlu0 %v3711, 64
        %v3872 = vpop.permute.xlu0 %3871
        %3873 = vrot.lane.b32.xlu0 %v3712, 64
        %v3874 = vpop.permute.xlu0 %3873
        %3885 = vrot.lane.b32.xlu0 %v3663, 96
        %v3886 = vpop.permute.xlu0 %3885
        %3887 = vrot.lane.b32.xlu0 %v3664, 96
        %v3888 = vpop.permute.xlu0 %3887
        %3889 = vrot.lane.b32.xlu0 %v3665, 96
        %v3890 = vpop.permute.xlu0 %3889
        %3891 = vrot.lane.b32.xlu0 %v3666, 96
        %v3892 = vpop.permute.xlu0 %3891
        %3893 = vrot.lane.b32.xlu0 %v3667, 96
        %v3894 = vpop.permute.xlu0 %3893
        %3895 = vrot.lane.b32.xlu0 %v3668, 96
        %v3896 = vpop.permute.xlu0 %3895
        %3897 = vrot.lane.b32.xlu0 %v3694, 96
        %v3898 = vpop.permute.xlu0 %3897
        %3899 = vrot.lane.b32.xlu0 %v3713, 96
        %v3900 = vpop.permute.xlu0 %3899
        %v3909 = vsel %vm563, %v3653, %v3732
        %v3910 = vsel %vm563, %v3654, %v3734
        %v3911 = vsel %vm563, %v3655, %v3736
        %v3912 = vsel %vm563, %v3656, %v3738
        %v3913 = vsel %vm563, %v3657, %v3740
        %v3914 = vsel %vm563, %v3658, %v3742
        %v3915 = vsel %vm563, %v3659, %v3744
        %v3916 = vsel %vm563, %v3660, %v3746
        %v3917 = vsel %vm1286, %v3909, %v3764
        %v3918 = vsel %vm1286, %v3910, %v3766
        %v3919 = vsel %vm1286, %v3911, %v3768
        %v3920 = vsel %vm1286, %v3912, %v3770
        %v3921 = vsel %vm1286, %v3913, %v3772
        %v3922 = vsel %vm1286, %v3914, %v3774
        %v3923 = vsel %vm1286, %v3915, %v3776
        %v3924 = vsel %vm1286, %v3916, %v3778
        %v3925 = vsel %vm1295, %v3917, %v3796
        %v3926 = vsel %vm1295, %v3918, %v3798
        %v3927 = vsel %vm1295, %v3919, %v3800
        %v3928 = vsel %vm1295, %v3920, %v3802
        %v3929 = vsel %vm1295, %v3921, %v3804
        %v3930 = vsel %vm1295, %v3922, %v3806
        %v3931 = vsel %vm1295, %v3923, %v3808
        %v3932 = vsel %vm1295, %v3924, %v3810
        %v3933 = vsel %vm563, %v3662, %v3828
        %v3934 = vsel %vm563, %v3663, %v3830
        %v3935 = vsel %vm563, %v3664, %v3832
        %v3936 = vsel %vm563, %v3665, %v3834
        %v3937 = vsel %vm563, %v3666, %v3836
        %v3938 = vsel %vm563, %v3667, %v3838
        %v3939 = vsel %vm563, %v3668, %v3840
        %v3940 = vsel %vm563, %v3694, %v3842
        %v3941 = vsel %vm1286, %v3933, %v3860
        %v3942 = vsel %vm1286, %v3934, %v3862
        %v3943 = vsel %vm1286, %v3935, %v3864
        %v3944 = vsel %vm1286, %v3936, %v3866
        %v3945 = vsel %vm1286, %v3937, %v3868
        %v3946 = vsel %vm1286, %v3938, %v3870
        %v3947 = vsel %vm1286, %v3939, %v3872
        %v3948 = vsel %vm1286, %v3940, %v3874
        %v3949 = vsel %vm1295, %v3941, %v3886
        %v3950 = vsel %vm1295, %v3942, %v3888
        %v3951 = vsel %vm1295, %v3943, %v3890
        %v3952 = vsel %vm1295, %v3944, %v3892
        %v3953 = vsel %vm1295, %v3945, %v3894
        %v3954 = vsel %vm1295, %v3946, %v3896
        %v3955 = vsel %vm1295, %v3947, %v3898
        %v3956 = vsel %vm1295, %v3948, %v3900
        %v3957 = vpack.c.bf16 %v3926, %v3925
        %v3958 = vpack.c.bf16 %v3950, %v3949
        %v3959 = vpack.c.bf16 %v3716, %v3715
        %v3960 = vpack.c.bf16 %v3928, %v3927
        %v3961 = vpack.c.bf16 %v3952, %v3951
        %v3962 = vpack.c.bf16 %v3718, %v3717
        %v3963 = vpack.c.bf16 %v3930, %v3929
        %v3964 = vpack.c.bf16 %v3954, %v3953
        %v3965 = vpack.c.bf16 %v3720, %v3719
        %v3966 = vpack.c.bf16 %v3932, %v3931
        %v3967 = vpack.c.bf16 %v3956, %v3955
        %v3968 = vpack.c.bf16 %v3722, %v3721
        %s3969 = scalar_lea.vmem [#allocation12], 288
        %v3970 = vld [vmem:[%s3969] sm:$0xf]
        %v3971 = vld [vmem:[%s3969 + $0x4] sm:$0xf]
        %v3972 = vld [vmem:[%s3969 + $0x8] sm:$0xf]
        %v3973 = vld [vmem:[%s3969 + $0xc] sm:$0xf]
        %v3974 = vld [vmem:[%s3969 + $0x10] sm:$0xf]
        %v3975 = vld [vmem:[%s3969 + $0x14] sm:$0xf]
        %v3976 = vld [vmem:[%s3969 + $0x18] sm:$0xf]
        %v3977 = vld [vmem:[%s3969 + $0x1c] sm:$0xf]
        %v3978 = vld [vmem:[%s3969 + $0x20] sm:$0xf]
        %v3979 = vld [vmem:[%s3969 + $0x24] sm:$0xf]
        %v3980 = vld [vmem:[%s3969 + $0x28] sm:$0xf]
        %v3981 = vld [vmem:[%s3969 + $0x2c] sm:$0xf]
        %v3982 = vld [vmem:[%s3969 + $0x30] sm:$0xf]
        %v3983 = vld [vmem:[%s3969 + $0x34] sm:$0xf]
        %v3984 = vld [vmem:[%s3969 + $0x38] sm:$0xf]
        %v3985 = vld [vmem:[%s3969 + $0x3c] sm:$0xf]
        %v3986 = vld [vmem:[%s3969 + $0x40] sm:$0xf]
        %v3987 = vld [vmem:[%s3969 + $0x44] sm:$0xf]
        %v3988 = vld [vmem:[%s3969 + $0x48] sm:$0xf]
        %v3989 = vld [vmem:[%s3969 + $0x4c] sm:$0xf]
        %v3990 = vld [vmem:[%s3969 + $0x50] sm:$0xf]
        %v3991 = vld [vmem:[%s3969 + $0x54] sm:$0xf]
        %v3992 = vld [vmem:[%s3969 + $0x58] sm:$0xf]
        %v3993 = vld [vmem:[%s3969 + $0x5c] sm:$0xf]
        %v3994 = vld [vmem:[%s3969 + $0x60] sm:$0xf]
        %v3995 = vld [vmem:[%s3969 + $0x64] sm:$0xf]
        %v3996 = vld [vmem:[%s3969 + $0x68] sm:$0xf]
        %v3997 = vld [vmem:[%s3969 + $0x6c] sm:$0xf]
        %v3998 = vld [vmem:[%s3969 + $0x70] sm:$0xf]
        %v3999 = vld [vmem:[%s3969 + $0x74] sm:$0xf]
        %v4000 = vld [vmem:[%s3969 + $0x78] sm:$0xf]
        %v4001 = vld [vmem:[%s3969 + $0x7c] sm:$0xf]
        %v4002 = vld [vmem:[%s3969 + $0x80] sm:$0xf]
        %v4003 = vld [vmem:[%s3969 + $0x84] sm:$0xf]
        %v4004 = vld [vmem:[%s3969 + $0x88] sm:$0xf]
        %v4005 = vld [vmem:[%s3969 + $0x8c] sm:$0xf]
        %v4006 = vld [vmem:[#allocation14 + $0x2] sm:$0x1]
        %v4007 = vlaneseq
        %v4008 = vshrl.u32 %v4007, 7
        %v4009 = vsub.s32 0, %v4008
        %v4010 = vrot.slane %v4006, %v4009
        %v4047 = vunpack.c.l.b16 %v3970
        %v4048 = vunpack.c.l.b16 %v3971
        %v4049 = vunpack.c.l.b16 %v3972
        %v4050 = vunpack.c.l.b16 %v3973
        %v4051 = vunpack.c.l.b16 %v3974
        %v4052 = vunpack.c.l.b16 %v3975
        %v4053 = vunpack.c.l.b16 %v3976
        %v4054 = vunpack.c.l.b16 %v3977
        %v4055 = vunpack.c.l.b16 %v3978
        %v4056 = vunpack.c.l.b16 %v3979
        %v4057 = vunpack.c.l.b16 %v3980
        %v4058 = vunpack.c.l.b16 %v3981
        %v4059 = vunpack.c.l.b16 %v3982
        %v4060 = vunpack.c.l.b16 %v3983
        %v4061 = vunpack.c.l.b16 %v3984
        %v4062 = vunpack.c.l.b16 %v3985
        %v4063 = vunpack.c.l.b16 %v3986
        %v4064 = vunpack.c.l.b16 %v3987
        %v4065 = vunpack.c.l.b16 %v3988
        %v4066 = vunpack.c.l.b16 %v3989
        %v4067 = vunpack.c.l.b16 %v3990
        %v4068 = vunpack.c.l.b16 %v3991
        %v4069 = vunpack.c.l.b16 %v3992
        %v4070 = vunpack.c.l.b16 %v3993
        %v4071 = vunpack.c.l.b16 %v3994
        %v4072 = vunpack.c.l.b16 %v3995
        %v4073 = vunpack.c.l.b16 %v3996
        %v4074 = vunpack.c.l.b16 %v3997
        %v4075 = vunpack.c.l.b16 %v3998
        %v4076 = vunpack.c.l.b16 %v3999
        %v4077 = vunpack.c.l.b16 %v4000
        %v4078 = vunpack.c.l.b16 %v4001
        %v4079 = vunpack.c.l.b16 %v4002
        %v4080 = vunpack.c.l.b16 %v4003
        %v4081 = vunpack.c.l.b16 %v4004
        %v4082 = vunpack.c.l.b16 %v4005
        %v4083 = vpack.c.b16 %v4048, %v4047
        %v4084 = vpack.c.b16 %v4050, %v4049
        %v4085 = vpack.c.b16 %v4052, %v4051
        %v4086 = vpack.c.b16 %v4054, %v4053
        %v4087 = vpack.c.b16 %v4056, %v4055
        %v4088 = vpack.c.b16 %v4058, %v4057
        %v4089 = vpack.c.b16 %v4060, %v4059
        %v4090 = vpack.c.b16 %v4062, %v4061
        %v4091 = vpack.c.b16 %v4064, %v4063
        %v4092 = vpack.c.b16 %v4066, %v4065
        %v4093 = vpack.c.b16 %v4068, %v4067
        %v4094 = vpack.c.b16 %v4070, %v4069
        %v4095 = vpack.c.b16 %v4072, %v4071
        %v4096 = vpack.c.b16 %v4074, %v4073
        %v4097 = vpack.c.b16 %v4076, %v4075
        %v4098 = vpack.c.b16 %v4078, %v4077
        %v4099 = vpack.c.b16 %v4080, %v4079
        %v4100 = vpack.c.b16 %v4082, %v4081
        %v4120 = vsel %vm563, %v3959, 0
        %v4123 = vsel %vm563, %v3962, 0
        %v4126 = vsel %vm563, %v3965, 0
        %v4129 = vsel %vm563, %v3968, 0
        %4131 = vmatprep.subr.bf16.mxu0 0
        %4132 = vmatpush1.bf16.msra.mxu0 %v4083
        %4133 = vmatprep.subr.bf16.mxu0 0
        %4134 = vmatpush1.bf16.msra.mxu0 %v4084
        %4135 = vmatprep.subr.bf16.mxu0 0
        %4136 = vmatpush1.bf16.msra.mxu0 %v4085
        %4137 = vmatprep.subr.bf16.mxu0 0
        %4138 = vmatpush1.bf16.msra.mxu0 %v4086
        %4139 = vmatprep.subr.bf16.mxu0 0
        %4140 = vmatpush1.bf16.msra.mxu0 %v4087
        %4141 = vmatprep.subr.bf16.mxu0 0
        %4142 = vmatpush1.bf16.msra.mxu0 %v4088
        %4143 = vmatprep.subr.bf16.mxu0 0
        %4144 = vmatpush1.bf16.msra.mxu0 %v4089
        %4145 = vmatprep.subr.bf16.mxu0 0
        %4146 = vmatpush1.bf16.msra.mxu0 %v4090
        %4147 = vmatprep.subr.bf16.mxu0 0
        %4148 = vmatpush1.bf16.msra.mxu0 %v4091
        %4149 = vmatprep.subr.bf16.mxu0 0
        %4150 = vmatpush1.bf16.msra.mxu0 %v4092
        %4151 = vmatprep.subr.bf16.mxu0 0
        %4152 = vmatpush1.bf16.msra.mxu0 %v4093
        %4153 = vmatprep.subr.bf16.mxu0 0
        %4154 = vmatpush1.bf16.msra.mxu0 %v4094
        %4155 = vmatprep.subr.bf16.mxu0 0
        %4156 = vmatpush1.bf16.msra.mxu0 %v4095
        %4157 = vmatprep.subr.bf16.mxu0 0
        %4158 = vmatpush1.bf16.msra.mxu0 %v4096
        %4159 = vmatprep.subr.bf16.mxu0 0
        %4160 = vmatpush1.bf16.msra.mxu0 %v4097
        %4161 = vmatprep.subr.bf16.mxu0 0
        %4162 = vmatpush1.bf16.msra.mxu0 %v4098
        %4163 = vmatprep.mubr.bf16.mxu0 %v3958
        %4164 = vmatmul.mubr.bf16.gmra.mrb[0].mxu0 %v3957
        %v4165 = vpop.f32.mrb[0].mxu0
        %v4166 = vadd.f32 %v4010, %v4165
        %v4167 = vpop.f32.mrb[0].mxu0
        %v4168 = vpop.f32.mrb[0].mxu0
        %v4169 = vadd.f32 %v4010, %v4168
        %v4170 = vpop.f32.mrb[0].mxu0
        %4171 = vmatprep.mubr.bf16.mxu0 %v3961
        %4172 = vmatmul.mubr.bf16.gmra.mrb[0].mxu0 %v3960
        %v4173 = vpop.f32.mrb[0].mxu0
        %v4174 = vadd.f32 %v4010, %v4173
        %v4175 = vpop.f32.mrb[0].mxu0
        %v4176 = vpop.f32.mrb[0].mxu0
        %v4177 = vadd.f32 %v4010, %v4176
        %v4178 = vpop.f32.mrb[0].mxu0
        %4179 = vmatprep.mubr.bf16.mxu0 %v3964
        %4180 = vmatmul.mubr.bf16.gmra.mrb[0].mxu0 %v3963
        %v4181 = vpop.f32.mrb[0].mxu0
        %v4182 = vadd.f32 %v4010, %v4181
        %v4183 = vpop.f32.mrb[0].mxu0
        %v4184 = vpop.f32.mrb[0].mxu0
        %v4185 = vadd.f32 %v4010, %v4184
        %v4186 = vpop.f32.mrb[0].mxu0
        %4187 = vmatprep.mubr.bf16.mxu0 %v3967
        %4188 = vmatmul.mubr.bf16.gmra.mrb[0].mxu0 %v3966
        %v4189 = vpop.f32.mrb[0].mxu0
        %v4190 = vadd.f32 %v4010, %v4189
        %v4191 = vpop.f32.mrb[0].mxu0
        %v4192 = vpop.f32.mrb[0].mxu0
        %v4193 = vadd.f32 %v4010, %v4192
        %v4194 = vpop.f32.mrb[0].mxu0
        %4195 = vdwg.mxu0
        %4196 = vmatprep.subr.bf16.mxu0 0
        %4197 = vmatpush1.bf16.msra.mxu0 %v4099
        %4198 = vmatprep.subr.bf16.mxu0 0
        %4199 = vmatpush1.bf16.msra.mxu0 %v4100
        %4200 = vmatprep.subr.bf16.mxu0 0
        %4201 = vmatpush1.bf16.msra.mxu0 0
        %4202 = vmatprep.subr.bf16.mxu0 0
        %4203 = vmatpush1.bf16.msra.mxu0 0
        %4204 = vmatprep.subr.bf16.mxu0 0
        %4205 = vmatpush1.bf16.msra.mxu0 0
        %4206 = vmatprep.subr.bf16.mxu0 0
        %4207 = vmatpush1.bf16.msra.mxu0 0
        %4208 = vmatprep.subr.bf16.mxu0 0
        %4209 = vmatpush1.bf16.msra.mxu0 0
        %4210 = vmatprep.subr.bf16.mxu0 0
        %4211 = vmatpush1.bf16.msra.mxu0 0
        %4212 = vmatprep.subr.bf16.mxu0 0
        %4213 = vmatpush1.bf16.msra.mxu0 0
        %4214 = vmatprep.subr.bf16.mxu0 0
        %4215 = vmatpush1.bf16.msra.mxu0 0
        %4216 = vmatprep.subr.bf16.mxu0 0
        %4217 = vmatpush1.bf16.msra.mxu0 0
        %4218 = vmatprep.subr.bf16.mxu0 0
        %4219 = vmatpush1.bf16.msra.mxu0 0
        %4220 = vmatprep.subr.bf16.mxu0 0
        %4221 = vmatpush1.bf16.msra.mxu0 0
        %4222 = vmatprep.subr.bf16.mxu0 0
        %4223 = vmatpush1.bf16.msra.mxu0 0
        %4224 = vmatprep.subr.bf16.mxu0 0
        %4225 = vmatpush1.bf16.msra.mxu0 0
        %4226 = vmatprep.subr.bf16.mxu0 0
        %4227 = vmatpush1.bf16.msra.mxu0 0
        %4228 = vmatprep.mubr.bf16.mxu0 0
        %4229 = vmatmul.mubr.bf16.gmra.mrb[0].mxu0 %v4120
        %v4230 = vpop.f32.mrb[0].mxu0
        %v4231 = vadd.f32 %v4166, %v4230
        %v4232 = vpop.f32.mrb[0].mxu0
        %v4233 = vpop.f32.mrb[0].mxu0
        %v4234 = vadd.f32 %v4169, %v4233
        %v4235 = vpop.f32.mrb[0].mxu0
        %4236 = vmatprep.mubr.bf16.mxu0 0
        %4237 = vmatmul.mubr.bf16.gmra.mrb[0].mxu0 %v4123
        %v4238 = vpop.f32.mrb[0].mxu0
        %v4239 = vadd.f32 %v4174, %v4238
        %v4240 = vpop.f32.mrb[0].mxu0
        %v4241 = vpop.f32.mrb[0].mxu0
        %v4242 = vadd.f32 %v4177, %v4241
        %v4243 = vpop.f32.mrb[0].mxu0
        %4244 = vmatprep.mubr.bf16.mxu0 0
        %4245 = vmatmul.mubr.bf16.gmra.mrb[0].mxu0 %v4126
        %v4246 = vpop.f32.mrb[0].mxu0
        %v4247 = vadd.f32 %v4182, %v4246
        %v4248 = vpop.f32.mrb[0].mxu0
        %v4249 = vpop.f32.mrb[0].mxu0
        %v4250 = vadd.f32 %v4185, %v4249
        %v4251 = vpop.f32.mrb[0].mxu0
        %4252 = vmatprep.mubr.bf16.mxu0 0
        %4253 = vmatmul.mubr.bf16.gmra.mrb[0].mxu0 %v4129
        %v4254 = vpop.f32.mrb[0].mxu0
        %v4255 = vadd.f32 %v4190, %v4254
        %v4256 = vpop.f32.mrb[0].mxu0
        %v4257 = vpop.f32.mrb[0].mxu0
        %v4258 = vadd.f32 %v4193, %v4257
        %v4259 = vpop.f32.mrb[0].mxu0
        %4260 = vdwg.mxu0
        %v4261 = vld [vmem:[%s482 + $0x1] sm:$0x1]
        %v4262 = vlaneseq
        %v4263 = vshrl.u32 %v4262, 7
        %v4264 = vsub.s32 0, %v4263
        %v4265 = vrot.slane %v4261, %v4264
        %v4266 = vadd.f32 %v4231, %v4265
        %v4267 = vadd.f32 %v4234, %v4265
        %v4268 = vadd.f32 %v4239, %v4265
        %v4269 = vadd.f32 %v4242, %v4265
        %v4270 = vadd.f32 %v4247, %v4265
        %v4271 = vadd.f32 %v4250, %v4265
        %v4272 = vadd.f32 %v4255, %v4265
        %v4273 = vadd.f32 %v4258, %v4265
        %v4274 = vld [vmem:[#allocation9 + $0x4] sm:$0x1]
        %v4275 = vld [vmem:[#allocation11 + $0x4] sm:$0x1]
        %v4276 = vsel %vm563, %v4266, 0.0
        %v4277 = vsel %vm563, %v4267, 0.0
        %v4278 = vadd.f32 %v4276, %v4277
        %v4279 = vsel %vm563, %v4268, 0.0
        %v4280 = vadd.f32 %v4278, %v4279
        %v4281 = vsel %vm563, %v4269, 0.0
        %v4282 = vadd.f32 %v4280, %v4281
        %v4283 = vsel %vm563, %v4270, 0.0
        %v4284 = vadd.f32 %v4282, %v4283
        %v4285 = vsel %vm563, %v4271, 0.0
        %v4286 = vadd.f32 %v4284, %v4285
        %v4287 = vsel %vm563, %v4272, 0.0
        %v4288 = vadd.f32 %v4286, %v4287
        %v4289 = vsel %vm563, %v4273, 0.0
        %v4290 = vadd.f32 %v4288, %v4289
        %v4291 = vrot.slane %v4290, 4
        %v4292 = vadd.f32 %v4290, %v4291
        %v4293 = vrot.slane %v4292, 2
        %v4294 = vadd.f32 %v4292, %v4293
        %v4295 = vrot.slane %v4294, 1
        %v4296 = vadd.f32 %v4294, %v4295
        %v4297 = vmul.f32 %v4296, 0.015625
        %v4299 = vsel %vm563, %v4297, 0
        %4301 = vmatprep.subr.mxu0 0.0
        %4302 = vmatpush1.msra.mxu0 %v689
        %4303 = vmatprep.subr.mxu0 0.0
        %4304 = vmatpush1.msra.mxu0 %v690
        %4305 = vmatprep.subr.mxu0 0.0
        %4306 = vmatpush1.msra.mxu0 %v691
        %4307 = vmatprep.subr.mxu0 0.0
        %4308 = vmatpush1.msra.mxu0 %v692
        %4309 = vmatprep.subr.mxu0 0.0
        %4310 = vmatpush1.msra.mxu0 0.0
        %4311 = vmatprep.subr.mxu0 0.0
        %4312 = vmatpush1.msra.mxu0 0.0
        %4313 = vmatprep.subr.mxu0 0.0
        %4314 = vmatpush1.msra.mxu0 0.0
        %4315 = vmatprep.subr.mxu0 0.0
        %4316 = vmatpush1.msra.mxu0 0.0
        %4317 = vmatprep.subr.mxu0 0.0
        %4318 = vmatpush1.msra.mxu0 0.0
        %4319 = vmatprep.subr.mxu0 0.0
        %4320 = vmatpush1.msra.mxu0 0.0
        %4321 = vmatprep.subr.mxu0 0.0
        %4322 = vmatpush1.msra.mxu0 0.0
        %4323 = vmatprep.subr.mxu0 0.0
        %4324 = vmatpush1.msra.mxu0 0.0
        %4325 = vmatprep.subr.mxu0 0.0
        %4326 = vmatpush1.msra.mxu0 0.0
        %4327 = vmatprep.subr.mxu0 0.0
        %4328 = vmatpush1.msra.mxu0 0.0
        %4329 = vmatprep.subr.mxu0 0.0
        %4330 = vmatpush1.msra.mxu0 0.0
        %4331 = vmatprep.subr.mxu0 0.0
        %4332 = vmatpush1.msra.mxu0 0.0
        %4333 = vmatprep.subr.mxu0 0.0
        %4334 = vmatpush1.msra.mxu0 0.0
        %4335 = vmatprep.subr.mxu0 0.0
        %4336 = vmatpush1.msra.mxu0 0.0
        %4337 = vmatprep.subr.mxu0 0.0
        %4338 = vmatpush1.msra.mxu0 0.0
        %4339 = vmatprep.subr.mxu0 0.0
        %4340 = vmatpush1.msra.mxu0 0.0
        %4341 = vmatprep.subr.mxu0 0.0
        %4342 = vmatpush1.msra.mxu0 0.0
        %4343 = vmatprep.subr.mxu0 0.0
        %4344 = vmatpush1.msra.mxu0 0.0
        %4345 = vmatprep.subr.mxu0 0.0
        %4346 = vmatpush1.msra.mxu0 0.0
        %4347 = vmatprep.subr.mxu0 0.0
        %4348 = vmatpush1.msra.mxu0 0.0
        %4349 = vmatprep.subr.mxu0 0.0
        %4350 = vmatpush1.msra.mxu0 0.0
        %4351 = vmatprep.subr.mxu0 0.0
        %4352 = vmatpush1.msra.mxu0 0.0
        %4353 = vmatprep.subr.mxu0 0.0
        %4354 = vmatpush1.msra.mxu0 0.0
        %4355 = vmatprep.subr.mxu0 0.0
        %4356 = vmatpush1.msra.mxu0 0.0
        %4357 = vmatprep.subr.mxu0 0.0
        %4358 = vmatpush1.msra.mxu0 0.0
        %4359 = vmatprep.subr.mxu0 0.0
        %4360 = vmatpush1.msra.mxu0 0.0
        %4361 = vmatprep.subr.mxu0 0.0
        %4362 = vmatpush1.msra.mxu0 0.0
        %4363 = vmatprep.subr.mxu0 0.0
        %4364 = vmatpush1.msra.mxu0 0.0
        %4365 = vmatprep.mubr.f32.mxu0 0.0
        %4366 = vmatmul.mubr.f32.gmra.mrb[0].mxu0 %v4299
        %v4367 = vpop.f32.mrb[0].mxu0
        %v4368 = vadd.f32 0.0, %v4367
        %v4369 = vpop.f32.mrb[0].mxu0
        %4370 = vdwg.mxu0
        %v4371 = vlaneseq
        %v4372 = vshrl.u32 %v4371, 7
        %v4373 = vsub.s32 0, %v4372
        %v4374 = vrot.slane %v4368, %v4373
        %v4375 = vsub.f32 %v4266, %v4374
        %v4376 = vsub.f32 %v4267, %v4374
        %v4377 = vsub.f32 %v4268, %v4374
        %v4378 = vsub.f32 %v4269, %v4374
        %v4379 = vsub.f32 %v4270, %v4374
        %v4380 = vsub.f32 %v4271, %v4374
        %v4381 = vsub.f32 %v4272, %v4374
        %v4382 = vsub.f32 %v4273, %v4374
        %v4383 = vmul.f32 %v4375, %v4375
        %v4384 = vmul.f32 %v4376, %v4376
        %v4385 = vmul.f32 %v4377, %v4377
        %v4386 = vmul.f32 %v4378, %v4378
        %v4387 = vmul.f32 %v4379, %v4379
        %v4388 = vmul.f32 %v4380, %v4380
        %v4389 = vmul.f32 %v4381, %v4381
        %v4390 = vmul.f32 %v4382, %v4382
        %v4391 = vsel %vm563, %v4383, 0.0
        %v4392 = vsel %vm563, %v4384, 0.0
        %v4393 = vadd.f32 %v4391, %v4392
        %v4394 = vsel %vm563, %v4385, 0.0
        %v4395 = vadd.f32 %v4393, %v4394
        %v4396 = vsel %vm563, %v4386, 0.0
        %v4397 = vadd.f32 %v4395, %v4396
        %v4398 = vsel %vm563, %v4387, 0.0
        %v4399 = vadd.f32 %v4397, %v4398
        %v4400 = vsel %vm563, %v4388, 0.0
        %v4401 = vadd.f32 %v4399, %v4400
        %v4402 = vsel %vm563, %v4389, 0.0
        %v4403 = vadd.f32 %v4401, %v4402
        %v4404 = vsel %vm563, %v4390, 0.0
        %v4405 = vadd.f32 %v4403, %v4404
        %v4406 = vrot.slane %v4405, 4
        %v4407 = vadd.f32 %v4405, %v4406
        %v4408 = vrot.slane %v4407, 2
        %v4409 = vadd.f32 %v4407, %v4408
        %v4410 = vrot.slane %v4409, 1
        %v4411 = vadd.f32 %v4409, %v4410
        %v4412 = vmul.f32 %v4411, 0.015625
        %v4414 = vsel %vm563, %v4412, 0
        %4416 = vmatprep.subr.mxu0 0.0
        %4417 = vmatpush1.msra.mxu0 %v689
        %4418 = vmatprep.subr.mxu0 0.0
        %4419 = vmatpush1.msra.mxu0 %v690
        %4420 = vmatprep.subr.mxu0 0.0
        %4421 = vmatpush1.msra.mxu0 %v691
        %4422 = vmatprep.subr.mxu0 0.0
        %4423 = vmatpush1.msra.mxu0 %v692
        %4424 = vmatprep.subr.mxu0 0.0
        %4425 = vmatpush1.msra.mxu0 0.0
        %4426 = vmatprep.subr.mxu0 0.0
        %4427 = vmatpush1.msra.mxu0 0.0
        %4428 = vmatprep.subr.mxu0 0.0
        %4429 = vmatpush1.msra.mxu0 0.0
        %4430 = vmatprep.subr.mxu0 0.0
        %4431 = vmatpush1.msra.mxu0 0.0
        %4432 = vmatprep.subr.mxu0 0.0
        %4433 = vmatpush1.msra.mxu0 0.0
        %4434 = vmatprep.subr.mxu0 0.0
        %4435 = vmatpush1.msra.mxu0 0.0
        %4436 = vmatprep.subr.mxu0 0.0
        %4437 = vmatpush1.msra.mxu0 0.0
        %4438 = vmatprep.subr.mxu0 0.0
        %4439 = vmatpush1.msra.mxu0 0.0
        %4440 = vmatprep.subr.mxu0 0.0
        %4441 = vmatpush1.msra.mxu0 0.0
        %4442 = vmatprep.subr.mxu0 0.0
        %4443 = vmatpush1.msra.mxu0 0.0
        %4444 = vmatprep.subr.mxu0 0.0
        %4445 = vmatpush1.msra.mxu0 0.0
        %4446 = vmatprep.subr.mxu0 0.0
        %4447 = vmatpush1.msra.mxu0 0.0
        %4448 = vmatprep.subr.mxu0 0.0
        %4449 = vmatpush1.msra.mxu0 0.0
        %4450 = vmatprep.subr.mxu0 0.0
        %4451 = vmatpush1.msra.mxu0 0.0
        %4452 = vmatprep.subr.mxu0 0.0
        %4453 = vmatpush1.msra.mxu0 0.0
        %4454 = vmatprep.subr.mxu0 0.0
        %4455 = vmatpush1.msra.mxu0 0.0
        %4456 = vmatprep.subr.mxu0 0.0
        %4457 = vmatpush1.msra.mxu0 0.0
        %4458 = vmatprep.subr.mxu0 0.0
        %4459 = vmatpush1.msra.mxu0 0.0
        %4460 = vmatprep.subr.mxu0 0.0
        %4461 = vmatpush1.msra.mxu0 0.0
        %4462 = vmatprep.subr.mxu0 0.0
        %4463 = vmatpush1.msra.mxu0 0.0
        %4464 = vmatprep.subr.mxu0 0.0
        %4465 = vmatpush1.msra.mxu0 0.0
        %4466 = vmatprep.subr.mxu0 0.0
        %4467 = vmatpush1.msra.mxu0 0.0
        %4468 = vmatprep.subr.mxu0 0.0
        %4469 = vmatpush1.msra.mxu0 0.0
        %4470 = vmatprep.subr.mxu0 0.0
        %4471 = vmatpush1.msra.mxu0 0.0
        %4472 = vmatprep.subr.mxu0 0.0
        %4473 = vmatpush1.msra.mxu0 0.0
        %4474 = vmatprep.subr.mxu0 0.0
        %4475 = vmatpush1.msra.mxu0 0.0
        %4476 = vmatprep.subr.mxu0 0.0
        %4477 = vmatpush1.msra.mxu0 0.0
        %4478 = vmatprep.subr.mxu0 0.0
        %4479 = vmatpush1.msra.mxu0 0.0
        %4480 = vmatprep.mubr.f32.mxu0 0.0
        %4481 = vmatmul.mubr.f32.gmra.mrb[0].mxu0 %v4414
        %v4482 = vpop.f32.mrb[0].mxu0
        %v4483 = vadd.f32 1e-05, %v4482
        %v4484 = vpop.f32.mrb[0].mxu0
        %4485 = vdwg.mxu0
        %v4486 = vrsqrt.pop %v4483
        %v4487 = vlaneseq
        %v4488 = vshrl.u32 %v4487, 7
        %v4489 = vsub.s32 0, %v4488
        %v4490 = vrot.slane %v4486, %v4489
        %v4491 = vmul.f32 %v4375, %v4490
        %v4492 = vmul.f32 %v4376, %v4490
        %v4493 = vmul.f32 %v4377, %v4490
        %v4494 = vmul.f32 %v4378, %v4490
        %v4495 = vmul.f32 %v4379, %v4490
        %v4496 = vmul.f32 %v4380, %v4490
        %v4497 = vmul.f32 %v4381, %v4490
        %v4498 = vmul.f32 %v4382, %v4490
        %v4499 = vlaneseq
        %v4500 = vshrl.u32 %v4499, 7
        %v4501 = vsub.s32 0, %v4500
        %v4502 = vrot.slane %v4274, %v4501
        %v4503 = vmul.f32 %v4491, %v4502
        %v4504 = vmul.f32 %v4492, %v4502
        %v4505 = vmul.f32 %v4493, %v4502
        %v4506 = vmul.f32 %v4494, %v4502
        %v4507 = vmul.f32 %v4495, %v4502
        %v4508 = vmul.f32 %v4496, %v4502
        %v4509 = vmul.f32 %v4497, %v4502
        %v4510 = vmul.f32 %v4498, %v4502
        %v4511 = vlaneseq
        %v4512 = vshrl.u32 %v4511, 7
        %v4513 = vsub.s32 0, %v4512
        %v4514 = vrot.slane %v4275, %v4513
        %v4515 = vadd.f32 %v4503, %v4514
        %v4516 = vadd.f32 %v4504, %v4514
        %v4517 = vadd.f32 %v4505, %v4514
        %v4518 = vadd.f32 %v4506, %v4514
        %v4519 = vadd.f32 %v4507, %v4514
        %v4520 = vadd.f32 %v4508, %v4514
        %v4521 = vadd.f32 %v4509, %v4514
        %v4522 = vadd.f32 %v4510, %v4514
        %v4523 = vxor.u32 %v4515, 2147483648
        %v4524 = vxor.u32 %v4516, 2147483648
        %v4525 = vxor.u32 %v4517, 2147483648
        %v4526 = vxor.u32 %v4518, 2147483648
        %v4527 = vxor.u32 %v4519, 2147483648
        %v4528 = vxor.u32 %v4520, 2147483648
        %v4529 = vxor.u32 %v4521, 2147483648
        %v4530 = vxor.u32 %v4522, 2147483648
        %v4531 = vmul.f32 %v4523, 1.442695
        %v4532 = vpow.pop %v4531
        %v4533 = vmul.f32 %v4524, 1.442695
        %v4534 = vpow.pop %v4533
        %v4535 = vmul.f32 %v4525, 1.442695
        %v4536 = vpow.pop %v4535
        %v4537 = vmul.f32 %v4526, 1.442695
        %v4538 = vpow.pop %v4537
        %v4539 = vmul.f32 %v4527, 1.442695
        %v4540 = vpow.pop %v4539
        %v4541 = vmul.f32 %v4528, 1.442695
        %v4542 = vpow.pop %v4541
        %v4543 = vmul.f32 %v4529, 1.442695
        %v4544 = vpow.pop %v4543
        %v4545 = vmul.f32 %v4530, 1.442695
        %v4546 = vpow.pop %v4545
        %v4547 = vadd.f32 %v4532, 1.0
        %v4548 = vadd.f32 %v4534, 1.0
        %v4549 = vadd.f32 %v4536, 1.0
        %v4550 = vadd.f32 %v4538, 1.0
        %v4551 = vadd.f32 %v4540, 1.0
        %v4552 = vadd.f32 %v4542, 1.0
        %v4553 = vadd.f32 %v4544, 1.0
        %v4554 = vadd.f32 %v4546, 1.0
        %v4555 = vrcp.pop %v4547
        %v4556 = vmul.f32 1.0, %v4555
        %v4557 = vrcp.pop %v4548
        %v4558 = vmul.f32 1.0, %v4557
        %v4559 = vrcp.pop %v4549
        %v4560 = vmul.f32 1.0, %v4559
        %v4561 = vrcp.pop %v4550
        %v4562 = vmul.f32 1.0, %v4561
        %v4563 = vrcp.pop %v4551
        %v4564 = vmul.f32 1.0, %v4563
        %v4565 = vrcp.pop %v4552
        %v4566 = vmul.f32 1.0, %v4565
        %v4567 = vrcp.pop %v4553
        %v4568 = vmul.f32 1.0, %v4567
        %v4569 = vrcp.pop %v4554
        %v4570 = vmul.f32 1.0, %v4569
        %v4571 = vmul.f32 %v4515, %v4556
        %v4572 = vmul.f32 %v4516, %v4558
        %v4573 = vmul.f32 %v4517, %v4560
        %v4574 = vmul.f32 %v4518, %v4562
        %v4575 = vmul.f32 %v4519, %v4564
        %v4576 = vmul.f32 %v4520, %v4566
        %v4577 = vmul.f32 %v4521, %v4568
        %v4578 = vmul.f32 %v4522, %v4570
        %4579 = vst.msk [vmem:[#allocation2 + $0x10] sm:$0xff] %vm563, %v4571
        %4580 = vst.msk [vmem:[#allocation2 + $0x18] sm:$0xff] %vm563, %v4572
        %4581 = vst.msk [vmem:[#allocation2 + $0x20] sm:$0xff] %vm563, %v4573
        %4582 = vst.msk [vmem:[#allocation2 + $0x28] sm:$0xff] %vm563, %v4574
        %4583 = vst.msk [vmem:[#allocation2 + $0x30] sm:$0xff] %vm563, %v4575
        %4584 = vst.msk [vmem:[#allocation2 + $0x38] sm:$0xff] %vm563, %v4576
        %4585 = vst.msk [vmem:[#allocation2 + $0x40] sm:$0xff] %vm563, %v4577
        %4586 = vst.msk [vmem:[#allocation2 + $0x48] sm:$0xff] %vm563, %v4578
        %v4587 = vld [vmem:[#allocation2 + $0x7] sm:$0xff]
        %v4588 = vld [vmem:[#allocation2 + $0xf] sm:$0xff]
        %v4589 = vld [vmem:[#allocation2 + $0x17] sm:$0xff]
        %v4590 = vld [vmem:[#allocation2 + $0x1f] sm:$0xff]
        %v4591 = vld [vmem:[#allocation2 + $0x27] sm:$0xff]
        %v4592 = vld [vmem:[#allocation2 + $0x2f] sm:$0xff]
        %v4593 = vld [vmem:[#allocation2 + $0x37] sm:$0xff]
        %v4594 = vld [vmem:[#allocation2 + $0x3f] sm:$0xff]
        %v4595 = vsel %vm673, %v4587, 0.0
        %v4596 = vsel %vm674, %v4588, 0.0
        %v4597 = vsel %vm675, %v4589, 0.0
        %v4598 = vsel %vm676, %v4590, 0.0
        %v4599 = vsel %vm677, %v4591, 0.0
        %v4600 = vsel %vm678, %v4592, 0.0
        %v4601 = vsel %vm679, %v4593, 0.0
        %v4602 = vsel %vm680, %v4594, 0.0
        %v4603 = vld [vmem:[#allocation2 + $0x8] sm:$0xff]
        %v4604 = vld [vmem:[#allocation2 + $0x10] sm:$0xff]
        %v4605 = vld [vmem:[#allocation2 + $0x18] sm:$0xff]
        %v4606 = vld [vmem:[#allocation2 + $0x20] sm:$0xff]
        %v4607 = vld [vmem:[#allocation2 + $0x28] sm:$0xff]
        %v4608 = vld [vmem:[#allocation2 + $0x30] sm:$0xff]
        %v4609 = vld [vmem:[#allocation2 + $0x38] sm:$0xff]
        %v4610 = vld [vmem:[#allocation2 + $0x40] sm:$0xff]
        %v4611 = vld [vmem:[#allocation2 + $0x9] sm:$0xff]
        %v4612 = vld [vmem:[#allocation2 + $0x11] sm:$0xff]
        %v4613 = vld [vmem:[#allocation2 + $0x19] sm:$0xff]
        %v4614 = vld [vmem:[#allocation2 + $0x21] sm:$0xff]
        %v4615 = vld [vmem:[#allocation2 + $0x29] sm:$0xff]
        %v4616 = vld [vmem:[#allocation2 + $0x31] sm:$0xff]
        %v4617 = vld [vmem:[#allocation2 + $0x39] sm:$0xff]
        %v4618 = vld [vmem:[#allocation2 + $0x41] sm:$0xff]
        %v4619 = vsel %vm681, %v4611, 0.0
        %v4620 = vsel %vm682, %v4612, 0.0
        %v4621 = vsel %vm683, %v4613, 0.0
        %v4622 = vsel %vm684, %v4614, 0.0
        %v4623 = vsel %vm685, %v4615, 0.0
        %v4624 = vsel %vm686, %v4616, 0.0
        %v4625 = vsel %vm687, %v4617, 0.0
        %v4626 = vsel %vm688, %v4618, 0.0
        %v4627 = vld [vmem:[#allocation2 + $0x47] sm:$0xff]
        %v4628 = vsel %vm673, %v4588, 0.0
        %v4629 = vsel %vm674, %v4589, 0.0
        %v4630 = vsel %vm675, %v4590, 0.0
        %v4631 = vsel %vm676, %v4591, 0.0
        %v4632 = vsel %vm677, %v4592, 0.0
        %v4633 = vsel %vm678, %v4593, 0.0
        %v4634 = vsel %vm679, %v4594, 0.0
        %v4635 = vsel %vm680, %v4627, 0.0
        %v4636 = vld [vmem:[#allocation2 + $0x48] sm:$0xff]
        %v4637 = vld [vmem:[#allocation2 + $0x49] sm:$0xff]
        %v4638 = vsel %vm681, %v4612, 0.0
        %v4639 = vsel %vm682, %v4613, 0.0
        %v4640 = vsel %vm683, %v4614, 0.0
        %v4641 = vsel %vm684, %v4615, 0.0
        %v4642 = vsel %vm685, %v4616, 0.0
        %v4643 = vsel %vm686, %v4617, 0.0
        %v4644 = vsel %vm687, %v4618, 0.0
        %v4645 = vsel %vm688, %v4637, 0.0
        %v4646 = vld [vmem:[#allocation2 + $0x4f] sm:$0xff]
        %v4647 = vsel %vm673, %v4589, 0.0
        %v4648 = vsel %vm674, %v4590, 0.0
        %v4649 = vsel %vm675, %v4591, 0.0
        %v4650 = vsel %vm676, %v4592, 0.0
        %v4651 = vsel %vm677, %v4593, 0.0
        %v4652 = vsel %vm678, %v4594, 0.0
        %v4653 = vsel %vm679, %v4627, 0.0
        %v4654 = vsel %vm680, %v4646, 0.0
        %v4655 = vld [vmem:[#allocation2 + $0x50] sm:$0xff]
        %v4656 = vld [vmem:[#allocation2 + $0x51] sm:$0xff]
        %v4657 = vsel %vm681, %v4613, 0.0
        %v4658 = vsel %vm682, %v4614, 0.0
        %v4659 = vsel %vm683, %v4615, 0.0
        %v4660 = vsel %vm684, %v4616, 0.0
        %v4661 = vsel %vm685, %v4617, 0.0
        %v4662 = vsel %vm686, %v4618, 0.0
        %v4663 = vsel %vm687, %v4637, 0.0
        %v4664 = vsel %vm688, %v4656, 0.0
        %4673 = vrot.lane.b32.xlu0 %v4603, 32
        %v4674 = vpop.permute.xlu0 %4673
        %4675 = vrot.lane.b32.xlu0 %v4604, 32
        %v4676 = vpop.permute.xlu0 %4675
        %4677 = vrot.lane.b32.xlu0 %v4605, 32
        %v4678 = vpop.permute.xlu0 %4677
        %4679 = vrot.lane.b32.xlu0 %v4606, 32
        %v4680 = vpop.permute.xlu0 %4679
        %4681 = vrot.lane.b32.xlu0 %v4607, 32
        %v4682 = vpop.permute.xlu0 %4681
        %4683 = vrot.lane.b32.xlu0 %v4608, 32
        %v4684 = vpop.permute.xlu0 %4683
        %4685 = vrot.lane.b32.xlu0 %v4609, 32
        %v4686 = vpop.permute.xlu0 %4685
        %4687 = vrot.lane.b32.xlu0 %v4610, 32
        %v4688 = vpop.permute.xlu0 %4687
        %4705 = vrot.lane.b32.xlu0 %v4619, 64
        %v4706 = vpop.permute.xlu0 %4705
        %4707 = vrot.lane.b32.xlu0 %v4620, 64
        %v4708 = vpop.permute.xlu0 %4707
        %4709 = vrot.lane.b32.xlu0 %v4621, 64
        %v4710 = vpop.permute.xlu0 %4709
        %4711 = vrot.lane.b32.xlu0 %v4622, 64
        %v4712 = vpop.permute.xlu0 %4711
        %4713 = vrot.lane.b32.xlu0 %v4623, 64
        %v4714 = vpop.permute.xlu0 %4713
        %4715 = vrot.lane.b32.xlu0 %v4624, 64
        %v4716 = vpop.permute.xlu0 %4715
        %4717 = vrot.lane.b32.xlu0 %v4625, 64
        %v4718 = vpop.permute.xlu0 %4717
        %4719 = vrot.lane.b32.xlu0 %v4626, 64
        %v4720 = vpop.permute.xlu0 %4719
        %4737 = vrot.lane.b32.xlu0 %v4628, 96
        %v4738 = vpop.permute.xlu0 %4737
        %4739 = vrot.lane.b32.xlu0 %v4629, 96
        %v4740 = vpop.permute.xlu0 %4739
        %4741 = vrot.lane.b32.xlu0 %v4630, 96
        %v4742 = vpop.permute.xlu0 %4741
        %4743 = vrot.lane.b32.xlu0 %v4631, 96
        %v4744 = vpop.permute.xlu0 %4743
        %4745 = vrot.lane.b32.xlu0 %v4632, 96
        %v4746 = vpop.permute.xlu0 %4745
        %4747 = vrot.lane.b32.xlu0 %v4633, 96
        %v4748 = vpop.permute.xlu0 %4747
        %4749 = vrot.lane.b32.xlu0 %v4634, 96
        %v4750 = vpop.permute.xlu0 %4749
        %4751 = vrot.lane.b32.xlu0 %v4635, 96
        %v4752 = vpop.permute.xlu0 %4751
        %4769 = vrot.lane.b32.xlu0 %v4638, 32
        %v4770 = vpop.permute.xlu0 %4769
        %4771 = vrot.lane.b32.xlu0 %v4639, 32
        %v4772 = vpop.permute.xlu0 %4771
        %4773 = vrot.lane.b32.xlu0 %v4640, 32
        %v4774 = vpop.permute.xlu0 %4773
        %4775 = vrot.lane.b32.xlu0 %v4641, 32
        %v4776 = vpop.permute.xlu0 %4775
        %4777 = vrot.lane.b32.xlu0 %v4642, 32
        %v4778 = vpop.permute.xlu0 %4777
        %4779 = vrot.lane.b32.xlu0 %v4643, 32
        %v4780 = vpop.permute.xlu0 %4779
        %4781 = vrot.lane.b32.xlu0 %v4644, 32
        %v4782 = vpop.permute.xlu0 %4781
        %4783 = vrot.lane.b32.xlu0 %v4645, 32
        %v4784 = vpop.permute.xlu0 %4783
        %4801 = vrot.lane.b32.xlu0 %v4647, 64
        %v4802 = vpop.permute.xlu0 %4801
        %4803 = vrot.lane.b32.xlu0 %v4648, 64
        %v4804 = vpop.permute.xlu0 %4803
        %4805 = vrot.lane.b32.xlu0 %v4649, 64
        %v4806 = vpop.permute.xlu0 %4805
        %4807 = vrot.lane.b32.xlu0 %v4650, 64
        %v4808 = vpop.permute.xlu0 %4807
        %4809 = vrot.lane.b32.xlu0 %v4651, 64
        %v4810 = vpop.permute.xlu0 %4809
        %4811 = vrot.lane.b32.xlu0 %v4652, 64
        %v4812 = vpop.permute.xlu0 %4811
        %4813 = vrot.lane.b32.xlu0 %v4653, 64
        %v4814 = vpop.permute.xlu0 %4813
        %4815 = vrot.lane.b32.xlu0 %v4654, 64
        %v4816 = vpop.permute.xlu0 %4815
        %4827 = vrot.lane.b32.xlu0 %v4605, 96
        %v4828 = vpop.permute.xlu0 %4827
        %4829 = vrot.lane.b32.xlu0 %v4606, 96
        %v4830 = vpop.permute.xlu0 %4829
        %4831 = vrot.lane.b32.xlu0 %v4607, 96
        %v4832 = vpop.permute.xlu0 %4831
        %4833 = vrot.lane.b32.xlu0 %v4608, 96
        %v4834 = vpop.permute.xlu0 %4833
        %4835 = vrot.lane.b32.xlu0 %v4609, 96
        %v4836 = vpop.permute.xlu0 %4835
        %4837 = vrot.lane.b32.xlu0 %v4610, 96
        %v4838 = vpop.permute.xlu0 %4837
        %4839 = vrot.lane.b32.xlu0 %v4636, 96
        %v4840 = vpop.permute.xlu0 %4839
        %4841 = vrot.lane.b32.xlu0 %v4655, 96
        %v4842 = vpop.permute.xlu0 %4841
        %v4851 = vsel %vm563, %v4595, %v4674
        %v4852 = vsel %vm563, %v4596, %v4676
        %v4853 = vsel %vm563, %v4597, %v4678
        %v4854 = vsel %vm563, %v4598, %v4680
        %v4855 = vsel %vm563, %v4599, %v4682
        %v4856 = vsel %vm563, %v4600, %v4684
        %v4857 = vsel %vm563, %v4601, %v4686
        %v4858 = vsel %vm563, %v4602, %v4688
        %v4859 = vsel %vm1286, %v4851, %v4706
        %v4860 = vsel %vm1286, %v4852, %v4708
        %v4861 = vsel %vm1286, %v4853, %v4710
        %v4862 = vsel %vm1286, %v4854, %v4712
        %v4863 = vsel %vm1286, %v4855, %v4714
        %v4864 = vsel %vm1286, %v4856, %v4716
        %v4865 = vsel %vm1286, %v4857, %v4718
        %v4866 = vsel %vm1286, %v4858, %v4720
        %v4867 = vsel %vm1295, %v4859, %v4738
        %v4868 = vsel %vm1295, %v4860, %v4740
        %v4869 = vsel %vm1295, %v4861, %v4742
        %v4870 = vsel %vm1295, %v4862, %v4744
        %v4871 = vsel %vm1295, %v4863, %v4746
        %v4872 = vsel %vm1295, %v4864, %v4748
        %v4873 = vsel %vm1295, %v4865, %v4750
        %v4874 = vsel %vm1295, %v4866, %v4752
        %v4875 = vsel %vm563, %v4604, %v4770
        %v4876 = vsel %vm563, %v4605, %v4772
        %v4877 = vsel %vm563, %v4606, %v4774
        %v4878 = vsel %vm563, %v4607, %v4776
        %v4879 = vsel %vm563, %v4608, %v4778
        %v4880 = vsel %vm563, %v4609, %v4780
        %v4881 = vsel %vm563, %v4610, %v4782
        %v4882 = vsel %vm563, %v4636, %v4784
        %v4883 = vsel %vm1286, %v4875, %v4802
        %v4884 = vsel %vm1286, %v4876, %v4804
        %v4885 = vsel %vm1286, %v4877, %v4806
        %v4886 = vsel %vm1286, %v4878, %v4808
        %v4887 = vsel %vm1286, %v4879, %v4810
        %v4888 = vsel %vm1286, %v4880, %v4812
        %v4889 = vsel %vm1286, %v4881, %v4814
        %v4890 = vsel %vm1286, %v4882, %v4816
        %v4891 = vsel %vm1295, %v4883, %v4828
        %v4892 = vsel %vm1295, %v4884, %v4830
        %v4893 = vsel %vm1295, %v4885, %v4832
        %v4894 = vsel %vm1295, %v4886, %v4834
        %v4895 = vsel %vm1295, %v4887, %v4836
        %v4896 = vsel %vm1295, %v4888, %v4838
        %v4897 = vsel %vm1295, %v4889, %v4840
        %v4898 = vsel %vm1295, %v4890, %v4842
        %v4899 = vpack.c.bf16 %v4868, %v4867
        %v4900 = vpack.c.bf16 %v4892, %v4891
        %v4901 = vpack.c.bf16 %v4658, %v4657
        %v4902 = vpack.c.bf16 %v4870, %v4869
        %v4903 = vpack.c.bf16 %v4894, %v4893
        %v4904 = vpack.c.bf16 %v4660, %v4659
        %v4905 = vpack.c.bf16 %v4872, %v4871
        %v4906 = vpack.c.bf16 %v4896, %v4895
        %v4907 = vpack.c.bf16 %v4662, %v4661
        %v4908 = vpack.c.bf16 %v4874, %v4873
        %v4909 = vpack.c.bf16 %v4898, %v4897
        %v4910 = vpack.c.bf16 %v4664, %v4663
        %s4911 = scalar_lea.vmem [#allocation12], 432
        %v4912 = vld [vmem:[%s4911] sm:$0xf]
        %v4913 = vld [vmem:[%s4911 + $0x4] sm:$0xf]
        %v4914 = vld [vmem:[%s4911 + $0x8] sm:$0xf]
        %v4915 = vld [vmem:[%s4911 + $0xc] sm:$0xf]
        %v4916 = vld [vmem:[%s4911 + $0x10] sm:$0xf]
        %v4917 = vld [vmem:[%s4911 + $0x14] sm:$0xf]
        %v4918 = vld [vmem:[%s4911 + $0x18] sm:$0xf]
        %v4919 = vld [vmem:[%s4911 + $0x1c] sm:$0xf]
        %v4920 = vld [vmem:[%s4911 + $0x20] sm:$0xf]
        %v4921 = vld [vmem:[%s4911 + $0x24] sm:$0xf]
        %v4922 = vld [vmem:[%s4911 + $0x28] sm:$0xf]
        %v4923 = vld [vmem:[%s4911 + $0x2c] sm:$0xf]
        %v4924 = vld [vmem:[%s4911 + $0x30] sm:$0xf]
        %v4925 = vld [vmem:[%s4911 + $0x34] sm:$0xf]
        %v4926 = vld [vmem:[%s4911 + $0x38] sm:$0xf]
        %v4927 = vld [vmem:[%s4911 + $0x3c] sm:$0xf]
        %v4928 = vld [vmem:[%s4911 + $0x40] sm:$0xf]
        %v4929 = vld [vmem:[%s4911 + $0x44] sm:$0xf]
        %v4930 = vld [vmem:[%s4911 + $0x48] sm:$0xf]
        %v4931 = vld [vmem:[%s4911 + $0x4c] sm:$0xf]
        %v4932 = vld [vmem:[%s4911 + $0x50] sm:$0xf]
        %v4933 = vld [vmem:[%s4911 + $0x54] sm:$0xf]
        %v4934 = vld [vmem:[%s4911 + $0x58] sm:$0xf]
        %v4935 = vld [vmem:[%s4911 + $0x5c] sm:$0xf]
        %v4936 = vld [vmem:[%s4911 + $0x60] sm:$0xf]
        %v4937 = vld [vmem:[%s4911 + $0x64] sm:$0xf]
        %v4938 = vld [vmem:[%s4911 + $0x68] sm:$0xf]
        %v4939 = vld [vmem:[%s4911 + $0x6c] sm:$0xf]
        %v4940 = vld [vmem:[%s4911 + $0x70] sm:$0xf]
        %v4941 = vld [vmem:[%s4911 + $0x74] sm:$0xf]
        %v4942 = vld [vmem:[%s4911 + $0x78] sm:$0xf]
        %v4943 = vld [vmem:[%s4911 + $0x7c] sm:$0xf]
        %v4944 = vld [vmem:[%s4911 + $0x80] sm:$0xf]
        %v4945 = vld [vmem:[%s4911 + $0x84] sm:$0xf]
        %v4946 = vld [vmem:[%s4911 + $0x88] sm:$0xf]
        %v4947 = vld [vmem:[%s4911 + $0x8c] sm:$0xf]
        %v4948 = vld [vmem:[#allocation14 + $0x3] sm:$0x1]
        %v4949 = vlaneseq
        %v4950 = vshrl.u32 %v4949, 7
        %v4951 = vsub.s32 0, %v4950
        %v4952 = vrot.slane %v4948, %v4951
        %v4989 = vunpack.c.l.b16 %v4912
        %v4990 = vunpack.c.l.b16 %v4913
        %v4991 = vunpack.c.l.b16 %v4914
        %v4992 = vunpack.c.l.b16 %v4915
        %v4993 = vunpack.c.l.b16 %v4916
        %v4994 = vunpack.c.l.b16 %v4917
        %v4995 = vunpack.c.l.b16 %v4918
        %v4996 = vunpack.c.l.b16 %v4919
        %v4997 = vunpack.c.l.b16 %v4920
        %v4998 = vunpack.c.l.b16 %v4921
        %v4999 = vunpack.c.l.b16 %v4922
        %v5000 = vunpack.c.l.b16 %v4923
        %v5001 = vunpack.c.l.b16 %v4924
        %v5002 = vunpack.c.l.b16 %v4925
        %v5003 = vunpack.c.l.b16 %v4926
        %v5004 = vunpack.c.l.b16 %v4927
        %v5005 = vunpack.c.l.b16 %v4928
        %v5006 = vunpack.c.l.b16 %v4929
        %v5007 = vunpack.c.l.b16 %v4930
        %v5008 = vunpack.c.l.b16 %v4931
        %v5009 = vunpack.c.l.b16 %v4932
        %v5010 = vunpack.c.l.b16 %v4933
        %v5011 = vunpack.c.l.b16 %v4934
        %v5012 = vunpack.c.l.b16 %v4935
        %v5013 = vunpack.c.l.b16 %v4936
        %v5014 = vunpack.c.l.b16 %v4937
        %v5015 = vunpack.c.l.b16 %v4938
        %v5016 = vunpack.c.l.b16 %v4939
        %v5017 = vunpack.c.l.b16 %v4940
        %v5018 = vunpack.c.l.b16 %v4941
        %v5019 = vunpack.c.l.b16 %v4942
        %v5020 = vunpack.c.l.b16 %v4943
        %v5021 = vunpack.c.l.b16 %v4944
        %v5022 = vunpack.c.l.b16 %v4945
        %v5023 = vunpack.c.l.b16 %v4946
        %v5024 = vunpack.c.l.b16 %v4947
        %v5025 = vpack.c.b16 %v4990, %v4989
        %v5026 = vpack.c.b16 %v4992, %v4991
        %v5027 = vpack.c.b16 %v4994, %v4993
        %v5028 = vpack.c.b16 %v4996, %v4995
        %v5029 = vpack.c.b16 %v4998, %v4997
        %v5030 = vpack.c.b16 %v5000, %v4999
        %v5031 = vpack.c.b16 %v5002, %v5001
        %v5032 = vpack.c.b16 %v5004, %v5003
        %v5033 = vpack.c.b16 %v5006, %v5005
        %v5034 = vpack.c.b16 %v5008, %v5007
        %v5035 = vpack.c.b16 %v5010, %v5009
        %v5036 = vpack.c.b16 %v5012, %v5011
        %v5037 = vpack.c.b16 %v5014, %v5013
        %v5038 = vpack.c.b16 %v5016, %v5015
        %v5039 = vpack.c.b16 %v5018, %v5017
        %v5040 = vpack.c.b16 %v5020, %v5019
        %v5041 = vpack.c.b16 %v5022, %v5021
        %v5042 = vpack.c.b16 %v5024, %v5023
        %v5062 = vsel %vm563, %v4901, 0
        %v5065 = vsel %vm563, %v4904, 0
        %v5068 = vsel %vm563, %v4907, 0
        %v5071 = vsel %vm563, %v4910, 0
        %5073 = vmatprep.subr.bf16.mxu0 0
        %5074 = vmatpush1.bf16.msra.mxu0 %v5025
        %5075 = vmatprep.subr.bf16.mxu0 0
        %5076 = vmatpush1.bf16.msra.mxu0 %v5026
        %5077 = vmatprep.subr.bf16.mxu0 0
        %5078 = vmatpush1.bf16.msra.mxu0 %v5027
        %5079 = vmatprep.subr.bf16.mxu0 0
        %5080 = vmatpush1.bf16.msra.mxu0 %v5028
        %5081 = vmatprep.subr.bf16.mxu0 0
        %5082 = vmatpush1.bf16.msra.mxu0 %v5029
        %5083 = vmatprep.subr.bf16.mxu0 0
        %5084 = vmatpush1.bf16.msra.mxu0 %v5030
        %5085 = vmatprep.subr.bf16.mxu0 0
        %5086 = vmatpush1.bf16.msra.mxu0 %v5031
        %5087 = vmatprep.subr.bf16.mxu0 0
        %5088 = vmatpush1.bf16.msra.mxu0 %v5032
        %5089 = vmatprep.subr.bf16.mxu0 0
        %5090 = vmatpush1.bf16.msra.mxu0 %v5033
        %5091 = vmatprep.subr.bf16.mxu0 0
        %5092 = vmatpush1.bf16.msra.mxu0 %v5034
        %5093 = vmatprep.subr.bf16.mxu0 0
        %5094 = vmatpush1.bf16.msra.mxu0 %v5035
        %5095 = vmatprep.subr.bf16.mxu0 0
        %5096 = vmatpush1.bf16.msra.mxu0 %v5036
        %5097 = vmatprep.subr.bf16.mxu0 0
        %5098 = vmatpush1.bf16.msra.mxu0 %v5037
        %5099 = vmatprep.subr.bf16.mxu0 0
        %5100 = vmatpush1.bf16.msra.mxu0 %v5038
        %5101 = vmatprep.subr.bf16.mxu0 0
        %5102 = vmatpush1.bf16.msra.mxu0 %v5039
        %5103 = vmatprep.subr.bf16.mxu0 0
        %5104 = vmatpush1.bf16.msra.mxu0 %v5040
        %5105 = vmatprep.mubr.bf16.mxu0 %v4900
        %5106 = vmatmul.mubr.bf16.gmra.mrb[0].mxu0 %v4899
        %v5107 = vpop.f32.mrb[0].mxu0
        %v5108 = vadd.f32 %v4952, %v5107
        %v5109 = vpop.f32.mrb[0].mxu0
        %v5110 = vpop.f32.mrb[0].mxu0
        %v5111 = vadd.f32 %v4952, %v5110
        %v5112 = vpop.f32.mrb[0].mxu0
        %5113 = vmatprep.mubr.bf16.mxu0 %v4903
        %5114 = vmatmul.mubr.bf16.gmra.mrb[0].mxu0 %v4902
        %v5115 = vpop.f32.mrb[0].mxu0
        %v5116 = vadd.f32 %v4952, %v5115
        %v5117 = vpop.f32.mrb[0].mxu0
        %v5118 = vpop.f32.mrb[0].mxu0
        %v5119 = vadd.f32 %v4952, %v5118
        %v5120 = vpop.f32.mrb[0].mxu0
        %5121 = vmatprep.mubr.bf16.mxu0 %v4906
        %5122 = vmatmul.mubr.bf16.gmra.mrb[0].mxu0 %v4905
        %v5123 = vpop.f32.mrb[0].mxu0
        %v5124 = vadd.f32 %v4952, %v5123
        %v5125 = vpop.f32.mrb[0].mxu0
        %v5126 = vpop.f32.mrb[0].mxu0
        %v5127 = vadd.f32 %v4952, %v5126
        %v5128 = vpop.f32.mrb[0].mxu0
        %5129 = vmatprep.mubr.bf16.mxu0 %v4909
        %5130 = vmatmul.mubr.bf16.gmra.mrb[0].mxu0 %v4908
        %v5131 = vpop.f32.mrb[0].mxu0
        %v5132 = vadd.f32 %v4952, %v5131
        %v5133 = vpop.f32.mrb[0].mxu0
        %v5134 = vpop.f32.mrb[0].mxu0
        %v5135 = vadd.f32 %v4952, %v5134
        %v5136 = vpop.f32.mrb[0].mxu0
        %5137 = vdwg.mxu0
        %5138 = vmatprep.subr.bf16.mxu0 0
        %5139 = vmatpush1.bf16.msra.mxu0 %v5041
        %5140 = vmatprep.subr.bf16.mxu0 0
        %5141 = vmatpush1.bf16.msra.mxu0 %v5042
        %5142 = vmatprep.subr.bf16.mxu0 0
        %5143 = vmatpush1.bf16.msra.mxu0 0
        %5144 = vmatprep.subr.bf16.mxu0 0
        %5145 = vmatpush1.bf16.msra.mxu0 0
        %5146 = vmatprep.subr.bf16.mxu0 0
        %5147 = vmatpush1.bf16.msra.mxu0 0
        %5148 = vmatprep.subr.bf16.mxu0 0
        %5149 = vmatpush1.bf16.msra.mxu0 0
        %5150 = vmatprep.subr.bf16.mxu0 0
        %5151 = vmatpush1.bf16.msra.mxu0 0
        %5152 = vmatprep.subr.bf16.mxu0 0
        %5153 = vmatpush1.bf16.msra.mxu0 0
        %5154 = vmatprep.subr.bf16.mxu0 0
        %5155 = vmatpush1.bf16.msra.mxu0 0
        %5156 = vmatprep.subr.bf16.mxu0 0
        %5157 = vmatpush1.bf16.msra.mxu0 0
        %5158 = vmatprep.subr.bf16.mxu0 0
        %5159 = vmatpush1.bf16.msra.mxu0 0
        %5160 = vmatprep.subr.bf16.mxu0 0
        %5161 = vmatpush1.bf16.msra.mxu0 0
        %5162 = vmatprep.subr.bf16.mxu0 0
        %5163 = vmatpush1.bf16.msra.mxu0 0
        %5164 = vmatprep.subr.bf16.mxu0 0
        %5165 = vmatpush1.bf16.msra.mxu0 0
        %5166 = vmatprep.subr.bf16.mxu0 0
        %5167 = vmatpush1.bf16.msra.mxu0 0
        %5168 = vmatprep.subr.bf16.mxu0 0
        %5169 = vmatpush1.bf16.msra.mxu0 0
        %5170 = vmatprep.mubr.bf16.mxu0 0
        %5171 = vmatmul.mubr.bf16.gmra.mrb[0].mxu0 %v5062
        %v5172 = vpop.f32.mrb[0].mxu0
        %v5173 = vadd.f32 %v5108, %v5172
        %v5174 = vpop.f32.mrb[0].mxu0
        %v5175 = vpop.f32.mrb[0].mxu0
        %v5176 = vadd.f32 %v5111, %v5175
        %v5177 = vpop.f32.mrb[0].mxu0
        %5178 = vmatprep.mubr.bf16.mxu0 0
        %5179 = vmatmul.mubr.bf16.gmra.mrb[0].mxu0 %v5065
        %v5180 = vpop.f32.mrb[0].mxu0
        %v5181 = vadd.f32 %v5116, %v5180
        %v5182 = vpop.f32.mrb[0].mxu0
        %v5183 = vpop.f32.mrb[0].mxu0
        %v5184 = vadd.f32 %v5119, %v5183
        %v5185 = vpop.f32.mrb[0].mxu0
        %5186 = vmatprep.mubr.bf16.mxu0 0
        %5187 = vmatmul.mubr.bf16.gmra.mrb[0].mxu0 %v5068
        %v5188 = vpop.f32.mrb[0].mxu0
        %v5189 = vadd.f32 %v5124, %v5188
        %v5190 = vpop.f32.mrb[0].mxu0
        %v5191 = vpop.f32.mrb[0].mxu0
        %v5192 = vadd.f32 %v5127, %v5191
        %v5193 = vpop.f32.mrb[0].mxu0
        %5194 = vmatprep.mubr.bf16.mxu0 0
        %5195 = vmatmul.mubr.bf16.gmra.mrb[0].mxu0 %v5071
        %v5196 = vpop.f32.mrb[0].mxu0
        %v5197 = vadd.f32 %v5132, %v5196
        %v5198 = vpop.f32.mrb[0].mxu0
        %v5199 = vpop.f32.mrb[0].mxu0
        %v5200 = vadd.f32 %v5135, %v5199
        %v5201 = vpop.f32.mrb[0].mxu0
        %5202 = vdwg.mxu0
        %v5203 = vadd.f32 %v3324, %v5173
        %v5204 = vadd.f32 %v3325, %v5176
        %v5205 = vadd.f32 %v3326, %v5181
        %v5206 = vadd.f32 %v3327, %v5184
        %v5207 = vadd.f32 %v3328, %v5189
        %v5208 = vadd.f32 %v3329, %v5192
        %v5209 = vadd.f32 %v3330, %v5197
        %v5210 = vadd.f32 %v3331, %v5200
        %5211 = vst.msk [vmem:[%s561] sm:$0xff] %vm563, %v5203
        %5212 = vst.msk [vmem:[%s561 + $0x8] sm:$0xff] %vm563, %v5204
        %5213 = vst.msk [vmem:[%s561 + $0x10] sm:$0xff] %vm563, %v5205
        %5214 = vst.msk [vmem:[%s561 + $0x18] sm:$0xff] %vm563, %v5206
        %5215 = vst.msk [vmem:[%s561 + $0x20] sm:$0xff] %vm563, %v5207
        %5216 = vst.msk [vmem:[%s561 + $0x28] sm:$0xff] %vm563, %v5208
        %5217 = vst.msk [vmem:[%s561 + $0x30] sm:$0xff] %vm563, %v5209
        %5218 = vst.msk [vmem:[%s561 + $0x38] sm:$0xff] %vm563, %v5210
        %s5219 = sand.u32 %s284, 1
        %s5220 = scalar_lea.sflag [#allocation5], %s5219
        %s5221 = sand.u32 %s284, 1
        %s5222 = smul.addr %s5221, 64
        %s5223 = scalar_lea.vmem [#allocation21], %s5222
        // Predicated region
        $region109: #{mid_block_forward.1} parent=63 // pred_check
          %p5224 = pneg %p294
        $region110: #{mid_block_forward.1} parent=63 // pred_check_branch
          %5226 = sbr.rel (%p5224) target = $region112
        $region111: #{mid_block_forward.1} parent=63 // pred_region
          %s5228 = ssub.s32 1024, 1024
          %5229 = vsyncadd %s5220, %s5228
          %s5230 = smul.addr %s35, 8
          %s5231 = smul.addr %s5230, 128
          %s5232 = scalar_lea.hbm %s11, %s5231
          %s5233 = sshll.u32 %s5223, 4
          %s5234 = int_to_ptr.vmem [resolvable:$true] %s5233
          %5239 = dma.vmem_to_hbm [thread:$0]  %s5234, 1024, %s5232, %s5220, 128, 128, 8
        $region112: #{mid_block_forward.1} parent=63 // pred_fallthru
          _
      $region64: #{mid_block_forward.1} parent=5 // pred_fallthru
        _
      %p5240 = scmp.le.s32.totalorder 2, %s30
      // Predicated region
      $region113: #{mid_block_forward.1} parent=5 // pred_check
        %p5241 = pneg %p5240
      $region114: #{mid_block_forward.1} parent=5 // pred_check_branch
        %5243 = sbr.rel (%p5241) target = $region116
      $region115: #{mid_block_forward.1} parent=5 // pred_region
        %s5244 = ssub.s32 %s30, 2
        // Predicated region
        $region117: #{mid_block_forward.1} parent=115 // pred_check
          %p5245 = pneg %p300
        $region118: #{mid_block_forward.1} parent=115 // pred_check_branch
          %5247 = sbr.rel (%p5245) target = $region120
        $region119: #{mid_block_forward.1} parent=115 // pred_region
          %s5248 = sand.u32 %s285, 1
          %s5249 = scalar_lea.sflag [#allocation5], %s5248
          %s5250 = sand.u32 %s285, 1
          %s5251 = smul.addr %s5250, 64
          %s5252 = scalar_lea.vmem [#allocation21], %s5251
          %5253 = dma.done %s5249, 1024
        $region120: #{mid_block_forward.1} parent=115 // pred_fallthru
          _
      $region116: #{mid_block_forward.1} parent=5 // pred_fallthru
        _
    $region6: #{mid_block_forward.1} parent=1 // loop_footer
      %s34 = sadd.s32 1, %s30
    $region7: #{mid_block_forward.1} parent=1 // loop_footer_branch
      %29 = sbr.rel target = $region3
    $region8: #{mid_block_forward.1} parent=1 // loop_exit
      _
    %5254 = vsyncpa [#allocation4], 1
    %s5255 = scalar_lea.sflag [#allocation4], 1
    %5256 = vsyncpa %s5255, 1
    %5257 = vsyncpa [#allocation7], 1
    %s5258 = scalar_lea.sflag [#allocation7], 1
    %5259 = vsyncpa %s5258, 1
    %5260 = vsyncpa [#allocation10], 1
    %5261 = vsyncpa [#allocation13], 1
    %5262 = vsyncpa [#allocation16], 1
    %5263 = vsyncpa [#allocation19], 1
    %5264 = vsyncpa [#allocation5], 1
    %s5265 = scalar_lea.sflag [#allocation5], 1
    %5266 = vsyncpa %s5265, 1

</llo_original>
